<compile_context>
chip_gen: v7x
topology: tpu7x:2x2x1
jax: 0.10.0
libtpu: 0.0.40
codegen_flags: <defaults>
</compile_context>

<pallas_src>
import functools

import jax
import jax.numpy as jnp
from jax.experimental import pallas as pl
from jax.experimental.pallas import tpu as pltpu

# ---------------- model config (small, deterministic) ----------------
VOCAB = 64
HIDDEN = 32
N_HEADS = 4
HEAD_DIM = HIDDEN // N_HEADS
FFN = 4 * HIDDEN
N_LAYERS = 2
MAX_POS = 16
F32 = jnp.float32
BF16 = jnp.bfloat16


def _ln(x, g, b, eps=1e-5):
    mu = jnp.mean(x, axis=-1, keepdims=True)
    var = jnp.mean((x - mu) ** 2, axis=-1, keepdims=True)
    return (x - mu) * jax.lax.rsqrt(var + eps) * g + b


# ---------------- the single fused forward kernel ----------------
def _fused_forward_kernel(
    ids_ref, mask_ref, wte_ref, wpe_ref,
    ln1_g_ref, ln1_b_ref, wqkv_ref, bqkv_ref, wo_ref, bo_ref,
    ln2_g_ref, ln2_b_ref, w1_ref, b1_ref, w2_ref, b2_ref,
    lnf_g_ref, lnf_b_ref,
    pooled_ref, logits_ref,
):
    S = ids_ref.shape[1]

    # ---- embedding: one-hot (S,V) @ wte (V,H) on the MXU (no gather) ----
    ids_col = ids_ref[...].reshape(S, 1)                          # (S,1) i32
    vocab_iota = jax.lax.broadcasted_iota(jnp.int32, (S, VOCAB), 1)
    onehot = (vocab_iota == ids_col).astype(BF16)                 # (S,V)
    x = jnp.dot(onehot, wte_ref[...], preferred_element_type=F32)
    x = x + wpe_ref[...]                                          # (S,H) f32

    # ---- attention mask (causal AND key-padding), shared by all layers ----
    mask_row = mask_ref[...].reshape(1, S)                        # (1,S) f32
    row = jax.lax.broadcasted_iota(jnp.int32, (S, S), 0)
    col = jax.lax.broadcasted_iota(jnp.int32, (S, S), 1)
    allowed = jnp.logical_and(row >= col, mask_row > 0.5)         # (S,S) bool
    neg = jnp.float32(-1e9)                                       # mask in f32
    scale = jnp.float32(HEAD_DIM ** -0.5)

    for l in range(N_LAYERS):
        # --- self-attention block (pre-LN) ---
        h1 = _ln(x, ln1_g_ref[l], ln1_b_ref[l])
        qkv = jnp.dot(h1.astype(BF16), wqkv_ref[l],
                      preferred_element_type=F32) + bqkv_ref[l]   # (S,3H)
        q = qkv[:, 0 * HIDDEN:1 * HIDDEN]
        k = qkv[:, 1 * HIDDEN:2 * HIDDEN]
        v = qkv[:, 2 * HIDDEN:3 * HIDDEN]

        head_outs = []
        for h in range(N_HEADS):
            sl = slice(h * HEAD_DIM, (h + 1) * HEAD_DIM)
            qh, kh, vh = q[:, sl], k[:, sl], v[:, sl]
            # q @ k^T via transposed contraction (no materialized transpose)
            s = jax.lax.dot_general(
                qh, kh, (((1,), (1,)), ((), ())),
                preferred_element_type=F32) * scale               # (S,S) f32
            s = jnp.where(allowed, s, neg)
            p = jax.nn.softmax(s, axis=-1)                        # f32
            head_outs.append(jnp.dot(p, vh, preferred_element_type=F32))
        attn = jnp.concatenate(head_outs, axis=-1)                # (S,H)

        x = x + jnp.dot(attn.astype(BF16), wo_ref[l],
                        preferred_element_type=F32) + bo_ref[l]

        # --- MLP block (pre-LN) ---
        h2 = _ln(x, ln2_g_ref[l], ln2_b_ref[l])
        hmid = jnp.dot(h2.astype(BF16), w1_ref[l],
                       preferred_element_type=F32) + b1_ref[l]
        hmid = jax.nn.gelu(hmid)
        x = x + jnp.dot(hmid.astype(BF16), w2_ref[l],
                        preferred_element_type=F32) + b2_ref[l]

    # ---- final LN -> last_hidden_state ----
    last = _ln(x, lnf_g_ref[...], lnf_b_ref[...])                 # (S,H) f32

    # pooled_output = last_hidden_state.mean(dim=1)  (plain mean, as in spec)
    pooled_ref[...] = jnp.mean(last, axis=0, keepdims=True).reshape(
        1, 1, HIDDEN).astype(pooled_ref.dtype)

    # logits = lm_head(last_hidden_state), tied weights: contract wte axis 1
    logits = jax.lax.dot_general(
        last.astype(BF16), wte_ref[...], (((1,), (1,)), ((), ())),
        preferred_element_type=F32)                               # (S,V)
    logits_ref[...] = logits.reshape(1, S, VOCAB).astype(logits_ref.dtype)


# ---------------- parameter init (deterministic, synthetic) ----------------
def init_params(key):
    def nrm(k, shape, dtype):
        return (0.02 * jax.random.normal(k, shape)).astype(dtype)

    keys = jax.random.split(key, 6)
    return {
        "wte": nrm(keys[0], (VOCAB, HIDDEN), BF16),
        "wpe": nrm(keys[1], (MAX_POS, HIDDEN), F32),
        "ln1_g": jnp.ones((N_LAYERS, 1, HIDDEN), F32),
        "ln1_b": jnp.zeros((N_LAYERS, 1, HIDDEN), F32),
        "w_qkv": nrm(keys[2], (N_LAYERS, HIDDEN, 3 * HIDDEN), BF16),
        "b_qkv": jnp.zeros((N_LAYERS, 1, 3 * HIDDEN), F32),
        "w_o": nrm(keys[3], (N_LAYERS, HIDDEN, HIDDEN), BF16),
        "b_o": jnp.zeros((N_LAYERS, 1, HIDDEN), F32),
        "ln2_g": jnp.ones((N_LAYERS, 1, HIDDEN), F32),
        "ln2_b": jnp.zeros((N_LAYERS, 1, HIDDEN), F32),
        "w1": nrm(keys[4], (N_LAYERS, HIDDEN, FFN), BF16),
        "b1": jnp.zeros((N_LAYERS, 1, FFN), F32),
        "w2": nrm(keys[5], (N_LAYERS, FFN, HIDDEN), BF16),
        "b2": jnp.zeros((N_LAYERS, 1, HIDDEN), F32),
        "lnf_g": jnp.ones((1, HIDDEN), F32),
        "lnf_b": jnp.zeros((1, HIDDEN), F32),
    }


# ---------------- forward pass: one fused pallas_call ----------------
def forward(params, input_ids, attention_mask):
    B, S = input_ids.shape
    ids3 = input_ids.astype(jnp.int32).reshape(B, S, 1)
    mask3 = attention_mask.astype(F32).reshape(B, 1, S)
    wpe_s = params["wpe"][:S]                                     # static slice

    def full(shape):
        return pl.BlockSpec(shape, lambda b, _n=len(shape): (0,) * _n)

    in_specs = [
        pl.BlockSpec((1, S, 1), lambda b: (b, 0, 0)),             # ids
        pl.BlockSpec((1, 1, S), lambda b: (b, 0, 0)),             # mask
        full((VOCAB, HIDDEN)),                                    # wte (tied)
        full((S, HIDDEN)),                                        # wpe[:S]
        full((N_LAYERS, 1, HIDDEN)),                              # ln1_g
        full((N_LAYERS, 1, HIDDEN)),                              # ln1_b
        full((N_LAYERS, HIDDEN, 3 * HIDDEN)),                     # w_qkv
        full((N_LAYERS, 1, 3 * HIDDEN)),                          # b_qkv
        full((N_LAYERS, HIDDEN, HIDDEN)),                         # w_o
        full((N_LAYERS, 1, HIDDEN)),                              # b_o
        full((N_LAYERS, 1, HIDDEN)),                              # ln2_g
        full((N_LAYERS, 1, HIDDEN)),                              # ln2_b
        full((N_LAYERS, HIDDEN, FFN)),                            # w1
        full((N_LAYERS, 1, FFN)),                                 # b1
        full((N_LAYERS, FFN, HIDDEN)),                            # w2
        full((N_LAYERS, 1, HIDDEN)),                              # b2
        full((1, HIDDEN)),                                        # lnf_g
        full((1, HIDDEN)),                                        # lnf_b
    ]
    out_specs = [
        pl.BlockSpec((1, 1, HIDDEN), lambda b: (b, 0, 0)),        # pooled
        pl.BlockSpec((1, S, VOCAB), lambda b: (b, 0, 0)),         # logits
    ]
    out_shapes = (
        jax.ShapeDtypeStruct((B, 1, HIDDEN), F32),
        jax.ShapeDtypeStruct((B, S, VOCAB), F32),
    )

    pooled3, logits = pl.pallas_call(
        _fused_forward_kernel,
        out_shape=out_shapes,
        grid=(B,),
        in_specs=in_specs,
        out_specs=out_specs,
        compiler_params=pltpu.CompilerParams(
            dimension_semantics=("parallel",)),                   # v7x: 2 TCs
    )(ids3, mask3, params["wte"], wpe_s,
      params["ln1_g"], params["ln1_b"], params["w_qkv"], params["b_qkv"],
      params["w_o"], params["b_o"], params["ln2_g"], params["ln2_b"],
      params["w1"], params["b1"], params["w2"], params["b2"],
      params["lnf_g"], params["lnf_b"])

    return pooled3.reshape(B, HIDDEN), logits


# ---------------- pure-JAX reference (same math, for validation) ----------------
def forward_reference(params, input_ids, attention_mask):
    B, S = input_ids.shape
    x = jnp.dot(jax.nn.one_hot(input_ids, VOCAB, dtype=BF16), params["wte"],
                preferred_element_type=F32) + params["wpe"][:S][None]
    mask = attention_mask.astype(F32)
    row = jnp.arange(S)[:, None]
    col = jnp.arange(S)[None, :]
    allowed = (row >= col)[None, None] & (mask[:, None, None, :] > 0.5)
    scale = HEAD_DIM ** -0.5
    for l in range(N_LAYERS):
        h1 = _ln(x, params["ln1_g"][l], params["ln1_b"][l])
        qkv = jnp.einsum("bsh,hk->bsk", h1.astype(BF16), params["w_qkv"][l],
                         preferred_element_type=F32) + params["b_qkv"][l]
        q, k, v = jnp.split(qkv, 3, axis=-1)
        q = q.reshape(B, S, N_HEADS, HEAD_DIM)
        k = k.reshape(B, S, N_HEADS, HEAD_DIM)
        v = v.reshape(B, S, N_HEADS, HEAD_DIM)
        s = jnp.einsum("bqnd,bknd->bnqk", q, k) * scale
        s = jnp.where(allowed, s, -1e9)
        p = jax.nn.softmax(s, axis=-1)
        a = jnp.einsum("bnqk,bknd->bqnd", p, v).reshape(B, S, HIDDEN)
        x = x + jnp.einsum("bsh,hk->bsk", a.astype(BF16), params["w_o"][l],
                           preferred_element_type=F32) + params["b_o"][l]
        h2 = _ln(x, params["ln2_g"][l], params["ln2_b"][l])
        hm = jax.nn.gelu(
            jnp.einsum("bsh,hf->bsf", h2.astype(BF16), params["w1"][l],
                       preferred_element_type=F32) + params["b1"][l])
        x = x + jnp.einsum("bsf,fh->bsh", hm.astype(BF16), params["w2"][l],
                           preferred_element_type=F32) + params["b2"][l]
    last = _ln(x, params["lnf_g"], params["lnf_b"])
    pooled = last.mean(axis=1)
    logits = jnp.einsum("bsh,vh->bsv", last.astype(BF16), params["wte"],
                        preferred_element_type=F32)
    return pooled, logits


# TODO(synk): `generate` (autoregressive sampling with top-k/top-p, no-repeat
# ngram) is a host-side decoding loop, not a single kernel; not implemented.


if __name__ == "__main__":
    B, S = 2, 8
    root = jax.random.PRNGKey(0)
    k_params, k_ids = jax.random.split(root)
    params = init_params(k_params)

    input_ids = jax.random.randint(k_ids, (B, S), 0, VOCAB, dtype=jnp.int32)
    attention_mask = jnp.ones((B, S), jnp.int32).at[1, 6:].set(0)

    pooled, logits = jax.jit(forward)(params, input_ids, attention_mask)
    jax.block_until_ready((pooled, logits))

    ref_pooled, ref_logits = forward_reference(params, input_ids, attention_mask)

    assert pooled.shape == (B, HIDDEN), pooled.shape
    assert logits.shape == (B, S, VOCAB), logits.shape
    assert bool(jnp.all(jnp.isfinite(pooled))) and bool(jnp.all(jnp.isfinite(logits)))
    assert bool(jnp.allclose(pooled, ref_pooled, atol=5e-3, rtol=5e-3))
    assert bool(jnp.allclose(logits, ref_logits, atol=5e-3, rtol=5e-3))
    print("KERNEL_OK")
</pallas_src>

<mosaic_0001>
module attributes {stable_mosaic.version = 11 : i64} {
  func.func @_fused_forward_kernel(%arg0: i32, %arg1: memref<1x8x1xi32, #tpu.memory_space<vmem>>, %arg2: memref<1x1x8xf32, #tpu.memory_space<vmem>>, %arg3: memref<64x32xbf16, #tpu.memory_space<vmem>>, %arg4: memref<8x32xf32, #tpu.memory_space<vmem>>, %arg5: memref<2x1x32xf32, #tpu.memory_space<vmem>>, %arg6: memref<2x1x32xf32, #tpu.memory_space<vmem>>, %arg7: memref<2x32x96xbf16, #tpu.memory_space<vmem>>, %arg8: memref<2x1x96xf32, #tpu.memory_space<vmem>>, %arg9: memref<2x32x32xbf16, #tpu.memory_space<vmem>>, %arg10: memref<2x1x32xf32, #tpu.memory_space<vmem>>, %arg11: memref<2x1x32xf32, #tpu.memory_space<vmem>>, %arg12: memref<2x1x32xf32, #tpu.memory_space<vmem>>, %arg13: memref<2x32x128xbf16, #tpu.memory_space<vmem>>, %arg14: memref<2x1x128xf32, #tpu.memory_space<vmem>>, %arg15: memref<2x128x32xbf16, #tpu.memory_space<vmem>>, %arg16: memref<2x1x32xf32, #tpu.memory_space<vmem>>, %arg17: memref<1x32xf32, #tpu.memory_space<vmem>>, %arg18: memref<1x32xf32, #tpu.memory_space<vmem>>, %arg19: memref<1x1x32xf32, #tpu.memory_space<vmem>>, %arg20: memref<1x8x64xf32, #tpu.memory_space<vmem>>) attributes {dimension_semantics = [#tpu.dimension_semantics<parallel>], iteration_bounds = array<i64: 2>, scalar_prefetch = 0 : i64, scratch_operands = 0 : i64, tpu.core_type = #tpu.core_type<tc>, window_params = [{transform_indices = @transform_0, window_bounds = array<i64: 1, 8, 1>}, {transform_indices = @transform_1, window_bounds = array<i64: 1, 1, 8>}, {pipeline_mode = #tpu.pipeline_mode<synchronous>, transform_indices = @transform_2, window_bounds = array<i64: 64, 32>}, {pipeline_mode = #tpu.pipeline_mode<synchronous>, transform_indices = @transform_3, window_bounds = array<i64: 8, 32>}, {pipeline_mode = #tpu.pipeline_mode<synchronous>, transform_indices = @transform_4, window_bounds = array<i64: 2, 1, 32>}, {pipeline_mode = #tpu.pipeline_mode<synchronous>, transform_indices = @transform_5, window_bounds = array<i64: 2, 1, 32>}, {pipeline_mode = #tpu.pipeline_mode<synchronous>, transform_indices = @transform_6, window_bounds = array<i64: 2, 32, 96>}, {pipeline_mode = #tpu.pipeline_mode<synchronous>, transform_indices = @transform_7, window_bounds = array<i64: 2, 1, 96>}, {pipeline_mode = #tpu.pipeline_mode<synchronous>, transform_indices = @transform_8, window_bounds = array<i64: 2, 32, 32>}, {pipeline_mode = #tpu.pipeline_mode<synchronous>, transform_indices = @transform_9, window_bounds = array<i64: 2, 1, 32>}, {pipeline_mode = #tpu.pipeline_mode<synchronous>, transform_indices = @transform_10, window_bounds = array<i64: 2, 1, 32>}, {pipeline_mode = #tpu.pipeline_mode<synchronous>, transform_indices = @transform_11, window_bounds = array<i64: 2, 1, 32>}, {pipeline_mode = #tpu.pipeline_mode<synchronous>, transform_indices = @transform_12, window_bounds = array<i64: 2, 32, 128>}, {pipeline_mode = #tpu.pipeline_mode<synchronous>, transform_indices = @transform_13, window_bounds = array<i64: 2, 1, 128>}, {pipeline_mode = #tpu.pipeline_mode<synchronous>, transform_indices = @transform_14, window_bounds = array<i64: 2, 128, 32>}, {pipeline_mode = #tpu.pipeline_mode<synchronous>, transform_indices = @transform_15, window_bounds = array<i64: 2, 1, 32>}, {pipeline_mode = #tpu.pipeline_mode<synchronous>, transform_indices = @transform_16, window_bounds = array<i64: 1, 32>}, {pipeline_mode = #tpu.pipeline_mode<synchronous>, transform_indices = @transform_17, window_bounds = array<i64: 1, 32>}, {transform_indices = @transform_18, window_bounds = array<i64: 1, 1, 32>}, {transform_indices = @transform_19, window_bounds = array<i64: 1, 8, 64>}]} {
    %c0 = arith.constant 0 : index
    %c0_0 = arith.constant 0 : index
    %c0_1 = arith.constant 0 : index
    %0 = vector.load %arg1[%c0, %c0_0, %c0_1] : memref<1x8x1xi32, #tpu.memory_space<vmem>>, vector<1x8x1xi32>
    %1 = vector.shape_cast %0 : vector<1x8x1xi32> to vector<8x1xi32>
    %2 = tpu.iota {dimensions = array<i32: 1>} : vector<8x64xi32>
    %3 = vector.broadcast %1 : vector<8x1xi32> to vector<8x64xi32>
    %4 = arith.cmpi eq, %2, %3 : vector<8x64xi32>
    %5 = arith.extui %4 : vector<8x64xi1> to vector<8x64xi32>
    %6 = arith.sitofp %5 : vector<8x64xi32> to vector<8x64xf32>
    %7 = arith.truncf %6 : vector<8x64xf32> to vector<8x64xbf16>
    %c0_2 = arith.constant 0 : index
    %c0_3 = arith.constant 0 : index
    %8 = vector.load %arg3[%c0_2, %c0_3] : memref<64x32xbf16, #tpu.memory_space<vmem>>, vector<64x32xbf16>
    %cst = arith.constant dense<0.000000e+00> : vector<8x32xf32>
    %9 = tpu.matmul %7, %8, %cst {dimension_numbers = #tpu.dot_dimension_numbers<[1], [0], [0], [1], [0, 0, 1, 1], [], []>} : vector<8x64xbf16>, vector<64x32xbf16>, vector<8x32xf32> -> vector<8x32xf32>
    %c0_4 = arith.constant 0 : index
    %c0_5 = arith.constant 0 : index
    %10 = vector.load %arg4[%c0_4, %c0_5] : memref<8x32xf32, #tpu.memory_space<vmem>>, vector<8x32xf32>
    %11 = arith.addf %9, %10 : vector<8x32xf32>
    %c0_6 = arith.constant 0 : index
    %c0_7 = arith.constant 0 : index
    %c0_8 = arith.constant 0 : index
    %12 = vector.load %arg2[%c0_6, %c0_7, %c0_8] : memref<1x1x8xf32, #tpu.memory_space<vmem>>, vector<1x1x8xf32>
    %13 = vector.shape_cast %12 : vector<1x1x8xf32> to vector<1x8xf32>
    %14 = tpu.iota {dimensions = array<i32: 0>} : vector<8x8xi32>
    %15 = tpu.iota {dimensions = array<i32: 1>} : vector<8x8xi32>
    %16 = arith.cmpi sge, %14, %15 : vector<8x8xi32>
    %cst_9 = arith.constant 5.000000e-01 : f32
    %17 = vector.broadcast %cst_9 : f32 to vector<1x8xf32>
    %18 = arith.cmpf ogt, %13, %17 : vector<1x8xf32>
    %19 = vector.broadcast %18 : vector<1x8xi1> to vector<8x8xi1>
    %20 = arith.andi %16, %19 : vector<8x8xi1>
    %c0_10 = arith.constant 0 : index
    %c0_11 = arith.constant 0 : index
    %c0_12 = arith.constant 0 : index
    %21 = vector.load %arg5[%c0_10, %c0_11, %c0_12] : memref<2x1x32xf32, #tpu.memory_space<vmem>>, vector<1x1x32xf32>
    %22 = vector.shape_cast %21 : vector<1x1x32xf32> to vector<1x32xf32>
    %c0_13 = arith.constant 0 : index
    %c0_14 = arith.constant 0 : index
    %c0_15 = arith.constant 0 : index
    %23 = vector.load %arg6[%c0_13, %c0_14, %c0_15] : memref<2x1x32xf32, #tpu.memory_space<vmem>>, vector<1x1x32xf32>
    %24 = vector.shape_cast %23 : vector<1x1x32xf32> to vector<1x32xf32>
    %cst_16 = arith.constant dense<0.000000e+00> : vector<8xf32>
    %25 = vector.multi_reduction <add>, %11, %cst_16 [1] : vector<8x32xf32> to vector<8xf32>
    %26 = vector.shape_cast %25 : vector<8xf32> to vector<8x1xf32>
    %cst_17 = arith.constant 3.200000e+01 : f32
    %27 = vector.broadcast %cst_17 : f32 to vector<8x1xf32>
    %28 = arith.divf %26, %27 : vector<8x1xf32>
    %29 = vector.broadcast %28 : vector<8x1xf32> to vector<8x32xf32>
    %30 = arith.subf %11, %29 : vector<8x32xf32>
    %31 = arith.mulf %30, %30 : vector<8x32xf32>
    %cst_18 = arith.constant dense<0.000000e+00> : vector<8xf32>
    %32 = vector.multi_reduction <add>, %31, %cst_18 [1] : vector<8x32xf32> to vector<8xf32>
    %33 = vector.shape_cast %32 : vector<8xf32> to vector<8x1xf32>
    %cst_19 = arith.constant 3.200000e+01 : f32
    %34 = vector.broadcast %cst_19 : f32 to vector<8x1xf32>
    %35 = arith.divf %33, %34 : vector<8x1xf32>
    %36 = vector.broadcast %28 : vector<8x1xf32> to vector<8x32xf32>
    %37 = arith.subf %11, %36 : vector<8x32xf32>
    %cst_20 = arith.constant 9.99999974E-6 : f32
    %38 = vector.broadcast %cst_20 : f32 to vector<8x1xf32>
    %39 = arith.addf %35, %38 : vector<8x1xf32>
    %40 = math.rsqrt %39 : vector<8x1xf32>
    %41 = vector.broadcast %40 : vector<8x1xf32> to vector<8x32xf32>
    %42 = arith.mulf %37, %41 : vector<8x32xf32>
    %43 = vector.broadcast %22 : vector<1x32xf32> to vector<8x32xf32>
    %44 = arith.mulf %42, %43 : vector<8x32xf32>
    %45 = vector.broadcast %24 : vector<1x32xf32> to vector<8x32xf32>
    %46 = arith.addf %44, %45 : vector<8x32xf32>
    %47 = arith.truncf %46 : vector<8x32xf32> to vector<8x32xbf16>
    %c0_21 = arith.constant 0 : index
    %c0_22 = arith.constant 0 : index
    %c0_23 = arith.constant 0 : index
    %48 = vector.load %arg7[%c0_21, %c0_22, %c0_23] : memref<2x32x96xbf16, #tpu.memory_space<vmem>>, vector<1x32x96xbf16>
    %49 = vector.shape_cast %48 : vector<1x32x96xbf16> to vector<32x96xbf16>
    %cst_24 = arith.constant dense<0.000000e+00> : vector<8x96xf32>
    %50 = tpu.matmul %47, %49, %cst_24 {dimension_numbers = #tpu.dot_dimension_numbers<[1], [0], [0], [1], [0, 0, 1, 1], [], []>} : vector<8x32xbf16>, vector<32x96xbf16>, vector<8x96xf32> -> vector<8x96xf32>
    %c0_25 = arith.constant 0 : index
    %c0_26 = arith.constant 0 : index
    %c0_27 = arith.constant 0 : index
    %51 = vector.load %arg8[%c0_25, %c0_26, %c0_27] : memref<2x1x96xf32, #tpu.memory_space<vmem>>, vector<1x1x96xf32>
    %52 = vector.shape_cast %51 : vector<1x1x96xf32> to vector<1x96xf32>
    %53 = vector.broadcast %52 : vector<1x96xf32> to vector<8x96xf32>
    %54 = arith.addf %50, %53 : vector<8x96xf32>
    %55 = vector.extract_strided_slice %54 {offsets = [0, 0], sizes = [8, 32], strides = [1, 1]} : vector<8x96xf32> to vector<8x32xf32>
    %56 = vector.extract_strided_slice %54 {offsets = [0, 32], sizes = [8, 32], strides = [1, 1]} : vector<8x96xf32> to vector<8x32xf32>
    %57 = vector.extract_strided_slice %54 {offsets = [0, 64], sizes = [8, 32], strides = [1, 1]} : vector<8x96xf32> to vector<8x32xf32>
    %58 = vector.extract_strided_slice %55 {offsets = [0, 0], sizes = [8, 8], strides = [1, 1]} : vector<8x32xf32> to vector<8x8xf32>
    %59 = vector.extract_strided_slice %56 {offsets = [0, 0], sizes = [8, 8], strides = [1, 1]} : vector<8x32xf32> to vector<8x8xf32>
    %60 = vector.extract_strided_slice %57 {offsets = [0, 0], sizes = [8, 8], strides = [1, 1]} : vector<8x32xf32> to vector<8x8xf32>
    %cst_28 = arith.constant dense<0.000000e+00> : vector<8x8xf32>
    %61 = tpu.matmul %58, %59, %cst_28 {dimension_numbers = #tpu.dot_dimension_numbers<[1], [1], [0], [0], [0, 0, 1, 0], [], []>} : vector<8x8xf32>, vector<8x8xf32>, vector<8x8xf32> -> vector<8x8xf32>
    %cst_29 = arith.constant 0.353553385 : f32
    %62 = vector.broadcast %cst_29 : f32 to vector<8x8xf32>
    %63 = arith.mulf %61, %62 : vector<8x8xf32>
    %cst_30 = arith.constant -1.000000e+09 : f32
    %64 = vector.broadcast %cst_30 : f32 to vector<8x8xf32>
    %65 = arith.select %20, %63, %64 : vector<8x8xi1>, vector<8x8xf32>
    %cst_31 = arith.constant dense<0xFF800000> : vector<8xf32>
    %66 = vector.multi_reduction <maximumf>, %65, %cst_31 [1] : vector<8x8xf32> to vector<8xf32>
    %cst_32 = arith.constant 0xFF800000 : f32
    %67 = vector.broadcast %cst_32 : f32 to vector<8xf32>
    %68 = arith.maximumf %67, %66 : vector<8xf32>
    %69 = vector.shape_cast %68 : vector<8xf32> to vector<8x1xf32>
    %70 = vector.broadcast %69 : vector<8x1xf32> to vector<8x8xf32>
    %71 = arith.subf %65, %70 : vector<8x8xf32>
    %72 = math.exp %71 : vector<8x8xf32>
    %cst_33 = arith.constant dense<0.000000e+00> : vector<8xf32>
    %73 = vector.multi_reduction <add>, %72, %cst_33 [1] : vector<8x8xf32> to vector<8xf32>
    %74 = vector.shape_cast %73 : vector<8xf32> to vector<8x1xf32>
    %75 = vector.broadcast %74 : vector<8x1xf32> to vector<8x8xf32>
    %76 = arith.divf %72, %75 : vector<8x8xf32>
    %cst_34 = arith.constant dense<0.000000e+00> : vector<8x8xf32>
    %77 = tpu.matmul %76, %60, %cst_34 {dimension_numbers = #tpu.dot_dimension_numbers<[1], [0], [0], [1], [0, 0, 1, 1], [], []>} : vector<8x8xf32>, vector<8x8xf32>, vector<8x8xf32> -> vector<8x8xf32>
    %78 = vector.extract_strided_slice %55 {offsets = [0, 8], sizes = [8, 8], strides = [1, 1]} : vector<8x32xf32> to vector<8x8xf32>
    %79 = vector.extract_strided_slice %56 {offsets = [0, 8], sizes = [8, 8], strides = [1, 1]} : vector<8x32xf32> to vector<8x8xf32>
    %80 = vector.extract_strided_slice %57 {offsets = [0, 8], sizes = [8, 8], strides = [1, 1]} : vector<8x32xf32> to vector<8x8xf32>
    %cst_35 = arith.constant dense<0.000000e+00> : vector<8x8xf32>
    %81 = tpu.matmul %78, %79, %cst_35 {dimension_numbers = #tpu.dot_dimension_numbers<[1], [1], [0], [0], [0, 0, 1, 0], [], []>} : vector<8x8xf32>, vector<8x8xf32>, vector<8x8xf32> -> vector<8x8xf32>
    %cst_36 = arith.constant 0.353553385 : f32
    %82 = vector.broadcast %cst_36 : f32 to vector<8x8xf32>
    %83 = arith.mulf %81, %82 : vector<8x8xf32>
    %cst_37 = arith.constant -1.000000e+09 : f32
    %84 = vector.broadcast %cst_37 : f32 to vector<8x8xf32>
    %85 = arith.select %20, %83, %84 : vector<8x8xi1>, vector<8x8xf32>
    %cst_38 = arith.constant dense<0xFF800000> : vector<8xf32>
    %86 = vector.multi_reduction <maximumf>, %85, %cst_38 [1] : vector<8x8xf32> to vector<8xf32>
    %cst_39 = arith.constant 0xFF800000 : f32
    %87 = vector.broadcast %cst_39 : f32 to vector<8xf32>
    %88 = arith.maximumf %87, %86 : vector<8xf32>
    %89 = vector.shape_cast %88 : vector<8xf32> to vector<8x1xf32>
    %90 = vector.broadcast %89 : vector<8x1xf32> to vector<8x8xf32>
    %91 = arith.subf %85, %90 : vector<8x8xf32>
    %92 = math.exp %91 : vector<8x8xf32>
    %cst_40 = arith.constant dense<0.000000e+00> : vector<8xf32>
    %93 = vector.multi_reduction <add>, %92, %cst_40 [1] : vector<8x8xf32> to vector<8xf32>
    %94 = vector.shape_cast %93 : vector<8xf32> to vector<8x1xf32>
    %95 = vector.broadcast %94 : vector<8x1xf32> to vector<8x8xf32>
    %96 = arith.divf %92, %95 : vector<8x8xf32>
    %cst_41 = arith.constant dense<0.000000e+00> : vector<8x8xf32>
    %97 = tpu.matmul %96, %80, %cst_41 {dimension_numbers = #tpu.dot_dimension_numbers<[1], [0], [0], [1], [0, 0, 1, 1], [], []>} : vector<8x8xf32>, vector<8x8xf32>, vector<8x8xf32> -> vector<8x8xf32>
    %98 = vector.extract_strided_slice %55 {offsets = [0, 16], sizes = [8, 8], strides = [1, 1]} : vector<8x32xf32> to vector<8x8xf32>
    %99 = vector.extract_strided_slice %56 {offsets = [0, 16], sizes = [8, 8], strides = [1, 1]} : vector<8x32xf32> to vector<8x8xf32>
    %100 = vector.extract_strided_slice %57 {offsets = [0, 16], sizes = [8, 8], strides = [1, 1]} : vector<8x32xf32> to vector<8x8xf32>
    %cst_42 = arith.constant dense<0.000000e+00> : vector<8x8xf32>
    %101 = tpu.matmul %98, %99, %cst_42 {dimension_numbers = #tpu.dot_dimension_numbers<[1], [1], [0], [0], [0, 0, 1, 0], [], []>} : vector<8x8xf32>, vector<8x8xf32>, vector<8x8xf32> -> vector<8x8xf32>
    %cst_43 = arith.constant 0.353553385 : f32
    %102 = vector.broadcast %cst_43 : f32 to vector<8x8xf32>
    %103 = arith.mulf %101, %102 : vector<8x8xf32>
    %cst_44 = arith.constant -1.000000e+09 : f32
    %104 = vector.broadcast %cst_44 : f32 to vector<8x8xf32>
    %105 = arith.select %20, %103, %104 : vector<8x8xi1>, vector<8x8xf32>
    %cst_45 = arith.constant dense<0xFF800000> : vector<8xf32>
    %106 = vector.multi_reduction <maximumf>, %105, %cst_45 [1] : vector<8x8xf32> to vector<8xf32>
    %cst_46 = arith.constant 0xFF800000 : f32
    %107 = vector.broadcast %cst_46 : f32 to vector<8xf32>
    %108 = arith.maximumf %107, %106 : vector<8xf32>
    %109 = vector.shape_cast %108 : vector<8xf32> to vector<8x1xf32>
    %110 = vector.broadcast %109 : vector<8x1xf32> to vector<8x8xf32>
    %111 = arith.subf %105, %110 : vector<8x8xf32>
    %112 = math.exp %111 : vector<8x8xf32>
    %cst_47 = arith.constant dense<0.000000e+00> : vector<8xf32>
    %113 = vector.multi_reduction <add>, %112, %cst_47 [1] : vector<8x8xf32> to vector<8xf32>
    %114 = vector.shape_cast %113 : vector<8xf32> to vector<8x1xf32>
    %115 = vector.broadcast %114 : vector<8x1xf32> to vector<8x8xf32>
    %116 = arith.divf %112, %115 : vector<8x8xf32>
    %cst_48 = arith.constant dense<0.000000e+00> : vector<8x8xf32>
    %117 = tpu.matmul %116, %100, %cst_48 {dimension_numbers = #tpu.dot_dimension_numbers<[1], [0], [0], [1], [0, 0, 1, 1], [], []>} : vector<8x8xf32>, vector<8x8xf32>, vector<8x8xf32> -> vector<8x8xf32>
    %118 = vector.extract_strided_slice %55 {offsets = [0, 24], sizes = [8, 8], strides = [1, 1]} : vector<8x32xf32> to vector<8x8xf32>
    %119 = vector.extract_strided_slice %56 {offsets = [0, 24], sizes = [8, 8], strides = [1, 1]} : vector<8x32xf32> to vector<8x8xf32>
    %120 = vector.extract_strided_slice %57 {offsets = [0, 24], sizes = [8, 8], strides = [1, 1]} : vector<8x32xf32> to vector<8x8xf32>
    %cst_49 = arith.constant dense<0.000000e+00> : vector<8x8xf32>
    %121 = tpu.matmul %118, %119, %cst_49 {dimension_numbers = #tpu.dot_dimension_numbers<[1], [1], [0], [0], [0, 0, 1, 0], [], []>} : vector<8x8xf32>, vector<8x8xf32>, vector<8x8xf32> -> vector<8x8xf32>
    %cst_50 = arith.constant 0.353553385 : f32
    %122 = vector.broadcast %cst_50 : f32 to vector<8x8xf32>
    %123 = arith.mulf %121, %122 : vector<8x8xf32>
    %cst_51 = arith.constant -1.000000e+09 : f32
    %124 = vector.broadcast %cst_51 : f32 to vector<8x8xf32>
    %125 = arith.select %20, %123, %124 : vector<8x8xi1>, vector<8x8xf32>
    %cst_52 = arith.constant dense<0xFF800000> : vector<8xf32>
    %126 = vector.multi_reduction <maximumf>, %125, %cst_52 [1] : vector<8x8xf32> to vector<8xf32>
    %cst_53 = arith.constant 0xFF800000 : f32
    %127 = vector.broadcast %cst_53 : f32 to vector<8xf32>
    %128 = arith.maximumf %127, %126 : vector<8xf32>
    %129 = vector.shape_cast %128 : vector<8xf32> to vector<8x1xf32>
    %130 = vector.broadcast %129 : vector<8x1xf32> to vector<8x8xf32>
    %131 = arith.subf %125, %130 : vector<8x8xf32>
    %132 = math.exp %131 : vector<8x8xf32>
    %cst_54 = arith.constant dense<0.000000e+00> : vector<8xf32>
    %133 = vector.multi_reduction <add>, %132, %cst_54 [1] : vector<8x8xf32> to vector<8xf32>
    %134 = vector.shape_cast %133 : vector<8xf32> to vector<8x1xf32>
    %135 = vector.broadcast %134 : vector<8x1xf32> to vector<8x8xf32>
    %136 = arith.divf %132, %135 : vector<8x8xf32>
    %cst_55 = arith.constant dense<0.000000e+00> : vector<8x8xf32>
    %137 = tpu.matmul %136, %120, %cst_55 {dimension_numbers = #tpu.dot_dimension_numbers<[1], [0], [0], [1], [0, 0, 1, 1], [], []>} : vector<8x8xf32>, vector<8x8xf32>, vector<8x8xf32> -> vector<8x8xf32>
    %138 = tpu.concatenate %77, %97, %117, %137 in 1 : vector<8x8xf32>, vector<8x8xf32>, vector<8x8xf32>, vector<8x8xf32> -> vector<8x32xf32>
    %139 = arith.truncf %138 : vector<8x32xf32> to vector<8x32xbf16>
    %c0_56 = arith.constant 0 : index
    %c0_57 = arith.constant 0 : index
    %c0_58 = arith.constant 0 : index
    %140 = vector.load %arg9[%c0_56, %c0_57, %c0_58] : memref<2x32x32xbf16, #tpu.memory_space<vmem>>, vector<1x32x32xbf16>
    %141 = vector.shape_cast %140 : vector<1x32x32xbf16> to vector<32x32xbf16>
    %cst_59 = arith.constant dense<0.000000e+00> : vector<8x32xf32>
    %142 = tpu.matmul %139, %141, %cst_59 {dimension_numbers = #tpu.dot_dimension_numbers<[1], [0], [0], [1], [0, 0, 1, 1], [], []>} : vector<8x32xbf16>, vector<32x32xbf16>, vector<8x32xf32> -> vector<8x32xf32>
    %143 = arith.addf %11, %142 : vector<8x32xf32>
    %c0_60 = arith.constant 0 : index
    %c0_61 = arith.constant 0 : index
    %c0_62 = arith.constant 0 : index
    %144 = vector.load %arg10[%c0_60, %c0_61, %c0_62] : memref<2x1x32xf32, #tpu.memory_space<vmem>>, vector<1x1x32xf32>
    %145 = vector.shape_cast %144 : vector<1x1x32xf32> to vector<1x32xf32>
    %146 = vector.broadcast %145 : vector<1x32xf32> to vector<8x32xf32>
    %147 = arith.addf %143, %146 : vector<8x32xf32>
    %c0_63 = arith.constant 0 : index
    %c0_64 = arith.constant 0 : index
    %c0_65 = arith.constant 0 : index
    %148 = vector.load %arg11[%c0_63, %c0_64, %c0_65] : memref<2x1x32xf32, #tpu.memory_space<vmem>>, vector<1x1x32xf32>
    %149 = vector.shape_cast %148 : vector<1x1x32xf32> to vector<1x32xf32>
    %c0_66 = arith.constant 0 : index
    %c0_67 = arith.constant 0 : index
    %c0_68 = arith.constant 0 : index
    %150 = vector.load %arg12[%c0_66, %c0_67, %c0_68] : memref<2x1x32xf32, #tpu.memory_space<vmem>>, vector<1x1x32xf32>
    %151 = vector.shape_cast %150 : vector<1x1x32xf32> to vector<1x32xf32>
    %cst_69 = arith.constant dense<0.000000e+00> : vector<8xf32>
    %152 = vector.multi_reduction <add>, %147, %cst_69 [1] : vector<8x32xf32> to vector<8xf32>
    %153 = vector.shape_cast %152 : vector<8xf32> to vector<8x1xf32>
    %cst_70 = arith.constant 3.200000e+01 : f32
    %154 = vector.broadcast %cst_70 : f32 to vector<8x1xf32>
    %155 = arith.divf %153, %154 : vector<8x1xf32>
    %156 = vector.broadcast %155 : vector<8x1xf32> to vector<8x32xf32>
    %157 = arith.subf %147, %156 : vector<8x32xf32>
    %158 = arith.mulf %157, %157 : vector<8x32xf32>
    %cst_71 = arith.constant dense<0.000000e+00> : vector<8xf32>
    %159 = vector.multi_reduction <add>, %158, %cst_71 [1] : vector<8x32xf32> to vector<8xf32>
    %160 = vector.shape_cast %159 : vector<8xf32> to vector<8x1xf32>
    %cst_72 = arith.constant 3.200000e+01 : f32
    %161 = vector.broadcast %cst_72 : f32 to vector<8x1xf32>
    %162 = arith.divf %160, %161 : vector<8x1xf32>
    %163 = vector.broadcast %155 : vector<8x1xf32> to vector<8x32xf32>
    %164 = arith.subf %147, %163 : vector<8x32xf32>
    %cst_73 = arith.constant 9.99999974E-6 : f32
    %165 = vector.broadcast %cst_73 : f32 to vector<8x1xf32>
    %166 = arith.addf %162, %165 : vector<8x1xf32>
    %167 = math.rsqrt %166 : vector<8x1xf32>
    %168 = vector.broadcast %167 : vector<8x1xf32> to vector<8x32xf32>
    %169 = arith.mulf %164, %168 : vector<8x32xf32>
    %170 = vector.broadcast %149 : vector<1x32xf32> to vector<8x32xf32>
    %171 = arith.mulf %169, %170 : vector<8x32xf32>
    %172 = vector.broadcast %151 : vector<1x32xf32> to vector<8x32xf32>
    %173 = arith.addf %171, %172 : vector<8x32xf32>
    %174 = arith.truncf %173 : vector<8x32xf32> to vector<8x32xbf16>
    %c0_74 = arith.constant 0 : index
    %c0_75 = arith.constant 0 : index
    %c0_76 = arith.constant 0 : index
    %175 = vector.load %arg13[%c0_74, %c0_75, %c0_76] : memref<2x32x128xbf16, #tpu.memory_space<vmem>>, vector<1x32x128xbf16>
    %176 = vector.shape_cast %175 : vector<1x32x128xbf16> to vector<32x128xbf16>
    %cst_77 = arith.constant dense<0.000000e+00> : vector<8x128xf32>
    %177 = tpu.matmul %174, %176, %cst_77 {dimension_numbers = #tpu.dot_dimension_numbers<[1], [0], [0], [1], [0, 0, 1, 1], [], []>} : vector<8x32xbf16>, vector<32x128xbf16>, vector<8x128xf32> -> vector<8x128xf32>
    %c0_78 = arith.constant 0 : index
    %c0_79 = arith.constant 0 : index
    %c0_80 = arith.constant 0 : index
    %178 = vector.load %arg14[%c0_78, %c0_79, %c0_80] : memref<2x1x128xf32, #tpu.memory_space<vmem>>, vector<1x1x128xf32>
    %179 = vector.shape_cast %178 : vector<1x1x128xf32> to vector<1x128xf32>
    %180 = vector.broadcast %179 : vector<1x128xf32> to vector<8x128xf32>
    %181 = arith.addf %177, %180 : vector<8x128xf32>
    %182 = arith.mulf %181, %181 : vector<8x128xf32>
    %183 = arith.mulf %181, %182 : vector<8x128xf32>
    %cst_81 = arith.constant 4.471500e-02 : f32
    %184 = vector.broadcast %cst_81 : f32 to vector<8x128xf32>
    %185 = arith.mulf %184, %183 : vector<8x128xf32>
    %186 = arith.addf %181, %185 : vector<8x128xf32>
    %cst_82 = arith.constant 0.797884583 : f32
    %187 = vector.broadcast %cst_82 : f32 to vector<8x128xf32>
    %188 = arith.mulf %187, %186 : vector<8x128xf32>
    %189 = math.tanh %188 : vector<8x128xf32>
    %cst_83 = arith.constant 1.000000e+00 : f32
    %190 = vector.broadcast %cst_83 : f32 to vector<8x128xf32>
    %191 = arith.addf %190, %189 : vector<8x128xf32>
    %cst_84 = arith.constant 5.000000e-01 : f32
    %192 = vector.broadcast %cst_84 : f32 to vector<8x128xf32>
    %193 = arith.mulf %192, %191 : vector<8x128xf32>
    %194 = arith.mulf %181, %193 : vector<8x128xf32>
    %195 = arith.truncf %194 : vector<8x128xf32> to vector<8x128xbf16>
    %c0_85 = arith.constant 0 : index
    %c0_86 = arith.constant 0 : index
    %c0_87 = arith.constant 0 : index
    %196 = vector.load %arg15[%c0_85, %c0_86, %c0_87] : memref<2x128x32xbf16, #tpu.memory_space<vmem>>, vector<1x128x32xbf16>
    %197 = vector.shape_cast %196 : vector<1x128x32xbf16> to vector<128x32xbf16>
    %cst_88 = arith.constant dense<0.000000e+00> : vector<8x32xf32>
    %198 = tpu.matmul %195, %197, %cst_88 {dimension_numbers = #tpu.dot_dimension_numbers<[1], [0], [0], [1], [0, 0, 1, 1], [], []>} : vector<8x128xbf16>, vector<128x32xbf16>, vector<8x32xf32> -> vector<8x32xf32>
    %199 = arith.addf %147, %198 : vector<8x32xf32>
    %c0_89 = arith.constant 0 : index
    %c0_90 = arith.constant 0 : index
    %c0_91 = arith.constant 0 : index
    %200 = vector.load %arg16[%c0_89, %c0_90, %c0_91] : memref<2x1x32xf32, #tpu.memory_space<vmem>>, vector<1x1x32xf32>
    %201 = vector.shape_cast %200 : vector<1x1x32xf32> to vector<1x32xf32>
    %202 = vector.broadcast %201 : vector<1x32xf32> to vector<8x32xf32>
    %203 = arith.addf %199, %202 : vector<8x32xf32>
    %c1 = arith.constant 1 : index
    %c0_92 = arith.constant 0 : index
    %c0_93 = arith.constant 0 : index
    %204 = vector.load %arg5[%c1, %c0_92, %c0_93] : memref<2x1x32xf32, #tpu.memory_space<vmem>>, vector<1x1x32xf32>
    %205 = vector.shape_cast %204 : vector<1x1x32xf32> to vector<1x32xf32>
    %c1_94 = arith.constant 1 : index
    %c0_95 = arith.constant 0 : index
    %c0_96 = arith.constant 0 : index
    %206 = vector.load %arg6[%c1_94, %c0_95, %c0_96] : memref<2x1x32xf32, #tpu.memory_space<vmem>>, vector<1x1x32xf32>
    %207 = vector.shape_cast %206 : vector<1x1x32xf32> to vector<1x32xf32>
    %cst_97 = arith.constant dense<0.000000e+00> : vector<8xf32>
    %208 = vector.multi_reduction <add>, %203, %cst_97 [1] : vector<8x32xf32> to vector<8xf32>
    %209 = vector.shape_cast %208 : vector<8xf32> to vector<8x1xf32>
    %cst_98 = arith.constant 3.200000e+01 : f32
    %210 = vector.broadcast %cst_98 : f32 to vector<8x1xf32>
    %211 = arith.divf %209, %210 : vector<8x1xf32>
    %212 = vector.broadcast %211 : vector<8x1xf32> to vector<8x32xf32>
    %213 = arith.subf %203, %212 : vector<8x32xf32>
    %214 = arith.mulf %213, %213 : vector<8x32xf32>
    %cst_99 = arith.constant dense<0.000000e+00> : vector<8xf32>
    %215 = vector.multi_reduction <add>, %214, %cst_99 [1] : vector<8x32xf32> to vector<8xf32>
    %216 = vector.shape_cast %215 : vector<8xf32> to vector<8x1xf32>
    %cst_100 = arith.constant 3.200000e+01 : f32
    %217 = vector.broadcast %cst_100 : f32 to vector<8x1xf32>
    %218 = arith.divf %216, %217 : vector<8x1xf32>
    %219 = vector.broadcast %211 : vector<8x1xf32> to vector<8x32xf32>
    %220 = arith.subf %203, %219 : vector<8x32xf32>
    %cst_101 = arith.constant 9.99999974E-6 : f32
    %221 = vector.broadcast %cst_101 : f32 to vector<8x1xf32>
    %222 = arith.addf %218, %221 : vector<8x1xf32>
    %223 = math.rsqrt %222 : vector<8x1xf32>
    %224 = vector.broadcast %223 : vector<8x1xf32> to vector<8x32xf32>
    %225 = arith.mulf %220, %224 : vector<8x32xf32>
    %226 = vector.broadcast %205 : vector<1x32xf32> to vector<8x32xf32>
    %227 = arith.mulf %225, %226 : vector<8x32xf32>
    %228 = vector.broadcast %207 : vector<1x32xf32> to vector<8x32xf32>
    %229 = arith.addf %227, %228 : vector<8x32xf32>
    %230 = arith.truncf %229 : vector<8x32xf32> to vector<8x32xbf16>
    %c1_102 = arith.constant 1 : index
    %c0_103 = arith.constant 0 : index
    %c0_104 = arith.constant 0 : index
    %231 = vector.load %arg7[%c1_102, %c0_103, %c0_104] : memref<2x32x96xbf16, #tpu.memory_space<vmem>>, vector<1x32x96xbf16>
    %232 = vector.shape_cast %231 : vector<1x32x96xbf16> to vector<32x96xbf16>
    %cst_105 = arith.constant dense<0.000000e+00> : vector<8x96xf32>
    %233 = tpu.matmul %230, %232, %cst_105 {dimension_numbers = #tpu.dot_dimension_numbers<[1], [0], [0], [1], [0, 0, 1, 1], [], []>} : vector<8x32xbf16>, vector<32x96xbf16>, vector<8x96xf32> -> vector<8x96xf32>
    %c1_106 = arith.constant 1 : index
    %c0_107 = arith.constant 0 : index
    %c0_108 = arith.constant 0 : index
    %234 = vector.load %arg8[%c1_106, %c0_107, %c0_108] : memref<2x1x96xf32, #tpu.memory_space<vmem>>, vector<1x1x96xf32>
    %235 = vector.shape_cast %234 : vector<1x1x96xf32> to vector<1x96xf32>
    %236 = vector.broadcast %235 : vector<1x96xf32> to vector<8x96xf32>
    %237 = arith.addf %233, %236 : vector<8x96xf32>
    %238 = vector.extract_strided_slice %237 {offsets = [0, 0], sizes = [8, 32], strides = [1, 1]} : vector<8x96xf32> to vector<8x32xf32>
    %239 = vector.extract_strided_slice %237 {offsets = [0, 32], sizes = [8, 32], strides = [1, 1]} : vector<8x96xf32> to vector<8x32xf32>
    %240 = vector.extract_strided_slice %237 {offsets = [0, 64], sizes = [8, 32], strides = [1, 1]} : vector<8x96xf32> to vector<8x32xf32>
    %241 = vector.extract_strided_slice %238 {offsets = [0, 0], sizes = [8, 8], strides = [1, 1]} : vector<8x32xf32> to vector<8x8xf32>
    %242 = vector.extract_strided_slice %239 {offsets = [0, 0], sizes = [8, 8], strides = [1, 1]} : vector<8x32xf32> to vector<8x8xf32>
    %243 = vector.extract_strided_slice %240 {offsets = [0, 0], sizes = [8, 8], strides = [1, 1]} : vector<8x32xf32> to vector<8x8xf32>
    %cst_109 = arith.constant dense<0.000000e+00> : vector<8x8xf32>
    %244 = tpu.matmul %241, %242, %cst_109 {dimension_numbers = #tpu.dot_dimension_numbers<[1], [1], [0], [0], [0, 0, 1, 0], [], []>} : vector<8x8xf32>, vector<8x8xf32>, vector<8x8xf32> -> vector<8x8xf32>
    %cst_110 = arith.constant 0.353553385 : f32
    %245 = vector.broadcast %cst_110 : f32 to vector<8x8xf32>
    %246 = arith.mulf %244, %245 : vector<8x8xf32>
    %cst_111 = arith.constant -1.000000e+09 : f32
    %247 = vector.broadcast %cst_111 : f32 to vector<8x8xf32>
    %248 = arith.select %20, %246, %247 : vector<8x8xi1>, vector<8x8xf32>
    %cst_112 = arith.constant dense<0xFF800000> : vector<8xf32>
    %249 = vector.multi_reduction <maximumf>, %248, %cst_112 [1] : vector<8x8xf32> to vector<8xf32>
    %cst_113 = arith.constant 0xFF800000 : f32
    %250 = vector.broadcast %cst_113 : f32 to vector<8xf32>
    %251 = arith.maximumf %250, %249 : vector<8xf32>
    %252 = vector.shape_cast %251 : vector<8xf32> to vector<8x1xf32>
    %253 = vector.broadcast %252 : vector<8x1xf32> to vector<8x8xf32>
    %254 = arith.subf %248, %253 : vector<8x8xf32>
    %255 = math.exp %254 : vector<8x8xf32>
    %cst_114 = arith.constant dense<0.000000e+00> : vector<8xf32>
    %256 = vector.multi_reduction <add>, %255, %cst_114 [1] : vector<8x8xf32> to vector<8xf32>
    %257 = vector.shape_cast %256 : vector<8xf32> to vector<8x1xf32>
    %258 = vector.broadcast %257 : vector<8x1xf32> to vector<8x8xf32>
    %259 = arith.divf %255, %258 : vector<8x8xf32>
    %cst_115 = arith.constant dense<0.000000e+00> : vector<8x8xf32>
    %260 = tpu.matmul %259, %243, %cst_115 {dimension_numbers = #tpu.dot_dimension_numbers<[1], [0], [0], [1], [0, 0, 1, 1], [], []>} : vector<8x8xf32>, vector<8x8xf32>, vector<8x8xf32> -> vector<8x8xf32>
    %261 = vector.extract_strided_slice %238 {offsets = [0, 8], sizes = [8, 8], strides = [1, 1]} : vector<8x32xf32> to vector<8x8xf32>
    %262 = vector.extract_strided_slice %239 {offsets = [0, 8], sizes = [8, 8], strides = [1, 1]} : vector<8x32xf32> to vector<8x8xf32>
    %263 = vector.extract_strided_slice %240 {offsets = [0, 8], sizes = [8, 8], strides = [1, 1]} : vector<8x32xf32> to vector<8x8xf32>
    %cst_116 = arith.constant dense<0.000000e+00> : vector<8x8xf32>
    %264 = tpu.matmul %261, %262, %cst_116 {dimension_numbers = #tpu.dot_dimension_numbers<[1], [1], [0], [0], [0, 0, 1, 0], [], []>} : vector<8x8xf32>, vector<8x8xf32>, vector<8x8xf32> -> vector<8x8xf32>
    %cst_117 = arith.constant 0.353553385 : f32
    %265 = vector.broadcast %cst_117 : f32 to vector<8x8xf32>
    %266 = arith.mulf %264, %265 : vector<8x8xf32>
    %cst_118 = arith.constant -1.000000e+09 : f32
    %267 = vector.broadcast %cst_118 : f32 to vector<8x8xf32>
    %268 = arith.select %20, %266, %267 : vector<8x8xi1>, vector<8x8xf32>
    %cst_119 = arith.constant dense<0xFF800000> : vector<8xf32>
    %269 = vector.multi_reduction <maximumf>, %268, %cst_119 [1] : vector<8x8xf32> to vector<8xf32>
    %cst_120 = arith.constant 0xFF800000 : f32
    %270 = vector.broadcast %cst_120 : f32 to vector<8xf32>
    %271 = arith.maximumf %270, %269 : vector<8xf32>
    %272 = vector.shape_cast %271 : vector<8xf32> to vector<8x1xf32>
    %273 = vector.broadcast %272 : vector<8x1xf32> to vector<8x8xf32>
    %274 = arith.subf %268, %273 : vector<8x8xf32>
    %275 = math.exp %274 : vector<8x8xf32>
    %cst_121 = arith.constant dense<0.000000e+00> : vector<8xf32>
    %276 = vector.multi_reduction <add>, %275, %cst_121 [1] : vector<8x8xf32> to vector<8xf32>
    %277 = vector.shape_cast %276 : vector<8xf32> to vector<8x1xf32>
    %278 = vector.broadcast %277 : vector<8x1xf32> to vector<8x8xf32>
    %279 = arith.divf %275, %278 : vector<8x8xf32>
    %cst_122 = arith.constant dense<0.000000e+00> : vector<8x8xf32>
    %280 = tpu.matmul %279, %263, %cst_122 {dimension_numbers = #tpu.dot_dimension_numbers<[1], [0], [0], [1], [0, 0, 1, 1], [], []>} : vector<8x8xf32>, vector<8x8xf32>, vector<8x8xf32> -> vector<8x8xf32>
    %281 = vector.extract_strided_slice %238 {offsets = [0, 16], sizes = [8, 8], strides = [1, 1]} : vector<8x32xf32> to vector<8x8xf32>
    %282 = vector.extract_strided_slice %239 {offsets = [0, 16], sizes = [8, 8], strides = [1, 1]} : vector<8x32xf32> to vector<8x8xf32>
    %283 = vector.extract_strided_slice %240 {offsets = [0, 16], sizes = [8, 8], strides = [1, 1]} : vector<8x32xf32> to vector<8x8xf32>
    %cst_123 = arith.constant dense<0.000000e+00> : vector<8x8xf32>
    %284 = tpu.matmul %281, %282, %cst_123 {dimension_numbers = #tpu.dot_dimension_numbers<[1], [1], [0], [0], [0, 0, 1, 0], [], []>} : vector<8x8xf32>, vector<8x8xf32>, vector<8x8xf32> -> vector<8x8xf32>
    %cst_124 = arith.constant 0.353553385 : f32
    %285 = vector.broadcast %cst_124 : f32 to vector<8x8xf32>
    %286 = arith.mulf %284, %285 : vector<8x8xf32>
    %cst_125 = arith.constant -1.000000e+09 : f32
    %287 = vector.broadcast %cst_125 : f32 to vector<8x8xf32>
    %288 = arith.select %20, %286, %287 : vector<8x8xi1>, vector<8x8xf32>
    %cst_126 = arith.constant dense<0xFF800000> : vector<8xf32>
    %289 = vector.multi_reduction <maximumf>, %288, %cst_126 [1] : vector<8x8xf32> to vector<8xf32>
    %cst_127 = arith.constant 0xFF800000 : f32
    %290 = vector.broadcast %cst_127 : f32 to vector<8xf32>
    %291 = arith.maximumf %290, %289 : vector<8xf32>
    %292 = vector.shape_cast %291 : vector<8xf32> to vector<8x1xf32>
    %293 = vector.broadcast %292 : vector<8x1xf32> to vector<8x8xf32>
    %294 = arith.subf %288, %293 : vector<8x8xf32>
    %295 = math.exp %294 : vector<8x8xf32>
    %cst_128 = arith.constant dense<0.000000e+00> : vector<8xf32>
    %296 = vector.multi_reduction <add>, %295, %cst_128 [1] : vector<8x8xf32> to vector<8xf32>
    %297 = vector.shape_cast %296 : vector<8xf32> to vector<8x1xf32>
    %298 = vector.broadcast %297 : vector<8x1xf32> to vector<8x8xf32>
    %299 = arith.divf %295, %298 : vector<8x8xf32>
    %cst_129 = arith.constant dense<0.000000e+00> : vector<8x8xf32>
    %300 = tpu.matmul %299, %283, %cst_129 {dimension_numbers = #tpu.dot_dimension_numbers<[1], [0], [0], [1], [0, 0, 1, 1], [], []>} : vector<8x8xf32>, vector<8x8xf32>, vector<8x8xf32> -> vector<8x8xf32>
    %301 = vector.extract_strided_slice %238 {offsets = [0, 24], sizes = [8, 8], strides = [1, 1]} : vector<8x32xf32> to vector<8x8xf32>
    %302 = vector.extract_strided_slice %239 {offsets = [0, 24], sizes = [8, 8], strides = [1, 1]} : vector<8x32xf32> to vector<8x8xf32>
    %303 = vector.extract_strided_slice %240 {offsets = [0, 24], sizes = [8, 8], strides = [1, 1]} : vector<8x32xf32> to vector<8x8xf32>
    %cst_130 = arith.constant dense<0.000000e+00> : vector<8x8xf32>
    %304 = tpu.matmul %301, %302, %cst_130 {dimension_numbers = #tpu.dot_dimension_numbers<[1], [1], [0], [0], [0, 0, 1, 0], [], []>} : vector<8x8xf32>, vector<8x8xf32>, vector<8x8xf32> -> vector<8x8xf32>
    %cst_131 = arith.constant 0.353553385 : f32
    %305 = vector.broadcast %cst_131 : f32 to vector<8x8xf32>
    %306 = arith.mulf %304, %305 : vector<8x8xf32>
    %cst_132 = arith.constant -1.000000e+09 : f32
    %307 = vector.broadcast %cst_132 : f32 to vector<8x8xf32>
    %308 = arith.select %20, %306, %307 : vector<8x8xi1>, vector<8x8xf32>
    %cst_133 = arith.constant dense<0xFF800000> : vector<8xf32>
    %309 = vector.multi_reduction <maximumf>, %308, %cst_133 [1] : vector<8x8xf32> to vector<8xf32>
    %cst_134 = arith.constant 0xFF800000 : f32
    %310 = vector.broadcast %cst_134 : f32 to vector<8xf32>
    %311 = arith.maximumf %310, %309 : vector<8xf32>
    %312 = vector.shape_cast %311 : vector<8xf32> to vector<8x1xf32>
    %313 = vector.broadcast %312 : vector<8x1xf32> to vector<8x8xf32>
    %314 = arith.subf %308, %313 : vector<8x8xf32>
    %315 = math.exp %314 : vector<8x8xf32>
    %cst_135 = arith.constant dense<0.000000e+00> : vector<8xf32>
    %316 = vector.multi_reduction <add>, %315, %cst_135 [1] : vector<8x8xf32> to vector<8xf32>
    %317 = vector.shape_cast %316 : vector<8xf32> to vector<8x1xf32>
    %318 = vector.broadcast %317 : vector<8x1xf32> to vector<8x8xf32>
    %319 = arith.divf %315, %318 : vector<8x8xf32>
    %cst_136 = arith.constant dense<0.000000e+00> : vector<8x8xf32>
    %320 = tpu.matmul %319, %303, %cst_136 {dimension_numbers = #tpu.dot_dimension_numbers<[1], [0], [0], [1], [0, 0, 1, 1], [], []>} : vector<8x8xf32>, vector<8x8xf32>, vector<8x8xf32> -> vector<8x8xf32>
    %321 = tpu.concatenate %260, %280, %300, %320 in 1 : vector<8x8xf32>, vector<8x8xf32>, vector<8x8xf32>, vector<8x8xf32> -> vector<8x32xf32>
    %322 = arith.truncf %321 : vector<8x32xf32> to vector<8x32xbf16>
    %c1_137 = arith.constant 1 : index
    %c0_138 = arith.constant 0 : index
    %c0_139 = arith.constant 0 : index
    %323 = vector.load %arg9[%c1_137, %c0_138, %c0_139] : memref<2x32x32xbf16, #tpu.memory_space<vmem>>, vector<1x32x32xbf16>
    %324 = vector.shape_cast %323 : vector<1x32x32xbf16> to vector<32x32xbf16>
    %cst_140 = arith.constant dense<0.000000e+00> : vector<8x32xf32>
    %325 = tpu.matmul %322, %324, %cst_140 {dimension_numbers = #tpu.dot_dimension_numbers<[1], [0], [0], [1], [0, 0, 1, 1], [], []>} : vector<8x32xbf16>, vector<32x32xbf16>, vector<8x32xf32> -> vector<8x32xf32>
    %326 = arith.addf %203, %325 : vector<8x32xf32>
    %c1_141 = arith.constant 1 : index
    %c0_142 = arith.constant 0 : index
    %c0_143 = arith.constant 0 : index
    %327 = vector.load %arg10[%c1_141, %c0_142, %c0_143] : memref<2x1x32xf32, #tpu.memory_space<vmem>>, vector<1x1x32xf32>
    %328 = vector.shape_cast %327 : vector<1x1x32xf32> to vector<1x32xf32>
    %329 = vector.broadcast %328 : vector<1x32xf32> to vector<8x32xf32>
    %330 = arith.addf %326, %329 : vector<8x32xf32>
    %c1_144 = arith.constant 1 : index
    %c0_145 = arith.constant 0 : index
    %c0_146 = arith.constant 0 : index
    %331 = vector.load %arg11[%c1_144, %c0_145, %c0_146] : memref<2x1x32xf32, #tpu.memory_space<vmem>>, vector<1x1x32xf32>
    %332 = vector.shape_cast %331 : vector<1x1x32xf32> to vector<1x32xf32>
    %c1_147 = arith.constant 1 : index
    %c0_148 = arith.constant 0 : index
    %c0_149 = arith.constant 0 : index
    %333 = vector.load %arg12[%c1_147, %c0_148, %c0_149] : memref<2x1x32xf32, #tpu.memory_space<vmem>>, vector<1x1x32xf32>
    %334 = vector.shape_cast %333 : vector<1x1x32xf32> to vector<1x32xf32>
    %cst_150 = arith.constant dense<0.000000e+00> : vector<8xf32>
    %335 = vector.multi_reduction <add>, %330, %cst_150 [1] : vector<8x32xf32> to vector<8xf32>
    %336 = vector.shape_cast %335 : vector<8xf32> to vector<8x1xf32>
    %cst_151 = arith.constant 3.200000e+01 : f32
    %337 = vector.broadcast %cst_151 : f32 to vector<8x1xf32>
    %338 = arith.divf %336, %337 : vector<8x1xf32>
    %339 = vector.broadcast %338 : vector<8x1xf32> to vector<8x32xf32>
    %340 = arith.subf %330, %339 : vector<8x32xf32>
    %341 = arith.mulf %340, %340 : vector<8x32xf32>
    %cst_152 = arith.constant dense<0.000000e+00> : vector<8xf32>
    %342 = vector.multi_reduction <add>, %341, %cst_152 [1] : vector<8x32xf32> to vector<8xf32>
    %343 = vector.shape_cast %342 : vector<8xf32> to vector<8x1xf32>
    %cst_153 = arith.constant 3.200000e+01 : f32
    %344 = vector.broadcast %cst_153 : f32 to vector<8x1xf32>
    %345 = arith.divf %343, %344 : vector<8x1xf32>
    %346 = vector.broadcast %338 : vector<8x1xf32> to vector<8x32xf32>
    %347 = arith.subf %330, %346 : vector<8x32xf32>
    %cst_154 = arith.constant 9.99999974E-6 : f32
    %348 = vector.broadcast %cst_154 : f32 to vector<8x1xf32>
    %349 = arith.addf %345, %348 : vector<8x1xf32>
    %350 = math.rsqrt %349 : vector<8x1xf32>
    %351 = vector.broadcast %350 : vector<8x1xf32> to vector<8x32xf32>
    %352 = arith.mulf %347, %351 : vector<8x32xf32>
    %353 = vector.broadcast %332 : vector<1x32xf32> to vector<8x32xf32>
    %354 = arith.mulf %352, %353 : vector<8x32xf32>
    %355 = vector.broadcast %334 : vector<1x32xf32> to vector<8x32xf32>
    %356 = arith.addf %354, %355 : vector<8x32xf32>
    %357 = arith.truncf %356 : vector<8x32xf32> to vector<8x32xbf16>
    %c1_155 = arith.constant 1 : index
    %c0_156 = arith.constant 0 : index
    %c0_157 = arith.constant 0 : index
    %358 = vector.load %arg13[%c1_155, %c0_156, %c0_157] : memref<2x32x128xbf16, #tpu.memory_space<vmem>>, vector<1x32x128xbf16>
    %359 = vector.shape_cast %358 : vector<1x32x128xbf16> to vector<32x128xbf16>
    %cst_158 = arith.constant dense<0.000000e+00> : vector<8x128xf32>
    %360 = tpu.matmul %357, %359, %cst_158 {dimension_numbers = #tpu.dot_dimension_numbers<[1], [0], [0], [1], [0, 0, 1, 1], [], []>} : vector<8x32xbf16>, vector<32x128xbf16>, vector<8x128xf32> -> vector<8x128xf32>
    %c1_159 = arith.constant 1 : index
    %c0_160 = arith.constant 0 : index
    %c0_161 = arith.constant 0 : index
    %361 = vector.load %arg14[%c1_159, %c0_160, %c0_161] : memref<2x1x128xf32, #tpu.memory_space<vmem>>, vector<1x1x128xf32>
    %362 = vector.shape_cast %361 : vector<1x1x128xf32> to vector<1x128xf32>
    %363 = vector.broadcast %362 : vector<1x128xf32> to vector<8x128xf32>
    %364 = arith.addf %360, %363 : vector<8x128xf32>
    %365 = arith.mulf %364, %364 : vector<8x128xf32>
    %366 = arith.mulf %364, %365 : vector<8x128xf32>
    %cst_162 = arith.constant 4.471500e-02 : f32
    %367 = vector.broadcast %cst_162 : f32 to vector<8x128xf32>
    %368 = arith.mulf %367, %366 : vector<8x128xf32>
    %369 = arith.addf %364, %368 : vector<8x128xf32>
    %cst_163 = arith.constant 0.797884583 : f32
    %370 = vector.broadcast %cst_163 : f32 to vector<8x128xf32>
    %371 = arith.mulf %370, %369 : vector<8x128xf32>
    %372 = math.tanh %371 : vector<8x128xf32>
    %cst_164 = arith.constant 1.000000e+00 : f32
    %373 = vector.broadcast %cst_164 : f32 to vector<8x128xf32>
    %374 = arith.addf %373, %372 : vector<8x128xf32>
    %cst_165 = arith.constant 5.000000e-01 : f32
    %375 = vector.broadcast %cst_165 : f32 to vector<8x128xf32>
    %376 = arith.mulf %375, %374 : vector<8x128xf32>
    %377 = arith.mulf %364, %376 : vector<8x128xf32>
    %378 = arith.truncf %377 : vector<8x128xf32> to vector<8x128xbf16>
    %c1_166 = arith.constant 1 : index
    %c0_167 = arith.constant 0 : index
    %c0_168 = arith.constant 0 : index
    %379 = vector.load %arg15[%c1_166, %c0_167, %c0_168] : memref<2x128x32xbf16, #tpu.memory_space<vmem>>, vector<1x128x32xbf16>
    %380 = vector.shape_cast %379 : vector<1x128x32xbf16> to vector<128x32xbf16>
    %cst_169 = arith.constant dense<0.000000e+00> : vector<8x32xf32>
    %381 = tpu.matmul %378, %380, %cst_169 {dimension_numbers = #tpu.dot_dimension_numbers<[1], [0], [0], [1], [0, 0, 1, 1], [], []>} : vector<8x128xbf16>, vector<128x32xbf16>, vector<8x32xf32> -> vector<8x32xf32>
    %382 = arith.addf %330, %381 : vector<8x32xf32>
    %c1_170 = arith.constant 1 : index
    %c0_171 = arith.constant 0 : index
    %c0_172 = arith.constant 0 : index
    %383 = vector.load %arg16[%c1_170, %c0_171, %c0_172] : memref<2x1x32xf32, #tpu.memory_space<vmem>>, vector<1x1x32xf32>
    %384 = vector.shape_cast %383 : vector<1x1x32xf32> to vector<1x32xf32>
    %385 = vector.broadcast %384 : vector<1x32xf32> to vector<8x32xf32>
    %386 = arith.addf %382, %385 : vector<8x32xf32>
    %c0_173 = arith.constant 0 : index
    %c0_174 = arith.constant 0 : index
    %387 = vector.load %arg17[%c0_173, %c0_174] : memref<1x32xf32, #tpu.memory_space<vmem>>, vector<1x32xf32>
    %c0_175 = arith.constant 0 : index
    %c0_176 = arith.constant 0 : index
    %388 = vector.load %arg18[%c0_175, %c0_176] : memref<1x32xf32, #tpu.memory_space<vmem>>, vector<1x32xf32>
    %cst_177 = arith.constant dense<0.000000e+00> : vector<8xf32>
    %389 = vector.multi_reduction <add>, %386, %cst_177 [1] : vector<8x32xf32> to vector<8xf32>
    %390 = vector.shape_cast %389 : vector<8xf32> to vector<8x1xf32>
    %cst_178 = arith.constant 3.200000e+01 : f32
    %391 = vector.broadcast %cst_178 : f32 to vector<8x1xf32>
    %392 = arith.divf %390, %391 : vector<8x1xf32>
    %393 = vector.broadcast %392 : vector<8x1xf32> to vector<8x32xf32>
    %394 = arith.subf %386, %393 : vector<8x32xf32>
    %395 = arith.mulf %394, %394 : vector<8x32xf32>
    %cst_179 = arith.constant dense<0.000000e+00> : vector<8xf32>
    %396 = vector.multi_reduction <add>, %395, %cst_179 [1] : vector<8x32xf32> to vector<8xf32>
    %397 = vector.shape_cast %396 : vector<8xf32> to vector<8x1xf32>
    %cst_180 = arith.constant 3.200000e+01 : f32
    %398 = vector.broadcast %cst_180 : f32 to vector<8x1xf32>
    %399 = arith.divf %397, %398 : vector<8x1xf32>
    %400 = vector.broadcast %392 : vector<8x1xf32> to vector<8x32xf32>
    %401 = arith.subf %386, %400 : vector<8x32xf32>
    %cst_181 = arith.constant 9.99999974E-6 : f32
    %402 = vector.broadcast %cst_181 : f32 to vector<8x1xf32>
    %403 = arith.addf %399, %402 : vector<8x1xf32>
    %404 = math.rsqrt %403 : vector<8x1xf32>
    %405 = vector.broadcast %404 : vector<8x1xf32> to vector<8x32xf32>
    %406 = arith.mulf %401, %405 : vector<8x32xf32>
    %407 = vector.broadcast %387 : vector<1x32xf32> to vector<8x32xf32>
    %408 = arith.mulf %406, %407 : vector<8x32xf32>
    %409 = vector.broadcast %388 : vector<1x32xf32> to vector<8x32xf32>
    %410 = arith.addf %408, %409 : vector<8x32xf32>
    %cst_182 = arith.constant dense<0.000000e+00> : vector<32xf32>
    %411 = vector.multi_reduction <add>, %410, %cst_182 [0] : vector<8x32xf32> to vector<32xf32>
    %412 = vector.shape_cast %411 : vector<32xf32> to vector<1x32xf32>
    %cst_183 = arith.constant 8.000000e+00 : f32
    %413 = vector.broadcast %cst_183 : f32 to vector<1x32xf32>
    %414 = arith.divf %412, %413 : vector<1x32xf32>
    %415 = vector.shape_cast %414 : vector<1x32xf32> to vector<1x1x32xf32>
    %c0_184 = arith.constant 0 : index
    %c0_185 = arith.constant 0 : index
    %c0_186 = arith.constant 0 : index
    %416 = vector.load %arg19[%c0_184, %c0_185, %c0_186] : memref<1x1x32xf32, #tpu.memory_space<vmem>>, vector<1x1x32xf32>
    tpu.vector_store %arg19[%c0_184, %c0_185, %c0_186], %415 {strides = array<i32>} : memref<1x1x32xf32, #tpu.memory_space<vmem>>, vector<1x1x32xf32>,
    %417 = arith.truncf %410 : vector<8x32xf32> to vector<8x32xbf16>
    %c0_187 = arith.constant 0 : index
    %c0_188 = arith.constant 0 : index
    %418 = vector.load %arg3[%c0_187, %c0_188] : memref<64x32xbf16, #tpu.memory_space<vmem>>, vector<64x32xbf16>
    %cst_189 = arith.constant dense<0.000000e+00> : vector<8x64xf32>
    %419 = tpu.matmul %417, %418, %cst_189 {dimension_numbers = #tpu.dot_dimension_numbers<[1], [1], [0], [0], [0, 0, 1, 0], [], []>} : vector<8x32xbf16>, vector<64x32xbf16>, vector<8x64xf32> -> vector<8x64xf32>
    %420 = vector.shape_cast %419 : vector<8x64xf32> to vector<1x8x64xf32>
    %c0_190 = arith.constant 0 : index
    %c0_191 = arith.constant 0 : index
    %c0_192 = arith.constant 0 : index
    %421 = vector.load %arg20[%c0_190, %c0_191, %c0_192] : memref<1x8x64xf32, #tpu.memory_space<vmem>>, vector<1x8x64xf32>
    tpu.vector_store %arg20[%c0_190, %c0_191, %c0_192], %420 {strides = array<i32>} : memref<1x8x64xf32, #tpu.memory_space<vmem>>, vector<1x8x64xf32>,
    return
  }
  func.func @transform_0(%arg0: i32) -> (i32, i32, i32) {
    %c0_i32 = arith.constant 0 : i32
    %c0_i32_0 = arith.constant 0 : i32
    %c0_i32_1 = arith.constant 0 : i32
    return %arg0, %c0_i32, %c0_i32_0 : i32, i32, i32
  }
  func.func @transform_1(%arg0: i32) -> (i32, i32, i32) {
    %c0_i32 = arith.constant 0 : i32
    %c0_i32_0 = arith.constant 0 : i32
    %c0_i32_1 = arith.constant 0 : i32
    return %arg0, %c0_i32, %c0_i32_0 : i32, i32, i32
  }
  func.func @transform_2(%arg0: i32) -> (i32, i32) {
    %c0_i32 = arith.constant 0 : i32
    %c0_i32_0 = arith.constant 0 : i32
    %c0_i32_1 = arith.constant 0 : i32
    return %c0_i32, %c0_i32_0 : i32, i32
  }
  func.func @transform_3(%arg0: i32) -> (i32, i32) {
    %c0_i32 = arith.constant 0 : i32
    %c0_i32_0 = arith.constant 0 : i32
    %c0_i32_1 = arith.constant 0 : i32
    return %c0_i32, %c0_i32_0 : i32, i32
  }
  func.func @transform_4(%arg0: i32) -> (i32, i32, i32) {
    %c0_i32 = arith.constant 0 : i32
    %c0_i32_0 = arith.constant 0 : i32
    %c0_i32_1 = arith.constant 0 : i32
    %c0_i32_2 = arith.constant 0 : i32
    return %c0_i32, %c0_i32_0, %c0_i32_1 : i32, i32, i32
  }
  func.func @transform_5(%arg0: i32) -> (i32, i32, i32) {
    %c0_i32 = arith.constant 0 : i32
    %c0_i32_0 = arith.constant 0 : i32
    %c0_i32_1 = arith.constant 0 : i32
    %c0_i32_2 = arith.constant 0 : i32
    return %c0_i32, %c0_i32_0, %c0_i32_1 : i32, i32, i32
  }
  func.func @transform_6(%arg0: i32) -> (i32, i32, i32) {
    %c0_i32 = arith.constant 0 : i32
    %c0_i32_0 = arith.constant 0 : i32
    %c0_i32_1 = arith.constant 0 : i32
    %c0_i32_2 = arith.constant 0 : i32
    return %c0_i32, %c0_i32_0, %c0_i32_1 : i32, i32, i32
  }
  func.func @transform_7(%arg0: i32) -> (i32, i32, i32) {
    %c0_i32 = arith.constant 0 : i32
    %c0_i32_0 = arith.constant 0 : i32
    %c0_i32_1 = arith.constant 0 : i32
    %c0_i32_2 = arith.constant 0 : i32
    return %c0_i32, %c0_i32_0, %c0_i32_1 : i32, i32, i32
  }
  func.func @transform_8(%arg0: i32) -> (i32, i32, i32) {
    %c0_i32 = arith.constant 0 : i32
    %c0_i32_0 = arith.constant 0 : i32
    %c0_i32_1 = arith.constant 0 : i32
    %c0_i32_2 = arith.constant 0 : i32
    return %c0_i32, %c0_i32_0, %c0_i32_1 : i32, i32, i32
  }
  func.func @transform_9(%arg0: i32) -> (i32, i32, i32) {
    %c0_i32 = arith.constant 0 : i32
    %c0_i32_0 = arith.constant 0 : i32
    %c0_i32_1 = arith.constant 0 : i32
    %c0_i32_2 = arith.constant 0 : i32
    return %c0_i32, %c0_i32_0, %c0_i32_1 : i32, i32, i32
  }
  func.func @transform_10(%arg0: i32) -> (i32, i32, i32) {
    %c0_i32 = arith.constant 0 : i32
    %c0_i32_0 = arith.constant 0 : i32
    %c0_i32_1 = arith.constant 0 : i32
    %c0_i32_2 = arith.constant 0 : i32
    return %c0_i32, %c0_i32_0, %c0_i32_1 : i32, i32, i32
  }
  func.func @transform_11(%arg0: i32) -> (i32, i32, i32) {
    %c0_i32 = arith.constant 0 : i32
    %c0_i32_0 = arith.constant 0 : i32
    %c0_i32_1 = arith.constant 0 : i32
    %c0_i32_2 = arith.constant 0 : i32
    return %c0_i32, %c0_i32_0, %c0_i32_1 : i32, i32, i32
  }
  func.func @transform_12(%arg0: i32) -> (i32, i32, i32) {
    %c0_i32 = arith.constant 0 : i32
    %c0_i32_0 = arith.constant 0 : i32
    %c0_i32_1 = arith.constant 0 : i32
    %c0_i32_2 = arith.constant 0 : i32
    return %c0_i32, %c0_i32_0, %c0_i32_1 : i32, i32, i32
  }
  func.func @transform_13(%arg0: i32) -> (i32, i32, i32) {
    %c0_i32 = arith.constant 0 : i32
    %c0_i32_0 = arith.constant 0 : i32
    %c0_i32_1 = arith.constant 0 : i32
    %c0_i32_2 = arith.constant 0 : i32
    return %c0_i32, %c0_i32_0, %c0_i32_1 : i32, i32, i32
  }
  func.func @transform_14(%arg0: i32) -> (i32, i32, i32) {
    %c0_i32 = arith.constant 0 : i32
    %c0_i32_0 = arith.constant 0 : i32
    %c0_i32_1 = arith.constant 0 : i32
    %c0_i32_2 = arith.constant 0 : i32
    return %c0_i32, %c0_i32_0, %c0_i32_1 : i32, i32, i32
  }
  func.func @transform_15(%arg0: i32) -> (i32, i32, i32) {
    %c0_i32 = arith.constant 0 : i32
    %c0_i32_0 = arith.constant 0 : i32
    %c0_i32_1 = arith.constant 0 : i32
    %c0_i32_2 = arith.constant 0 : i32
    return %c0_i32, %c0_i32_0, %c0_i32_1 : i32, i32, i32
  }
  func.func @transform_16(%arg0: i32) -> (i32, i32) {
    %c0_i32 = arith.constant 0 : i32
    %c0_i32_0 = arith.constant 0 : i32
    %c0_i32_1 = arith.constant 0 : i32
    return %c0_i32, %c0_i32_0 : i32, i32
  }
  func.func @transform_17(%arg0: i32) -> (i32, i32) {
    %c0_i32 = arith.constant 0 : i32
    %c0_i32_0 = arith.constant 0 : i32
    %c0_i32_1 = arith.constant 0 : i32
    return %c0_i32, %c0_i32_0 : i32, i32
  }
  func.func @transform_18(%arg0: i32) -> (i32, i32, i32) {
    %c0_i32 = arith.constant 0 : i32
    %c0_i32_0 = arith.constant 0 : i32
    %c0_i32_1 = arith.constant 0 : i32
    return %arg0, %c0_i32, %c0_i32_0 : i32, i32, i32
  }
  func.func @transform_19(%arg0: i32) -> (i32, i32, i32) {
    %c0_i32 = arith.constant 0 : i32
    %c0_i32_0 = arith.constant 0 : i32
    %c0_i32_1 = arith.constant 0 : i32
    return %arg0, %c0_i32, %c0_i32_0 : i32, i32, i32
  }
}

</mosaic_0001>

<llo_original>
// kernel: forward.1
$region0: #{forward.1}
  #allocation0 [shape = 'u32[]', space=smem, size = 0x4, offset = 0x4, fixed_abs, tag = 'smem constant byte address 0x4 - core index']
  #allocation1 [shape = 'u32[144,128]{1,0:T(1,128)}', space=vmem, size = 0x12000, scoped, tag = 'internal scratch']
  %s0 = inlined_call_operand.vmem [shape: s32[2,8,1], index: 0, kind: input, shape index: {}]
  %s1 = inlined_call_operand.vmem [shape: f32[2,1,8], index: 1, kind: input, shape index: {}]
  %s2 = inlined_call_operand.vmem [shape: bf16[64,32], index: 2, kind: input, shape index: {}]
  %s3 = inlined_call_operand.vmem [shape: f32[8,32], index: 3, kind: input, shape index: {}]
  %s4 = inlined_call_operand.vmem [shape: f32[2,1,32], index: 4, kind: input, shape index: {}]
  %s5 = inlined_call_operand.vmem [shape: f32[2,1,32], index: 5, kind: input, shape index: {}]
  %s6 = inlined_call_operand.vmem [shape: bf16[2,32,96], index: 6, kind: input, shape index: {}]
  %s7 = inlined_call_operand.vmem [shape: f32[2,1,96], index: 7, kind: input, shape index: {}]
  %s8 = inlined_call_operand.vmem [shape: bf16[2,32,32], index: 8, kind: input, shape index: {}]
  %s9 = inlined_call_operand.vmem [shape: f32[2,1,32], index: 9, kind: input, shape index: {}]
  %s10 = inlined_call_operand.vmem [shape: f32[2,1,32], index: 10, kind: input, shape index: {}]
  %s11 = inlined_call_operand.vmem [shape: f32[2,1,32], index: 11, kind: input, shape index: {}]
  %s12 = inlined_call_operand.vmem [shape: bf16[2,32,128], index: 12, kind: input, shape index: {}]
  %s13 = inlined_call_operand.vmem [shape: f32[2,1,128], index: 13, kind: input, shape index: {}]
  %s14 = inlined_call_operand.vmem [shape: bf16[2,128,32], index: 14, kind: input, shape index: {}]
  %s15 = inlined_call_operand.vmem [shape: f32[2,1,32], index: 15, kind: input, shape index: {}]
  %s16 = inlined_call_operand.vmem [shape: f32[1,32], index: 16, kind: input, shape index: {}]
  %s17 = inlined_call_operand.vmem [shape: f32[1,32], index: 17, kind: input, shape index: {}]
  %s18 = inlined_call_operand.hbm [shape: f32[2,1,32], index: 18, kind: output, shape index: {0}]
  %s19 = inlined_call_operand.hbm [shape: f32[2,8,64], index: 19, kind: output, shape index: {1}]
  %20 = xla_tuple %s18, %s19
  %s21 = sld [smem:[#allocation0]]
  $region113: #{forward.1} parent=0
    _
  %s23 = ssub.s32 1, %s21
  %s24 = scalar_select 0, %s23, %s21
  $region1: #{forward.1} parent=0
    #allocation2 [shape = 'u8[1024]{0}', space=vmem, size = 0x400, scoped, tag = 'output window, operand 0']
    #allocation3 [shape = 's32[2]{0}', space=sflag, size = 0x8, scoped, tag = 'scoped memory for forward.1']
    #allocation4 [shape = 'u8[8192]{0}', space=vmem, size = 0x2000, scoped, tag = 'output window, operand 1']
    #allocation5 [shape = 's32[2]{0}', space=sflag, size = 0x8, scoped, tag = 'scoped memory for forward.1']
    %25 = vsyncpa [#allocation3], 0
    %s26 = scalar_lea.sflag [#allocation3], 1
    %27 = vsyncpa %s26, 0
    %28 = vsyncpa [#allocation5], 0
    %s29 = scalar_lea.sflag [#allocation5], 1
    %30 = vsyncpa %s29, 0
    loop: start=0, step=1, limit=4
    $region2: #{forward.1} parent=1 // loop_pre_header
      _
    $region3: #{forward.1} parent=1 // loop_header
      %s32 = sphi 0, %s36
      %p33 = scmp.ge.s32.totalorder %s32, 4
      %s42 = sphi 0, %s44
      %s45 = sphi 0, %s42
      %s46 = sphi 0, %s45
      %s62 = sphi 0, %s46
      %s68 = sphi 0, %s70
      %s71 = sphi 0, %s68
      %s72 = sphi 0, %s71
      %s88 = sphi 0, %s72
      %s92 = sphi 0, %s92
      %s94 = sphi 0, %s92
      %s95 = sphi 0, %s94
      %s109 = sphi 0, %s95
      %s113 = sphi 0, %s113
      %s115 = sphi 0, %s113
      %s116 = sphi 0, %s115
      %s130 = sphi 0, %s116
      %s134 = sphi 0, %s134
      %s136 = sphi 0, %s134
      %s137 = sphi 0, %s136
      %s151 = sphi 0, %s137
      %s155 = sphi 0, %s155
      %s157 = sphi 0, %s155
      %s158 = sphi 0, %s157
      %s172 = sphi 0, %s158
      %s176 = sphi 0, %s176
      %s178 = sphi 0, %s176
      %s179 = sphi 0, %s178
      %s193 = sphi 0, %s179
      %s197 = sphi 0, %s197
      %s199 = sphi 0, %s197
      %s200 = sphi 0, %s199
      %s214 = sphi 0, %s200
      %s218 = sphi 0, %s218
      %s220 = sphi 0, %s218
      %s221 = sphi 0, %s220
      %s235 = sphi 0, %s221
      %s239 = sphi 0, %s239
      %s241 = sphi 0, %s239
      %s242 = sphi 0, %s241
      %s256 = sphi 0, %s242
      %s260 = sphi 0, %s260
      %s262 = sphi 0, %s260
      %s263 = sphi 0, %s262
      %s277 = sphi 0, %s263
      %s281 = sphi 0, %s281
      %s283 = sphi 0, %s281
      %s284 = sphi 0, %s283
      %s298 = sphi 0, %s284
      %s302 = sphi 0, %s302
      %s304 = sphi 0, %s302
      %s305 = sphi 0, %s304
      %s319 = sphi 0, %s305
      %s323 = sphi 0, %s323
      %s325 = sphi 0, %s323
      %s326 = sphi 0, %s325
      %s340 = sphi 0, %s326
      %s344 = sphi 0, %s344
      %s346 = sphi 0, %s344
      %s347 = sphi 0, %s346
      %s361 = sphi 0, %s347
      %s365 = sphi 0, %s365
      %s367 = sphi 0, %s365
      %s368 = sphi 0, %s367
      %s382 = sphi 0, %s368
      %s386 = sphi 0, %s386
      %s388 = sphi 0, %s386
      %s389 = sphi 0, %s388
      %s403 = sphi 0, %s389
      %s407 = sphi 0, %s407
      %s409 = sphi 0, %s407
      %s410 = sphi 0, %s409
      %s424 = sphi 0, %s410
      %s430 = sphi 0, %s432
      %s433 = sphi 0, %s430
      %s434 = sphi 0, %s433
      %s450 = sphi 0, %s434
      %s456 = sphi 0, %s458
      %s459 = sphi 0, %s456
      %s460 = sphi 0, %s459
      %s476 = sphi 0, %s460
    $region4: #{forward.1} parent=1 // loop_header_branch
      %35 = sbr.rel (%p33) target = $region8
    $region5: #{forward.1} parent=1 // loop_body
      %s37 = ssub.s32 %s32, 1
      %s38 = ssub.s32 %s32, 2
      %s39 = sadd.s32 %s32, 1
      %s40 = ssub.s32 %s32, %s39
      %p41 = scmp.eq.s32.totalorder %s40, 0
      %s43 = sadd.s32 %s42, 1
      %s44 = scalar_select %p41, %s42, %s43
      %p47 = pneg %p41
      %p48 = scmp.eq.s32.totalorder %s32, 1
      %p49 = por %p47, %p48
      %p50 = scmp.ne.s32.totalorder %s42, %s45
      %p51 = scmp.eq.s32.totalorder %s32, 0
      %p52 = por %p50, %p51
      %p53 = scmp.ne.s32.totalorder %s42, %s45
      %p54 = scmp.eq.s32.totalorder %s37, 1
      %p55 = por %p53, %p54
      %p56 = scmp.ne.s32.totalorder %s45, %s46
      %p57 = scmp.eq.s32.totalorder %s37, 0
      %p58 = por %p56, %p57
      %p59 = scmp.ne.s32.totalorder %s45, %s46
      %p60 = scmp.eq.s32.totalorder %s38, 1
      %p61 = por %p59, %p60
      %p63 = scmp.ne.s32.totalorder %s46, %s62
      %p64 = scmp.eq.s32.totalorder %s38, 0
      %p65 = por %p63, %p64
      %s66 = ssub.s32 %s32, %s39
      %p67 = scmp.eq.s32.totalorder %s66, 0
      %s69 = sadd.s32 %s68, 1
      %s70 = scalar_select %p67, %s68, %s69
      %p73 = pneg %p67
      %p74 = scmp.eq.s32.totalorder %s32, 1
      %p75 = por %p73, %p74
      %p76 = scmp.ne.s32.totalorder %s68, %s71
      %p77 = scmp.eq.s32.totalorder %s32, 0
      %p78 = por %p76, %p77
      %p79 = scmp.ne.s32.totalorder %s68, %s71
      %p80 = scmp.eq.s32.totalorder %s37, 1
      %p81 = por %p79, %p80
      %p82 = scmp.ne.s32.totalorder %s71, %s72
      %p83 = scmp.eq.s32.totalorder %s37, 0
      %p84 = por %p82, %p83
      %p85 = scmp.ne.s32.totalorder %s71, %s72
      %p86 = scmp.eq.s32.totalorder %s38, 1
      %p87 = por %p85, %p86
      %p89 = scmp.ne.s32.totalorder %s72, %s88
      %p90 = scmp.eq.s32.totalorder %s38, 0
      %p91 = por %p89, %p90
      %s93 = sadd.s32 %s92, 1
      %p96 = scmp.eq.s32.totalorder %s32, 1
      %p97 = scmp.ne.s32.totalorder %s92, %s94
      %p98 = scmp.eq.s32.totalorder %s32, 0
      %p99 = por %p97, %p98
      %p100 = scmp.ne.s32.totalorder %s92, %s94
      %p101 = scmp.eq.s32.totalorder %s37, 1
      %p102 = por %p100, %p101
      %p103 = scmp.ne.s32.totalorder %s94, %s95
      %p104 = scmp.eq.s32.totalorder %s37, 0
      %p105 = por %p103, %p104
      %p106 = scmp.ne.s32.totalorder %s94, %s95
      %p107 = scmp.eq.s32.totalorder %s38, 1
      %p108 = por %p106, %p107
      %p110 = scmp.ne.s32.totalorder %s95, %s109
      %p111 = scmp.eq.s32.totalorder %s38, 0
      %p112 = por %p110, %p111
      %s114 = sadd.s32 %s113, 1
      %p117 = scmp.eq.s32.totalorder %s32, 1
      %p118 = scmp.ne.s32.totalorder %s113, %s115
      %p119 = scmp.eq.s32.totalorder %s32, 0
      %p120 = por %p118, %p119
      %p121 = scmp.ne.s32.totalorder %s113, %s115
      %p122 = scmp.eq.s32.totalorder %s37, 1
      %p123 = por %p121, %p122
      %p124 = scmp.ne.s32.totalorder %s115, %s116
      %p125 = scmp.eq.s32.totalorder %s37, 0
      %p126 = por %p124, %p125
      %p127 = scmp.ne.s32.totalorder %s115, %s116
      %p128 = scmp.eq.s32.totalorder %s38, 1
      %p129 = por %p127, %p128
      %p131 = scmp.ne.s32.totalorder %s116, %s130
      %p132 = scmp.eq.s32.totalorder %s38, 0
      %p133 = por %p131, %p132
      %s135 = sadd.s32 %s134, 1
      %p138 = scmp.eq.s32.totalorder %s32, 1
      %p139 = scmp.ne.s32.totalorder %s134, %s136
      %p140 = scmp.eq.s32.totalorder %s32, 0
      %p141 = por %p139, %p140
      %p142 = scmp.ne.s32.totalorder %s134, %s136
      %p143 = scmp.eq.s32.totalorder %s37, 1
      %p144 = por %p142, %p143
      %p145 = scmp.ne.s32.totalorder %s136, %s137
      %p146 = scmp.eq.s32.totalorder %s37, 0
      %p147 = por %p145, %p146
      %p148 = scmp.ne.s32.totalorder %s136, %s137
      %p149 = scmp.eq.s32.totalorder %s38, 1
      %p150 = por %p148, %p149
      %p152 = scmp.ne.s32.totalorder %s137, %s151
      %p153 = scmp.eq.s32.totalorder %s38, 0
      %p154 = por %p152, %p153
      %s156 = sadd.s32 %s155, 1
      %p159 = scmp.eq.s32.totalorder %s32, 1
      %p160 = scmp.ne.s32.totalorder %s155, %s157
      %p161 = scmp.eq.s32.totalorder %s32, 0
      %p162 = por %p160, %p161
      %p163 = scmp.ne.s32.totalorder %s155, %s157
      %p164 = scmp.eq.s32.totalorder %s37, 1
      %p165 = por %p163, %p164
      %p166 = scmp.ne.s32.totalorder %s157, %s158
      %p167 = scmp.eq.s32.totalorder %s37, 0
      %p168 = por %p166, %p167
      %p169 = scmp.ne.s32.totalorder %s157, %s158
      %p170 = scmp.eq.s32.totalorder %s38, 1
      %p171 = por %p169, %p170
      %p173 = scmp.ne.s32.totalorder %s158, %s172
      %p174 = scmp.eq.s32.totalorder %s38, 0
      %p175 = por %p173, %p174
      %s177 = sadd.s32 %s176, 1
      %p180 = scmp.eq.s32.totalorder %s32, 1
      %p181 = scmp.ne.s32.totalorder %s176, %s178
      %p182 = scmp.eq.s32.totalorder %s32, 0
      %p183 = por %p181, %p182
      %p184 = scmp.ne.s32.totalorder %s176, %s178
      %p185 = scmp.eq.s32.totalorder %s37, 1
      %p186 = por %p184, %p185
      %p187 = scmp.ne.s32.totalorder %s178, %s179
      %p188 = scmp.eq.s32.totalorder %s37, 0
      %p189 = por %p187, %p188
      %p190 = scmp.ne.s32.totalorder %s178, %s179
      %p191 = scmp.eq.s32.totalorder %s38, 1
      %p192 = por %p190, %p191
      %p194 = scmp.ne.s32.totalorder %s179, %s193
      %p195 = scmp.eq.s32.totalorder %s38, 0
      %p196 = por %p194, %p195
      %s198 = sadd.s32 %s197, 1
      %p201 = scmp.eq.s32.totalorder %s32, 1
      %p202 = scmp.ne.s32.totalorder %s197, %s199
      %p203 = scmp.eq.s32.totalorder %s32, 0
      %p204 = por %p202, %p203
      %p205 = scmp.ne.s32.totalorder %s197, %s199
      %p206 = scmp.eq.s32.totalorder %s37, 1
      %p207 = por %p205, %p206
      %p208 = scmp.ne.s32.totalorder %s199, %s200
      %p209 = scmp.eq.s32.totalorder %s37, 0
      %p210 = por %p208, %p209
      %p211 = scmp.ne.s32.totalorder %s199, %s200
      %p212 = scmp.eq.s32.totalorder %s38, 1
      %p213 = por %p211, %p212
      %p215 = scmp.ne.s32.totalorder %s200, %s214
      %p216 = scmp.eq.s32.totalorder %s38, 0
      %p217 = por %p215, %p216
      %s219 = sadd.s32 %s218, 1
      %p222 = scmp.eq.s32.totalorder %s32, 1
      %p223 = scmp.ne.s32.totalorder %s218, %s220
      %p224 = scmp.eq.s32.totalorder %s32, 0
      %p225 = por %p223, %p224
      %p226 = scmp.ne.s32.totalorder %s218, %s220
      %p227 = scmp.eq.s32.totalorder %s37, 1
      %p228 = por %p226, %p227
      %p229 = scmp.ne.s32.totalorder %s220, %s221
      %p230 = scmp.eq.s32.totalorder %s37, 0
      %p231 = por %p229, %p230
      %p232 = scmp.ne.s32.totalorder %s220, %s221
      %p233 = scmp.eq.s32.totalorder %s38, 1
      %p234 = por %p232, %p233
      %p236 = scmp.ne.s32.totalorder %s221, %s235
      %p237 = scmp.eq.s32.totalorder %s38, 0
      %p238 = por %p236, %p237
      %s240 = sadd.s32 %s239, 1
      %p243 = scmp.eq.s32.totalorder %s32, 1
      %p244 = scmp.ne.s32.totalorder %s239, %s241
      %p245 = scmp.eq.s32.totalorder %s32, 0
      %p246 = por %p244, %p245
      %p247 = scmp.ne.s32.totalorder %s239, %s241
      %p248 = scmp.eq.s32.totalorder %s37, 1
      %p249 = por %p247, %p248
      %p250 = scmp.ne.s32.totalorder %s241, %s242
      %p251 = scmp.eq.s32.totalorder %s37, 0
      %p252 = por %p250, %p251
      %p253 = scmp.ne.s32.totalorder %s241, %s242
      %p254 = scmp.eq.s32.totalorder %s38, 1
      %p255 = por %p253, %p254
      %p257 = scmp.ne.s32.totalorder %s242, %s256
      %p258 = scmp.eq.s32.totalorder %s38, 0
      %p259 = por %p257, %p258
      %s261 = sadd.s32 %s260, 1
      %p264 = scmp.eq.s32.totalorder %s32, 1
      %p265 = scmp.ne.s32.totalorder %s260, %s262
      %p266 = scmp.eq.s32.totalorder %s32, 0
      %p267 = por %p265, %p266
      %p268 = scmp.ne.s32.totalorder %s260, %s262
      %p269 = scmp.eq.s32.totalorder %s37, 1
      %p270 = por %p268, %p269
      %p271 = scmp.ne.s32.totalorder %s262, %s263
      %p272 = scmp.eq.s32.totalorder %s37, 0
      %p273 = por %p271, %p272
      %p274 = scmp.ne.s32.totalorder %s262, %s263
      %p275 = scmp.eq.s32.totalorder %s38, 1
      %p276 = por %p274, %p275
      %p278 = scmp.ne.s32.totalorder %s263, %s277
      %p279 = scmp.eq.s32.totalorder %s38, 0
      %p280 = por %p278, %p279
      %s282 = sadd.s32 %s281, 1
      %p285 = scmp.eq.s32.totalorder %s32, 1
      %p286 = scmp.ne.s32.totalorder %s281, %s283
      %p287 = scmp.eq.s32.totalorder %s32, 0
      %p288 = por %p286, %p287
      %p289 = scmp.ne.s32.totalorder %s281, %s283
      %p290 = scmp.eq.s32.totalorder %s37, 1
      %p291 = por %p289, %p290
      %p292 = scmp.ne.s32.totalorder %s283, %s284
      %p293 = scmp.eq.s32.totalorder %s37, 0
      %p294 = por %p292, %p293
      %p295 = scmp.ne.s32.totalorder %s283, %s284
      %p296 = scmp.eq.s32.totalorder %s38, 1
      %p297 = por %p295, %p296
      %p299 = scmp.ne.s32.totalorder %s284, %s298
      %p300 = scmp.eq.s32.totalorder %s38, 0
      %p301 = por %p299, %p300
      %s303 = sadd.s32 %s302, 1
      %p306 = scmp.eq.s32.totalorder %s32, 1
      %p307 = scmp.ne.s32.totalorder %s302, %s304
      %p308 = scmp.eq.s32.totalorder %s32, 0
      %p309 = por %p307, %p308
      %p310 = scmp.ne.s32.totalorder %s302, %s304
      %p311 = scmp.eq.s32.totalorder %s37, 1
      %p312 = por %p310, %p311
      %p313 = scmp.ne.s32.totalorder %s304, %s305
      %p314 = scmp.eq.s32.totalorder %s37, 0
      %p315 = por %p313, %p314
      %p316 = scmp.ne.s32.totalorder %s304, %s305
      %p317 = scmp.eq.s32.totalorder %s38, 1
      %p318 = por %p316, %p317
      %p320 = scmp.ne.s32.totalorder %s305, %s319
      %p321 = scmp.eq.s32.totalorder %s38, 0
      %p322 = por %p320, %p321
      %s324 = sadd.s32 %s323, 1
      %p327 = scmp.eq.s32.totalorder %s32, 1
      %p328 = scmp.ne.s32.totalorder %s323, %s325
      %p329 = scmp.eq.s32.totalorder %s32, 0
      %p330 = por %p328, %p329
      %p331 = scmp.ne.s32.totalorder %s323, %s325
      %p332 = scmp.eq.s32.totalorder %s37, 1
      %p333 = por %p331, %p332
      %p334 = scmp.ne.s32.totalorder %s325, %s326
      %p335 = scmp.eq.s32.totalorder %s37, 0
      %p336 = por %p334, %p335
      %p337 = scmp.ne.s32.totalorder %s325, %s326
      %p338 = scmp.eq.s32.totalorder %s38, 1
      %p339 = por %p337, %p338
      %p341 = scmp.ne.s32.totalorder %s326, %s340
      %p342 = scmp.eq.s32.totalorder %s38, 0
      %p343 = por %p341, %p342
      %s345 = sadd.s32 %s344, 1
      %p348 = scmp.eq.s32.totalorder %s32, 1
      %p349 = scmp.ne.s32.totalorder %s344, %s346
      %p350 = scmp.eq.s32.totalorder %s32, 0
      %p351 = por %p349, %p350
      %p352 = scmp.ne.s32.totalorder %s344, %s346
      %p353 = scmp.eq.s32.totalorder %s37, 1
      %p354 = por %p352, %p353
      %p355 = scmp.ne.s32.totalorder %s346, %s347
      %p356 = scmp.eq.s32.totalorder %s37, 0
      %p357 = por %p355, %p356
      %p358 = scmp.ne.s32.totalorder %s346, %s347
      %p359 = scmp.eq.s32.totalorder %s38, 1
      %p360 = por %p358, %p359
      %p362 = scmp.ne.s32.totalorder %s347, %s361
      %p363 = scmp.eq.s32.totalorder %s38, 0
      %p364 = por %p362, %p363
      %s366 = sadd.s32 %s365, 1
      %p369 = scmp.eq.s32.totalorder %s32, 1
      %p370 = scmp.ne.s32.totalorder %s365, %s367
      %p371 = scmp.eq.s32.totalorder %s32, 0
      %p372 = por %p370, %p371
      %p373 = scmp.ne.s32.totalorder %s365, %s367
      %p374 = scmp.eq.s32.totalorder %s37, 1
      %p375 = por %p373, %p374
      %p376 = scmp.ne.s32.totalorder %s367, %s368
      %p377 = scmp.eq.s32.totalorder %s37, 0
      %p378 = por %p376, %p377
      %p379 = scmp.ne.s32.totalorder %s367, %s368
      %p380 = scmp.eq.s32.totalorder %s38, 1
      %p381 = por %p379, %p380
      %p383 = scmp.ne.s32.totalorder %s368, %s382
      %p384 = scmp.eq.s32.totalorder %s38, 0
      %p385 = por %p383, %p384
      %s387 = sadd.s32 %s386, 1
      %p390 = scmp.eq.s32.totalorder %s32, 1
      %p391 = scmp.ne.s32.totalorder %s386, %s388
      %p392 = scmp.eq.s32.totalorder %s32, 0
      %p393 = por %p391, %p392
      %p394 = scmp.ne.s32.totalorder %s386, %s388
      %p395 = scmp.eq.s32.totalorder %s37, 1
      %p396 = por %p394, %p395
      %p397 = scmp.ne.s32.totalorder %s388, %s389
      %p398 = scmp.eq.s32.totalorder %s37, 0
      %p399 = por %p397, %p398
      %p400 = scmp.ne.s32.totalorder %s388, %s389
      %p401 = scmp.eq.s32.totalorder %s38, 1
      %p402 = por %p400, %p401
      %p404 = scmp.ne.s32.totalorder %s389, %s403
      %p405 = scmp.eq.s32.totalorder %s38, 0
      %p406 = por %p404, %p405
      %s408 = sadd.s32 %s407, 1
      %p411 = scmp.eq.s32.totalorder %s32, 1
      %p412 = scmp.ne.s32.totalorder %s407, %s409
      %p413 = scmp.eq.s32.totalorder %s32, 0
      %p414 = por %p412, %p413
      %p415 = scmp.ne.s32.totalorder %s407, %s409
      %p416 = scmp.eq.s32.totalorder %s37, 1
      %p417 = por %p415, %p416
      %p418 = scmp.ne.s32.totalorder %s409, %s410
      %p419 = scmp.eq.s32.totalorder %s37, 0
      %p420 = por %p418, %p419
      %p421 = scmp.ne.s32.totalorder %s409, %s410
      %p422 = scmp.eq.s32.totalorder %s38, 1
      %p423 = por %p421, %p422
      %p425 = scmp.ne.s32.totalorder %s410, %s424
      %p426 = scmp.eq.s32.totalorder %s38, 0
      %p427 = por %p425, %p426
      %s428 = ssub.s32 %s32, %s39
      %p429 = scmp.eq.s32.totalorder %s428, 0
      %s431 = sadd.s32 %s430, 1
      %s432 = scalar_select %p429, %s430, %s431
      %p435 = pneg %p429
      %p436 = scmp.eq.s32.totalorder %s32, 1
      %p437 = por %p435, %p436
      %p438 = scmp.ne.s32.totalorder %s430, %s433
      %p439 = scmp.eq.s32.totalorder %s32, 0
      %p440 = por %p438, %p439
      %p441 = scmp.ne.s32.totalorder %s430, %s433
      %p442 = scmp.eq.s32.totalorder %s37, 1
      %p443 = por %p441, %p442
      %p444 = scmp.ne.s32.totalorder %s433, %s434
      %p445 = scmp.eq.s32.totalorder %s37, 0
      %p446 = por %p444, %p445
      %p447 = scmp.ne.s32.totalorder %s433, %s434
      %p448 = scmp.eq.s32.totalorder %s38, 1
      %p449 = por %p447, %p448
      %p451 = scmp.ne.s32.totalorder %s434, %s450
      %p452 = scmp.eq.s32.totalorder %s38, 0
      %p453 = por %p451, %p452
      %s454 = ssub.s32 %s32, %s39
      %p455 = scmp.eq.s32.totalorder %s454, 0
      %s457 = sadd.s32 %s456, 1
      %s458 = scalar_select %p455, %s456, %s457
      %p461 = pneg %p455
      %p462 = scmp.eq.s32.totalorder %s32, 1
      %p463 = por %p461, %p462
      %p464 = scmp.ne.s32.totalorder %s456, %s459
      %p465 = scmp.eq.s32.totalorder %s32, 0
      %p466 = por %p464, %p465
      %p467 = scmp.ne.s32.totalorder %s456, %s459
      %p468 = scmp.eq.s32.totalorder %s37, 1
      %p469 = por %p467, %p468
      %p470 = scmp.ne.s32.totalorder %s459, %s460
      %p471 = scmp.eq.s32.totalorder %s37, 0
      %p472 = por %p470, %p471
      %p473 = scmp.ne.s32.totalorder %s459, %s460
      %p474 = scmp.eq.s32.totalorder %s38, 1
      %p475 = por %p473, %p474
      %p477 = scmp.ne.s32.totalorder %s460, %s476
      %p478 = scmp.eq.s32.totalorder %s38, 0
      %p479 = por %p477, %p478
      %p480 = scmp.le.s32.totalorder 1, %s32
      %p481 = scmp.lt.s32.totalorder %s32, 3
      %p482 = pnand %p480, %p481
      %p483 = pneg %p482
      // Predicated region
      $region9: #{forward.1} parent=5 // pred_check
        _
      $region10: #{forward.1} parent=5 // pred_check_branch
        %485 = sbr.rel (%p482) target = $region12
      $region11: #{forward.1} parent=5 // pred_region
        %s486 = ssub.s32 %s32, 1
        // Predicated region
        $region13: #{forward.1} parent=11 // pred_check
          %p487 = pneg %p105
        $region14: #{forward.1} parent=11 // pred_check_branch
          %489 = sbr.rel (%p487) target = $region16
        $region15: #{forward.1} parent=11 // pred_region
          _
        $region16: #{forward.1} parent=11 // pred_fallthru
          _
        // Predicated region
        $region17: #{forward.1} parent=11 // pred_check
          %p490 = pneg %p126
        $region18: #{forward.1} parent=11 // pred_check_branch
          %492 = sbr.rel (%p490) target = $region20
        $region19: #{forward.1} parent=11 // pred_region
          _
        $region20: #{forward.1} parent=11 // pred_fallthru
          _
        // Predicated region
        $region21: #{forward.1} parent=11 // pred_check
          %p493 = pneg %p147
        $region22: #{forward.1} parent=11 // pred_check_branch
          %495 = sbr.rel (%p493) target = $region24
        $region23: #{forward.1} parent=11 // pred_region
          _
        $region24: #{forward.1} parent=11 // pred_fallthru
          _
        // Predicated region
        $region25: #{forward.1} parent=11 // pred_check
          %p496 = pneg %p168
        $region26: #{forward.1} parent=11 // pred_check_branch
          %498 = sbr.rel (%p496) target = $region28
        $region27: #{forward.1} parent=11 // pred_region
          _
        $region28: #{forward.1} parent=11 // pred_fallthru
          _
        // Predicated region
        $region29: #{forward.1} parent=11 // pred_check
          %p499 = pneg %p189
        $region30: #{forward.1} parent=11 // pred_check_branch
          %501 = sbr.rel (%p499) target = $region32
        $region31: #{forward.1} parent=11 // pred_region
          _
        $region32: #{forward.1} parent=11 // pred_fallthru
          _
        // Predicated region
        $region33: #{forward.1} parent=11 // pred_check
          %p502 = pneg %p210
        $region34: #{forward.1} parent=11 // pred_check_branch
          %504 = sbr.rel (%p502) target = $region36
        $region35: #{forward.1} parent=11 // pred_region
          _
        $region36: #{forward.1} parent=11 // pred_fallthru
          _
        // Predicated region
        $region37: #{forward.1} parent=11 // pred_check
          %p505 = pneg %p231
        $region38: #{forward.1} parent=11 // pred_check_branch
          %507 = sbr.rel (%p505) target = $region40
        $region39: #{forward.1} parent=11 // pred_region
          _
        $region40: #{forward.1} parent=11 // pred_fallthru
          _
        // Predicated region
        $region41: #{forward.1} parent=11 // pred_check
          %p508 = pneg %p252
        $region42: #{forward.1} parent=11 // pred_check_branch
          %510 = sbr.rel (%p508) target = $region44
        $region43: #{forward.1} parent=11 // pred_region
          _
        $region44: #{forward.1} parent=11 // pred_fallthru
          _
        // Predicated region
        $region45: #{forward.1} parent=11 // pred_check
          %p511 = pneg %p273
        $region46: #{forward.1} parent=11 // pred_check_branch
          %513 = sbr.rel (%p511) target = $region48
        $region47: #{forward.1} parent=11 // pred_region
          _
        $region48: #{forward.1} parent=11 // pred_fallthru
          _
        // Predicated region
        $region49: #{forward.1} parent=11 // pred_check
          %p514 = pneg %p294
        $region50: #{forward.1} parent=11 // pred_check_branch
          %516 = sbr.rel (%p514) target = $region52
        $region51: #{forward.1} parent=11 // pred_region
          _
        $region52: #{forward.1} parent=11 // pred_fallthru
          _
        // Predicated region
        $region53: #{forward.1} parent=11 // pred_check
          %p517 = pneg %p315
        $region54: #{forward.1} parent=11 // pred_check_branch
          %519 = sbr.rel (%p517) target = $region56
        $region55: #{forward.1} parent=11 // pred_region
          _
        $region56: #{forward.1} parent=11 // pred_fallthru
          _
        // Predicated region
        $region57: #{forward.1} parent=11 // pred_check
          %p520 = pneg %p336
        $region58: #{forward.1} parent=11 // pred_check_branch
          %522 = sbr.rel (%p520) target = $region60
        $region59: #{forward.1} parent=11 // pred_region
          _
        $region60: #{forward.1} parent=11 // pred_fallthru
          _
        // Predicated region
        $region61: #{forward.1} parent=11 // pred_check
          %p523 = pneg %p357
        $region62: #{forward.1} parent=11 // pred_check_branch
          %525 = sbr.rel (%p523) target = $region64
        $region63: #{forward.1} parent=11 // pred_region
          _
        $region64: #{forward.1} parent=11 // pred_fallthru
          _
        // Predicated region
        $region65: #{forward.1} parent=11 // pred_check
          %p526 = pneg %p378
        $region66: #{forward.1} parent=11 // pred_check_branch
          %528 = sbr.rel (%p526) target = $region68
        $region67: #{forward.1} parent=11 // pred_region
          _
        $region68: #{forward.1} parent=11 // pred_fallthru
          _
        // Predicated region
        $region69: #{forward.1} parent=11 // pred_check
          %p529 = pneg %p399
        $region70: #{forward.1} parent=11 // pred_check_branch
          %531 = sbr.rel (%p529) target = $region72
        $region71: #{forward.1} parent=11 // pred_region
          _
        $region72: #{forward.1} parent=11 // pred_fallthru
          _
        // Predicated region
        $region73: #{forward.1} parent=11 // pred_check
          %p532 = pneg %p420
        $region74: #{forward.1} parent=11 // pred_check_branch
          %534 = sbr.rel (%p532) target = $region76
        $region75: #{forward.1} parent=11 // pred_region
          _
        $region76: #{forward.1} parent=11 // pred_fallthru
          _
      $region12: #{forward.1} parent=5 // pred_fallthru
        _
      %p535 = scmp.lt.s32.totalorder %s32, 2
      // Predicated region
      $region77: #{forward.1} parent=5 // pred_check
        %p536 = pneg %p535
      $region78: #{forward.1} parent=5 // pred_check_branch
        %538 = sbr.rel (%p536) target = $region80
      $region79: #{forward.1} parent=5 // pred_region
        // Predicated region
        $region81: #{forward.1} parent=79 // pred_check
          %p539 = pneg %p52
        $region82: #{forward.1} parent=79 // pred_check_branch
          %541 = sbr.rel (%p539) target = $region84
        $region83: #{forward.1} parent=79 // pred_region
          %p542 = scmp.lt.s32.totalorder %s32, 1
          %s543 = scalar_select %p542, %s32, 1
          %s544 = smul.addr %s543, 8
          %s545 = scalar_lea.vmem %s0, %s544
        $region84: #{forward.1} parent=79 // pred_fallthru
          _
        // Predicated region
        $region85: #{forward.1} parent=79 // pred_check
          %p546 = pneg %p78
        $region86: #{forward.1} parent=79 // pred_check_branch
          %548 = sbr.rel (%p546) target = $region88
        $region87: #{forward.1} parent=79 // pred_region
          %p549 = scmp.lt.s32.totalorder %s32, 1
          %s550 = scalar_select %p549, %s32, 1
          %s551 = scalar_lea.vmem %s1, %s550
        $region88: #{forward.1} parent=79 // pred_fallthru
          _
      $region80: #{forward.1} parent=5 // pred_fallthru
        _
      %p552 = scmp.le.s32.totalorder 1, %s32
      %p553 = scmp.lt.s32.totalorder %s32, 3
      %p554 = pnand %p552, %p553
      %p555 = pneg %p554
      // Predicated region
      $region89: #{forward.1} parent=5 // pred_check
        _
      $region90: #{forward.1} parent=5 // pred_check_branch
        %557 = sbr.rel (%p554) target = $region92
      $region91: #{forward.1} parent=5 // pred_region
        %s558 = ssub.s32 %s32, 1
        %p559 = scmp.lt.s32.totalorder %s37, 1
        %s560 = scalar_select %p559, %s37, 1
        %s561 = smul.addr %s560, 8
        %s562 = scalar_lea.vmem %s0, %s561
        %p563 = pneg %p58
        %p564 = pneg %p55
        %p565 = scmp.lt.s32.totalorder %s37, 1
        %s566 = scalar_select %p565, %s37, 1
        %s567 = scalar_lea.vmem %s1, %s566
        %p568 = pneg %p84
        %p569 = pneg %p81
        %p570 = pneg %p105
        %p571 = pneg %p102
        %p572 = pneg %p126
        %p573 = pneg %p123
        %p574 = pneg %p147
        %p575 = pneg %p144
        %p576 = pneg %p168
        %p577 = pneg %p165
        %p578 = pneg %p189
        %p579 = pneg %p186
        %p580 = pneg %p210
        %p581 = pneg %p207
        %p582 = pneg %p231
        %p583 = pneg %p228
        %p584 = pneg %p252
        %p585 = pneg %p249
        %p586 = pneg %p273
        %p587 = pneg %p270
        %p588 = pneg %p294
        %p589 = pneg %p291
        %p590 = pneg %p315
        %p591 = pneg %p312
        %p592 = pneg %p336
        %p593 = pneg %p333
        %p594 = pneg %p357
        %p595 = pneg %p354
        %p596 = pneg %p378
        %p597 = pneg %p375
        %p598 = pneg %p399
        %p599 = pneg %p396
        %p600 = pneg %p420
        %p601 = pneg %p417
        %p602 = pneg %p446
        %p603 = pneg %p443
        %s604 = sand.u32 %s433, 1
        %s605 = scalar_lea.sflag [#allocation3], %s604
        %s606 = sand.u32 %s433, 1
        %s607 = scalar_lea.vmem [#allocation2], %s606
        %p608 = pneg %p472
        %p609 = pneg %p469
        %s610 = sand.u32 %s459, 1
        %s611 = scalar_lea.sflag [#allocation5], %s610
        %s612 = sand.u32 %s459, 1
        %s613 = smul.addr %s612, 8
        %s614 = scalar_lea.vmem [#allocation4], %s613
        %p615 = scmp.lt.s32.totalorder %s37, 1
        %s616 = scalar_select %p615, %s37, 1
        %s617 = smul.addr %s616, 8
        %s618 = scalar_lea.vmem %s0, %s617
        %p619 = scmp.lt.s32.totalorder %s37, 1
        %s620 = scalar_select %p619, %s37, 1
        %s621 = scalar_lea.vmem %s1, %s620
        %v623 = vld [vmem:[%s618] sm:$0xff]
        %v624 = vlaneseq
        %v625 = vand.u32 %v624, 127
        %626 = vset.pattern.permute.xlu0 0
        %627 = vperm.xlu0 %626, %v623
        %v628 = vpop.permute.xlu0 %627
        %vm629 = vcmp.eq.s32.totalorder %v625, %v628
        %v630 = vsel %vm629, 1, 0
        %v631 = vcvt.s32.f32 %v630
        %v632 = vpack.c.bf16 %v631, %v631
        %v633 = vld [vmem:[%s2] sm:$0xf]
        %v634 = vld [vmem:[%s2 + $0x4] sm:$0xf]
        %v635 = vld [vmem:[%s2 + $0x8] sm:$0xf]
        %v636 = vld [vmem:[%s2 + $0xc] sm:$0xf]
        %v637 = vld [vmem:[%s2 + $0x10] sm:$0xf]
        %v638 = vld [vmem:[%s2 + $0x14] sm:$0xf]
        %v639 = vld [vmem:[%s2 + $0x18] sm:$0xf]
        %v640 = vld [vmem:[%s2 + $0x1c] sm:$0xf]
        %v641 = vld [vmem:[%s3] sm:$0xff]
        %v650 = vunpack.c.l.b16 %v633
        %v651 = vunpack.c.l.b16 %v634
        %v652 = vunpack.c.l.b16 %v635
        %v653 = vunpack.c.l.b16 %v636
        %v654 = vunpack.c.l.b16 %v637
        %v655 = vunpack.c.l.b16 %v638
        %v656 = vunpack.c.l.b16 %v639
        %v657 = vunpack.c.l.b16 %v640
        %v658 = vpack.c.b16 %v651, %v650
        %v659 = vpack.c.b16 %v653, %v652
        %v660 = vpack.c.b16 %v655, %v654
        %v661 = vpack.c.b16 %v657, %v656
        %vm666 = vcmask 523264
        %v668 = vsel %vm666, %v632, 0
        %670 = vmatprep.subr.bf16.mxu0 0
        %671 = vmatpush1.bf16.msra.mxu0 %v658
        %672 = vmatprep.subr.bf16.mxu0 0
        %673 = vmatpush1.bf16.msra.mxu0 %v659
        %674 = vmatprep.subr.bf16.mxu0 0
        %675 = vmatpush1.bf16.msra.mxu0 %v660
        %676 = vmatprep.subr.bf16.mxu0 0
        %677 = vmatpush1.bf16.msra.mxu0 %v661
        %678 = vmatprep.subr.bf16.mxu0 0
        %679 = vmatpush1.bf16.msra.mxu0 0
        %680 = vmatprep.subr.bf16.mxu0 0
        %681 = vmatpush1.bf16.msra.mxu0 0
        %682 = vmatprep.subr.bf16.mxu0 0
        %683 = vmatpush1.bf16.msra.mxu0 0
        %684 = vmatprep.subr.bf16.mxu0 0
        %685 = vmatpush1.bf16.msra.mxu0 0
        %686 = vmatprep.subr.bf16.mxu0 0
        %687 = vmatpush1.bf16.msra.mxu0 0
        %688 = vmatprep.subr.bf16.mxu0 0
        %689 = vmatpush1.bf16.msra.mxu0 0
        %690 = vmatprep.subr.bf16.mxu0 0
        %691 = vmatpush1.bf16.msra.mxu0 0
        %692 = vmatprep.subr.bf16.mxu0 0
        %693 = vmatpush1.bf16.msra.mxu0 0
        %694 = vmatprep.subr.bf16.mxu0 0
        %695 = vmatpush1.bf16.msra.mxu0 0
        %696 = vmatprep.subr.bf16.mxu0 0
        %697 = vmatpush1.bf16.msra.mxu0 0
        %698 = vmatprep.subr.bf16.mxu0 0
        %699 = vmatpush1.bf16.msra.mxu0 0
        %700 = vmatprep.subr.bf16.mxu0 0
        %701 = vmatpush1.bf16.msra.mxu0 0
        %702 = vmatprep.mubr.bf16.mxu0 0
        %703 = vmatmul.mubr.bf16.gmra.mrb[0].mxu0 %v668
        %v704 = vpop.f32.mrb[0].mxu0
        %v705 = vadd.f32 %v641, %v704
        %v706 = vpop.f32.mrb[0].mxu0
        %v707 = vpop.f32.mrb[0].mxu0
        %v708 = vpop.f32.mrb[0].mxu0
        %709 = vdwg.mxu0
        %v710 = vld [vmem:[%s621] sm:$0x1]
        %v711 = vlaneseq
        %v712 = vshrl.u32 %v711, 7
        %vm713 = vcmp.ge.s32.totalorder %v712, %v625
        %vm714 = vcmp.gt.f32.partialorder %v710, 0.5
        %v715 = vsel %vm714, 1, 0
        %v716 = vlaneseq
        %v717 = vshrl.u32 %v716, 7
        %v718 = vsub.s32 0, %v717
        %v719 = vrot.slane %v715, %v718
        %vm720 = vcmp.eq.s32.totalorder %v719, 1
        %vm721 = vmand %vm713, %vm720
        %v722 = vld [vmem:[%s4] sm:$0x1]
        %v723 = vld [vmem:[%s5] sm:$0x1]
        %vm724 = vcmask 261120
        %v725 = vsel %vm724, %v705, 0.0
        %726 = vadd.xlane.f32.xlu0 %v725
        %v727 = vpop.xlane.xlu0 %726
        %v728 = vrcp.pop 32.0
        %v729 = vmul.f32 %v727, %v728
        %v730 = vsub.f32 %v705, %v729
        %v731 = vmul.f32 %v730, %v730
        %v732 = vsel %vm724, %v731, 0.0
        %733 = vadd.xlane.f32.xlu0 %v732
        %v734 = vpop.xlane.xlu0 %733
        %v735 = vmul.f32 %v734, %v728
        %v736 = vadd.f32 %v735, 1e-05
        %v737 = vrsqrt.pop %v736
        %v738 = vmul.f32 %v730, %v737
        %v740 = vlaneseq
        %v741 = vshrl.u32 %v740, 7
        %v742 = vsub.s32 0, %v741
        %v743 = vrot.slane %v722, %v742
        %v745 = vmul.f32 %v738, %v743
        %v747 = vlaneseq
        %v748 = vshrl.u32 %v747, 7
        %v749 = vsub.s32 0, %v748
        %v750 = vrot.slane %v723, %v749
        %v752 = vadd.f32 %v745, %v750
        %v753 = vpack.c.bf16 %v752, %v752
        %v754 = vld [vmem:[%s6] sm:$0xf]
        %v755 = vld [vmem:[%s6 + $0x4] sm:$0xf]
        %v756 = vld [vmem:[%s6 + $0x8] sm:$0xf]
        %v757 = vld [vmem:[%s6 + $0xc] sm:$0xf]
        %v758 = vld [vmem:[%s7] sm:$0x1]
        %v760 = vlaneseq
        %v761 = vshrl.u32 %v760, 7
        %v762 = vsub.s32 0, %v761
        %v763 = vrot.slane %v758, %v762
        %v769 = vunpack.c.l.b16 %v754
        %v770 = vunpack.c.l.b16 %v755
        %v771 = vunpack.c.l.b16 %v756
        %v772 = vunpack.c.l.b16 %v757
        %v773 = vpack.c.b16 %v770, %v769
        %v774 = vpack.c.b16 %v772, %v771
        %v778 = vsel %vm724, %v753, 0
        %780 = vmatprep.subr.bf16.mxu0 0
        %781 = vmatpush1.bf16.msra.mxu0 %v773
        %782 = vmatprep.subr.bf16.mxu0 0
        %783 = vmatpush1.bf16.msra.mxu0 %v774
        %784 = vmatprep.subr.bf16.mxu0 0
        %785 = vmatpush1.bf16.msra.mxu0 0
        %786 = vmatprep.subr.bf16.mxu0 0
        %787 = vmatpush1.bf16.msra.mxu0 0
        %788 = vmatprep.subr.bf16.mxu0 0
        %789 = vmatpush1.bf16.msra.mxu0 0
        %790 = vmatprep.subr.bf16.mxu0 0
        %791 = vmatpush1.bf16.msra.mxu0 0
        %792 = vmatprep.subr.bf16.mxu0 0
        %793 = vmatpush1.bf16.msra.mxu0 0
        %794 = vmatprep.subr.bf16.mxu0 0
        %795 = vmatpush1.bf16.msra.mxu0 0
        %796 = vmatprep.subr.bf16.mxu0 0
        %797 = vmatpush1.bf16.msra.mxu0 0
        %798 = vmatprep.subr.bf16.mxu0 0
        %799 = vmatpush1.bf16.msra.mxu0 0
        %800 = vmatprep.subr.bf16.mxu0 0
        %801 = vmatpush1.bf16.msra.mxu0 0
        %802 = vmatprep.subr.bf16.mxu0 0
        %803 = vmatpush1.bf16.msra.mxu0 0
        %804 = vmatprep.subr.bf16.mxu0 0
        %805 = vmatpush1.bf16.msra.mxu0 0
        %806 = vmatprep.subr.bf16.mxu0 0
        %807 = vmatpush1.bf16.msra.mxu0 0
        %808 = vmatprep.subr.bf16.mxu0 0
        %809 = vmatpush1.bf16.msra.mxu0 0
        %810 = vmatprep.subr.bf16.mxu0 0
        %811 = vmatpush1.bf16.msra.mxu0 0
        %812 = vmatprep.mubr.bf16.mxu0 0
        %813 = vmatmul.mubr.bf16.gmra.mrb[0].mxu0 %v778
        %v814 = vpop.f32.mrb[0].mxu0
        %v815 = vadd.f32 %v763, %v814
        %v816 = vpop.f32.mrb[0].mxu0
        %v817 = vpop.f32.mrb[0].mxu0
        %v818 = vpop.f32.mrb[0].mxu0
        %819 = vdwg.mxu0
        %821 = vrot.lane.b32.xlu0 %v815, 96
        %v822 = vpop.permute.xlu0 %821
        %vm823 = vcmask 64512
        %v824 = vsel %vm823, %v815, 0
        %v826 = vsel %vm823, %v822, 0
        %828 = vmatprep.subr.mxu0 0.0
        %829 = vmatpush1.xpose.msra.mxu0 %v826
        %830 = vmatprep.subr.mxu0 0.0
        %831 = vmatpush1.xpose.msra.mxu0 0.0
        %832 = vmatprep.subr.mxu0 0.0
        %833 = vmatpush1.xpose.msra.mxu0 0.0
        %834 = vmatprep.subr.mxu0 0.0
        %835 = vmatpush1.xpose.msra.mxu0 0.0
        %836 = vmatprep.subr.mxu0 0.0
        %837 = vmatpush1.xpose.msra.mxu0 0.0
        %838 = vmatprep.subr.mxu0 0.0
        %839 = vmatpush1.xpose.msra.mxu0 0.0
        %840 = vmatprep.subr.mxu0 0.0
        %841 = vmatpush1.xpose.msra.mxu0 0.0
        %842 = vmatprep.subr.mxu0 0.0
        %843 = vmatpush1.xpose.msra.mxu0 0.0
        %844 = vmatprep.subr.mxu0 0.0
        %845 = vmatpush1.xpose.msra.mxu0 0.0
        %846 = vmatprep.subr.mxu0 0.0
        %847 = vmatpush1.xpose.msra.mxu0 0.0
        %848 = vmatprep.subr.mxu0 0.0
        %849 = vmatpush1.xpose.msra.mxu0 0.0
        %850 = vmatprep.subr.mxu0 0.0
        %851 = vmatpush1.xpose.msra.mxu0 0.0
        %852 = vmatprep.subr.mxu0 0.0
        %853 = vmatpush1.xpose.msra.mxu0 0.0
        %854 = vmatprep.subr.mxu0 0.0
        %855 = vmatpush1.xpose.msra.mxu0 0.0
        %856 = vmatprep.subr.mxu0 0.0
        %857 = vmatpush1.xpose.msra.mxu0 0.0
        %858 = vmatprep.subr.mxu0 0.0
        %859 = vmatpush1.xpose.msra.mxu0 0.0
        %860 = vmatprep.subr.mxu0 0.0
        %861 = vmatpush1.xpose.msra.mxu0 0.0
        %862 = vmatprep.subr.mxu0 0.0
        %863 = vmatpush1.xpose.msra.mxu0 0.0
        %864 = vmatprep.subr.mxu0 0.0
        %865 = vmatpush1.xpose.msra.mxu0 0.0
        %866 = vmatprep.subr.mxu0 0.0
        %867 = vmatpush1.xpose.msra.mxu0 0.0
        %868 = vmatprep.subr.mxu0 0.0
        %869 = vmatpush1.xpose.msra.mxu0 0.0
        %870 = vmatprep.subr.mxu0 0.0
        %871 = vmatpush1.xpose.msra.mxu0 0.0
        %872 = vmatprep.subr.mxu0 0.0
        %873 = vmatpush1.xpose.msra.mxu0 0.0
        %874 = vmatprep.subr.mxu0 0.0
        %875 = vmatpush1.xpose.msra.mxu0 0.0
        %876 = vmatprep.subr.mxu0 0.0
        %877 = vmatpush1.xpose.msra.mxu0 0.0
        %878 = vmatprep.subr.mxu0 0.0
        %879 = vmatpush1.xpose.msra.mxu0 0.0
        %880 = vmatprep.subr.mxu0 0.0
        %881 = vmatpush1.xpose.msra.mxu0 0.0
        %882 = vmatprep.subr.mxu0 0.0
        %883 = vmatpush1.xpose.msra.mxu0 0.0
        %884 = vmatprep.subr.mxu0 0.0
        %885 = vmatpush1.xpose.msra.mxu0 0.0
        %886 = vmatprep.subr.mxu0 0.0
        %887 = vmatpush1.xpose.msra.mxu0 0.0
        %888 = vmatprep.subr.mxu0 0.0
        %889 = vmatpush1.xpose.msra.mxu0 0.0
        %890 = vmatprep.subr.mxu0 0.0
        %891 = vmatpush1.xpose.msra.mxu0 0.0
        %892 = vmatprep.mubr.f32.mxu0 0.0
        %893 = vmatmul.mubr.f32.gmra.mrb[0].mxu0 %v824
        %v894 = vpop.f32.mrb[0].mxu0
        %v895 = vadd.f32 0.0, %v894
        %v896 = vpop.f32.mrb[0].mxu0
        %897 = vdwg.mxu0
        %v898 = vmul.f32 %v895, 0.35355338
        %v899 = vsel %vm721, %v898, -1e+09
        %v900 = vsel %vm823, %v899, -inf
        %901 = vmax.xlane.f32.xlu0 %v900
        %v902 = vpop.xlane.xlu0 %901
        %v903 = vsub.f32 %v899, %v902
        %v904 = vmul.f32 %v903, 1.442695
        %v905 = vpow.pop %v904
        %v906 = vsel %vm823, %v905, 0.0
        %907 = vadd.xlane.f32.xlu0 %v906
        %v908 = vpop.xlane.xlu0 %907
        %v909 = vrcp.pop %v908
        %v910 = vmul.f32 %v905, %v909
        %911 = vrot.lane.b32.xlu0 %v815, 64
        %v912 = vpop.permute.xlu0 %911
        %v915 = vsel %vm823, %v910, 0
        %917 = vmatprep.subr.mxu0 0.0
        %918 = vmatpush1.msra.mxu0 %v912
        %919 = vmatprep.subr.mxu0 0.0
        %920 = vmatpush1.msra.mxu0 0.0
        %921 = vmatprep.subr.mxu0 0.0
        %922 = vmatpush1.msra.mxu0 0.0
        %923 = vmatprep.subr.mxu0 0.0
        %924 = vmatpush1.msra.mxu0 0.0
        %925 = vmatprep.subr.mxu0 0.0
        %926 = vmatpush1.msra.mxu0 0.0
        %927 = vmatprep.subr.mxu0 0.0
        %928 = vmatpush1.msra.mxu0 0.0
        %929 = vmatprep.subr.mxu0 0.0
        %930 = vmatpush1.msra.mxu0 0.0
        %931 = vmatprep.subr.mxu0 0.0
        %932 = vmatpush1.msra.mxu0 0.0
        %933 = vmatprep.subr.mxu0 0.0
        %934 = vmatpush1.msra.mxu0 0.0
        %935 = vmatprep.subr.mxu0 0.0
        %936 = vmatpush1.msra.mxu0 0.0
        %937 = vmatprep.subr.mxu0 0.0
        %938 = vmatpush1.msra.mxu0 0.0
        %939 = vmatprep.subr.mxu0 0.0
        %940 = vmatpush1.msra.mxu0 0.0
        %941 = vmatprep.subr.mxu0 0.0
        %942 = vmatpush1.msra.mxu0 0.0
        %943 = vmatprep.subr.mxu0 0.0
        %944 = vmatpush1.msra.mxu0 0.0
        %945 = vmatprep.subr.mxu0 0.0
        %946 = vmatpush1.msra.mxu0 0.0
        %947 = vmatprep.subr.mxu0 0.0
        %948 = vmatpush1.msra.mxu0 0.0
        %949 = vmatprep.subr.mxu0 0.0
        %950 = vmatpush1.msra.mxu0 0.0
        %951 = vmatprep.subr.mxu0 0.0
        %952 = vmatpush1.msra.mxu0 0.0
        %953 = vmatprep.subr.mxu0 0.0
        %954 = vmatpush1.msra.mxu0 0.0
        %955 = vmatprep.subr.mxu0 0.0
        %956 = vmatpush1.msra.mxu0 0.0
        %957 = vmatprep.subr.mxu0 0.0
        %958 = vmatpush1.msra.mxu0 0.0
        %959 = vmatprep.subr.mxu0 0.0
        %960 = vmatpush1.msra.mxu0 0.0
        %961 = vmatprep.subr.mxu0 0.0
        %962 = vmatpush1.msra.mxu0 0.0
        %963 = vmatprep.subr.mxu0 0.0
        %964 = vmatpush1.msra.mxu0 0.0
        %965 = vmatprep.subr.mxu0 0.0
        %966 = vmatpush1.msra.mxu0 0.0
        %967 = vmatprep.subr.mxu0 0.0
        %968 = vmatpush1.msra.mxu0 0.0
        %969 = vmatprep.subr.mxu0 0.0
        %970 = vmatpush1.msra.mxu0 0.0
        %971 = vmatprep.subr.mxu0 0.0
        %972 = vmatpush1.msra.mxu0 0.0
        %973 = vmatprep.subr.mxu0 0.0
        %974 = vmatpush1.msra.mxu0 0.0
        %975 = vmatprep.subr.mxu0 0.0
        %976 = vmatpush1.msra.mxu0 0.0
        %977 = vmatprep.subr.mxu0 0.0
        %978 = vmatpush1.msra.mxu0 0.0
        %979 = vmatprep.subr.mxu0 0.0
        %980 = vmatpush1.msra.mxu0 0.0
        %981 = vmatprep.mubr.f32.mxu0 0.0
        %982 = vmatmul.mubr.f32.gmra.mrb[0].mxu0 %v915
        %v983 = vpop.f32.mrb[0].mxu0
        %v984 = vadd.f32 0.0, %v983
        %v985 = vpop.f32.mrb[0].mxu0
        %986 = vdwg.mxu0
        %987 = vrot.lane.b32.xlu0 %v815, 120
        %v988 = vpop.permute.xlu0 %987
        %989 = vrot.lane.b32.xlu0 %v815, 88
        %v990 = vpop.permute.xlu0 %989
        %v991 = vsel %vm823, %v988, 0
        %v993 = vsel %vm823, %v990, 0
        %995 = vmatprep.subr.mxu0 0.0
        %996 = vmatpush1.xpose.msra.mxu0 %v993
        %997 = vmatprep.subr.mxu0 0.0
        %998 = vmatpush1.xpose.msra.mxu0 0.0
        %999 = vmatprep.subr.mxu0 0.0
        %1000 = vmatpush1.xpose.msra.mxu0 0.0
        %1001 = vmatprep.subr.mxu0 0.0
        %1002 = vmatpush1.xpose.msra.mxu0 0.0
        %1003 = vmatprep.subr.mxu0 0.0
        %1004 = vmatpush1.xpose.msra.mxu0 0.0
        %1005 = vmatprep.subr.mxu0 0.0
        %1006 = vmatpush1.xpose.msra.mxu0 0.0
        %1007 = vmatprep.subr.mxu0 0.0
        %1008 = vmatpush1.xpose.msra.mxu0 0.0
        %1009 = vmatprep.subr.mxu0 0.0
        %1010 = vmatpush1.xpose.msra.mxu0 0.0
        %1011 = vmatprep.subr.mxu0 0.0
        %1012 = vmatpush1.xpose.msra.mxu0 0.0
        %1013 = vmatprep.subr.mxu0 0.0
        %1014 = vmatpush1.xpose.msra.mxu0 0.0
        %1015 = vmatprep.subr.mxu0 0.0
        %1016 = vmatpush1.xpose.msra.mxu0 0.0
        %1017 = vmatprep.subr.mxu0 0.0
        %1018 = vmatpush1.xpose.msra.mxu0 0.0
        %1019 = vmatprep.subr.mxu0 0.0
        %1020 = vmatpush1.xpose.msra.mxu0 0.0
        %1021 = vmatprep.subr.mxu0 0.0
        %1022 = vmatpush1.xpose.msra.mxu0 0.0
        %1023 = vmatprep.subr.mxu0 0.0
        %1024 = vmatpush1.xpose.msra.mxu0 0.0
        %1025 = vmatprep.subr.mxu0 0.0
        %1026 = vmatpush1.xpose.msra.mxu0 0.0
        %1027 = vmatprep.subr.mxu0 0.0
        %1028 = vmatpush1.xpose.msra.mxu0 0.0
        %1029 = vmatprep.subr.mxu0 0.0
        %1030 = vmatpush1.xpose.msra.mxu0 0.0
        %1031 = vmatprep.subr.mxu0 0.0
        %1032 = vmatpush1.xpose.msra.mxu0 0.0
        %1033 = vmatprep.subr.mxu0 0.0
        %1034 = vmatpush1.xpose.msra.mxu0 0.0
        %1035 = vmatprep.subr.mxu0 0.0
        %1036 = vmatpush1.xpose.msra.mxu0 0.0
        %1037 = vmatprep.subr.mxu0 0.0
        %1038 = vmatpush1.xpose.msra.mxu0 0.0
        %1039 = vmatprep.subr.mxu0 0.0
        %1040 = vmatpush1.xpose.msra.mxu0 0.0
        %1041 = vmatprep.subr.mxu0 0.0
        %1042 = vmatpush1.xpose.msra.mxu0 0.0
        %1043 = vmatprep.subr.mxu0 0.0
        %1044 = vmatpush1.xpose.msra.mxu0 0.0
        %1045 = vmatprep.subr.mxu0 0.0
        %1046 = vmatpush1.xpose.msra.mxu0 0.0
        %1047 = vmatprep.subr.mxu0 0.0
        %1048 = vmatpush1.xpose.msra.mxu0 0.0
        %1049 = vmatprep.subr.mxu0 0.0
        %1050 = vmatpush1.xpose.msra.mxu0 0.0
        %1051 = vmatprep.subr.mxu0 0.0
        %1052 = vmatpush1.xpose.msra.mxu0 0.0
        %1053 = vmatprep.subr.mxu0 0.0
        %1054 = vmatpush1.xpose.msra.mxu0 0.0
        %1055 = vmatprep.subr.mxu0 0.0
        %1056 = vmatpush1.xpose.msra.mxu0 0.0
        %1057 = vmatprep.subr.mxu0 0.0
        %1058 = vmatpush1.xpose.msra.mxu0 0.0
        %1059 = vmatprep.mubr.f32.mxu0 0.0
        %1060 = vmatmul.mubr.f32.gmra.mrb[0].mxu0 %v991
        %v1061 = vpop.f32.mrb[0].mxu0
        %v1062 = vadd.f32 0.0, %v1061
        %v1063 = vpop.f32.mrb[0].mxu0
        %1064 = vdwg.mxu0
        %v1065 = vmul.f32 %v1062, 0.35355338
        %v1066 = vsel %vm721, %v1065, -1e+09
        %v1067 = vsel %vm823, %v1066, -inf
        %1068 = vmax.xlane.f32.xlu0 %v1067
        %v1069 = vpop.xlane.xlu0 %1068
        %v1070 = vsub.f32 %v1066, %v1069
        %v1071 = vmul.f32 %v1070, 1.442695
        %v1072 = vpow.pop %v1071
        %v1073 = vsel %vm823, %v1072, 0.0
        %1074 = vadd.xlane.f32.xlu0 %v1073
        %v1075 = vpop.xlane.xlu0 %1074
        %v1076 = vrcp.pop %v1075
        %v1077 = vmul.f32 %v1072, %v1076
        %1078 = vrot.lane.b32.xlu0 %v815, 56
        %v1079 = vpop.permute.xlu0 %1078
        %v1082 = vsel %vm823, %v1077, 0
        %1084 = vmatprep.subr.mxu0 0.0
        %1085 = vmatpush1.msra.mxu0 %v1079
        %1086 = vmatprep.subr.mxu0 0.0
        %1087 = vmatpush1.msra.mxu0 0.0
        %1088 = vmatprep.subr.mxu0 0.0
        %1089 = vmatpush1.msra.mxu0 0.0
        %1090 = vmatprep.subr.mxu0 0.0
        %1091 = vmatpush1.msra.mxu0 0.0
        %1092 = vmatprep.subr.mxu0 0.0
        %1093 = vmatpush1.msra.mxu0 0.0
        %1094 = vmatprep.subr.mxu0 0.0
        %1095 = vmatpush1.msra.mxu0 0.0
        %1096 = vmatprep.subr.mxu0 0.0
        %1097 = vmatpush1.msra.mxu0 0.0
        %1098 = vmatprep.subr.mxu0 0.0
        %1099 = vmatpush1.msra.mxu0 0.0
        %1100 = vmatprep.subr.mxu0 0.0
        %1101 = vmatpush1.msra.mxu0 0.0
        %1102 = vmatprep.subr.mxu0 0.0
        %1103 = vmatpush1.msra.mxu0 0.0
        %1104 = vmatprep.subr.mxu0 0.0
        %1105 = vmatpush1.msra.mxu0 0.0
        %1106 = vmatprep.subr.mxu0 0.0
        %1107 = vmatpush1.msra.mxu0 0.0
        %1108 = vmatprep.subr.mxu0 0.0
        %1109 = vmatpush1.msra.mxu0 0.0
        %1110 = vmatprep.subr.mxu0 0.0
        %1111 = vmatpush1.msra.mxu0 0.0
        %1112 = vmatprep.subr.mxu0 0.0
        %1113 = vmatpush1.msra.mxu0 0.0
        %1114 = vmatprep.subr.mxu0 0.0
        %1115 = vmatpush1.msra.mxu0 0.0
        %1116 = vmatprep.subr.mxu0 0.0
        %1117 = vmatpush1.msra.mxu0 0.0
        %1118 = vmatprep.subr.mxu0 0.0
        %1119 = vmatpush1.msra.mxu0 0.0
        %1120 = vmatprep.subr.mxu0 0.0
        %1121 = vmatpush1.msra.mxu0 0.0
        %1122 = vmatprep.subr.mxu0 0.0
        %1123 = vmatpush1.msra.mxu0 0.0
        %1124 = vmatprep.subr.mxu0 0.0
        %1125 = vmatpush1.msra.mxu0 0.0
        %1126 = vmatprep.subr.mxu0 0.0
        %1127 = vmatpush1.msra.mxu0 0.0
        %1128 = vmatprep.subr.mxu0 0.0
        %1129 = vmatpush1.msra.mxu0 0.0
        %1130 = vmatprep.subr.mxu0 0.0
        %1131 = vmatpush1.msra.mxu0 0.0
        %1132 = vmatprep.subr.mxu0 0.0
        %1133 = vmatpush1.msra.mxu0 0.0
        %1134 = vmatprep.subr.mxu0 0.0
        %1135 = vmatpush1.msra.mxu0 0.0
        %1136 = vmatprep.subr.mxu0 0.0
        %1137 = vmatpush1.msra.mxu0 0.0
        %1138 = vmatprep.subr.mxu0 0.0
        %1139 = vmatpush1.msra.mxu0 0.0
        %1140 = vmatprep.subr.mxu0 0.0
        %1141 = vmatpush1.msra.mxu0 0.0
        %1142 = vmatprep.subr.mxu0 0.0
        %1143 = vmatpush1.msra.mxu0 0.0
        %1144 = vmatprep.subr.mxu0 0.0
        %1145 = vmatpush1.msra.mxu0 0.0
        %1146 = vmatprep.subr.mxu0 0.0
        %1147 = vmatpush1.msra.mxu0 0.0
        %1148 = vmatprep.mubr.f32.mxu0 0.0
        %1149 = vmatmul.mubr.f32.gmra.mrb[0].mxu0 %v1082
        %v1150 = vpop.f32.mrb[0].mxu0
        %v1151 = vadd.f32 0.0, %v1150
        %v1152 = vpop.f32.mrb[0].mxu0
        %1153 = vdwg.mxu0
        %1154 = vrot.lane.b32.xlu0 %v815, 112
        %v1155 = vpop.permute.xlu0 %1154
        %1156 = vrot.lane.b32.xlu0 %v815, 80
        %v1157 = vpop.permute.xlu0 %1156
        %v1158 = vsel %vm823, %v1155, 0
        %v1160 = vsel %vm823, %v1157, 0
        %1162 = vmatprep.subr.mxu0 0.0
        %1163 = vmatpush1.xpose.msra.mxu0 %v1160
        %1164 = vmatprep.subr.mxu0 0.0
        %1165 = vmatpush1.xpose.msra.mxu0 0.0
        %1166 = vmatprep.subr.mxu0 0.0
        %1167 = vmatpush1.xpose.msra.mxu0 0.0
        %1168 = vmatprep.subr.mxu0 0.0
        %1169 = vmatpush1.xpose.msra.mxu0 0.0
        %1170 = vmatprep.subr.mxu0 0.0
        %1171 = vmatpush1.xpose.msra.mxu0 0.0
        %1172 = vmatprep.subr.mxu0 0.0
        %1173 = vmatpush1.xpose.msra.mxu0 0.0
        %1174 = vmatprep.subr.mxu0 0.0
        %1175 = vmatpush1.xpose.msra.mxu0 0.0
        %1176 = vmatprep.subr.mxu0 0.0
        %1177 = vmatpush1.xpose.msra.mxu0 0.0
        %1178 = vmatprep.subr.mxu0 0.0
        %1179 = vmatpush1.xpose.msra.mxu0 0.0
        %1180 = vmatprep.subr.mxu0 0.0
        %1181 = vmatpush1.xpose.msra.mxu0 0.0
        %1182 = vmatprep.subr.mxu0 0.0
        %1183 = vmatpush1.xpose.msra.mxu0 0.0
        %1184 = vmatprep.subr.mxu0 0.0
        %1185 = vmatpush1.xpose.msra.mxu0 0.0
        %1186 = vmatprep.subr.mxu0 0.0
        %1187 = vmatpush1.xpose.msra.mxu0 0.0
        %1188 = vmatprep.subr.mxu0 0.0
        %1189 = vmatpush1.xpose.msra.mxu0 0.0
        %1190 = vmatprep.subr.mxu0 0.0
        %1191 = vmatpush1.xpose.msra.mxu0 0.0
        %1192 = vmatprep.subr.mxu0 0.0
        %1193 = vmatpush1.xpose.msra.mxu0 0.0
        %1194 = vmatprep.subr.mxu0 0.0
        %1195 = vmatpush1.xpose.msra.mxu0 0.0
        %1196 = vmatprep.subr.mxu0 0.0
        %1197 = vmatpush1.xpose.msra.mxu0 0.0
        %1198 = vmatprep.subr.mxu0 0.0
        %1199 = vmatpush1.xpose.msra.mxu0 0.0
        %1200 = vmatprep.subr.mxu0 0.0
        %1201 = vmatpush1.xpose.msra.mxu0 0.0
        %1202 = vmatprep.subr.mxu0 0.0
        %1203 = vmatpush1.xpose.msra.mxu0 0.0
        %1204 = vmatprep.subr.mxu0 0.0
        %1205 = vmatpush1.xpose.msra.mxu0 0.0
        %1206 = vmatprep.subr.mxu0 0.0
        %1207 = vmatpush1.xpose.msra.mxu0 0.0
        %1208 = vmatprep.subr.mxu0 0.0
        %1209 = vmatpush1.xpose.msra.mxu0 0.0
        %1210 = vmatprep.subr.mxu0 0.0
        %1211 = vmatpush1.xpose.msra.mxu0 0.0
        %1212 = vmatprep.subr.mxu0 0.0
        %1213 = vmatpush1.xpose.msra.mxu0 0.0
        %1214 = vmatprep.subr.mxu0 0.0
        %1215 = vmatpush1.xpose.msra.mxu0 0.0
        %1216 = vmatprep.subr.mxu0 0.0
        %1217 = vmatpush1.xpose.msra.mxu0 0.0
        %1218 = vmatprep.subr.mxu0 0.0
        %1219 = vmatpush1.xpose.msra.mxu0 0.0
        %1220 = vmatprep.subr.mxu0 0.0
        %1221 = vmatpush1.xpose.msra.mxu0 0.0
        %1222 = vmatprep.subr.mxu0 0.0
        %1223 = vmatpush1.xpose.msra.mxu0 0.0
        %1224 = vmatprep.subr.mxu0 0.0
        %1225 = vmatpush1.xpose.msra.mxu0 0.0
        %1226 = vmatprep.mubr.f32.mxu0 0.0
        %1227 = vmatmul.mubr.f32.gmra.mrb[0].mxu0 %v1158
        %v1228 = vpop.f32.mrb[0].mxu0
        %v1229 = vadd.f32 0.0, %v1228
        %v1230 = vpop.f32.mrb[0].mxu0
        %1231 = vdwg.mxu0
        %v1232 = vmul.f32 %v1229, 0.35355338
        %v1233 = vsel %vm721, %v1232, -1e+09
        %v1234 = vsel %vm823, %v1233, -inf
        %1235 = vmax.xlane.f32.xlu0 %v1234
        %v1236 = vpop.xlane.xlu0 %1235
        %v1237 = vsub.f32 %v1233, %v1236
        %v1238 = vmul.f32 %v1237, 1.442695
        %v1239 = vpow.pop %v1238
        %v1240 = vsel %vm823, %v1239, 0.0
        %1241 = vadd.xlane.f32.xlu0 %v1240
        %v1242 = vpop.xlane.xlu0 %1241
        %v1243 = vrcp.pop %v1242
        %v1244 = vmul.f32 %v1239, %v1243
        %1245 = vrot.lane.b32.xlu0 %v815, 48
        %v1246 = vpop.permute.xlu0 %1245
        %v1249 = vsel %vm823, %v1244, 0
        %1251 = vmatprep.subr.mxu0 0.0
        %1252 = vmatpush1.msra.mxu0 %v1246
        %1253 = vmatprep.subr.mxu0 0.0
        %1254 = vmatpush1.msra.mxu0 0.0
        %1255 = vmatprep.subr.mxu0 0.0
        %1256 = vmatpush1.msra.mxu0 0.0
        %1257 = vmatprep.subr.mxu0 0.0
        %1258 = vmatpush1.msra.mxu0 0.0
        %1259 = vmatprep.subr.mxu0 0.0
        %1260 = vmatpush1.msra.mxu0 0.0
        %1261 = vmatprep.subr.mxu0 0.0
        %1262 = vmatpush1.msra.mxu0 0.0
        %1263 = vmatprep.subr.mxu0 0.0
        %1264 = vmatpush1.msra.mxu0 0.0
        %1265 = vmatprep.subr.mxu0 0.0
        %1266 = vmatpush1.msra.mxu0 0.0
        %1267 = vmatprep.subr.mxu0 0.0
        %1268 = vmatpush1.msra.mxu0 0.0
        %1269 = vmatprep.subr.mxu0 0.0
        %1270 = vmatpush1.msra.mxu0 0.0
        %1271 = vmatprep.subr.mxu0 0.0
        %1272 = vmatpush1.msra.mxu0 0.0
        %1273 = vmatprep.subr.mxu0 0.0
        %1274 = vmatpush1.msra.mxu0 0.0
        %1275 = vmatprep.subr.mxu0 0.0
        %1276 = vmatpush1.msra.mxu0 0.0
        %1277 = vmatprep.subr.mxu0 0.0
        %1278 = vmatpush1.msra.mxu0 0.0
        %1279 = vmatprep.subr.mxu0 0.0
        %1280 = vmatpush1.msra.mxu0 0.0
        %1281 = vmatprep.subr.mxu0 0.0
        %1282 = vmatpush1.msra.mxu0 0.0
        %1283 = vmatprep.subr.mxu0 0.0
        %1284 = vmatpush1.msra.mxu0 0.0
        %1285 = vmatprep.subr.mxu0 0.0
        %1286 = vmatpush1.msra.mxu0 0.0
        %1287 = vmatprep.subr.mxu0 0.0
        %1288 = vmatpush1.msra.mxu0 0.0
        %1289 = vmatprep.subr.mxu0 0.0
        %1290 = vmatpush1.msra.mxu0 0.0
        %1291 = vmatprep.subr.mxu0 0.0
        %1292 = vmatpush1.msra.mxu0 0.0
        %1293 = vmatprep.subr.mxu0 0.0
        %1294 = vmatpush1.msra.mxu0 0.0
        %1295 = vmatprep.subr.mxu0 0.0
        %1296 = vmatpush1.msra.mxu0 0.0
        %1297 = vmatprep.subr.mxu0 0.0
        %1298 = vmatpush1.msra.mxu0 0.0
        %1299 = vmatprep.subr.mxu0 0.0
        %1300 = vmatpush1.msra.mxu0 0.0
        %1301 = vmatprep.subr.mxu0 0.0
        %1302 = vmatpush1.msra.mxu0 0.0
        %1303 = vmatprep.subr.mxu0 0.0
        %1304 = vmatpush1.msra.mxu0 0.0
        %1305 = vmatprep.subr.mxu0 0.0
        %1306 = vmatpush1.msra.mxu0 0.0
        %1307 = vmatprep.subr.mxu0 0.0
        %1308 = vmatpush1.msra.mxu0 0.0
        %1309 = vmatprep.subr.mxu0 0.0
        %1310 = vmatpush1.msra.mxu0 0.0
        %1311 = vmatprep.subr.mxu0 0.0
        %1312 = vmatpush1.msra.mxu0 0.0
        %1313 = vmatprep.subr.mxu0 0.0
        %1314 = vmatpush1.msra.mxu0 0.0
        %1315 = vmatprep.mubr.f32.mxu0 0.0
        %1316 = vmatmul.mubr.f32.gmra.mrb[0].mxu0 %v1249
        %v1317 = vpop.f32.mrb[0].mxu0
        %v1318 = vadd.f32 0.0, %v1317
        %v1319 = vpop.f32.mrb[0].mxu0
        %1320 = vdwg.mxu0
        %1321 = vrot.lane.b32.xlu0 %v815, 104
        %v1322 = vpop.permute.xlu0 %1321
        %1323 = vrot.lane.b32.xlu0 %v815, 72
        %v1324 = vpop.permute.xlu0 %1323
        %v1325 = vsel %vm823, %v1322, 0
        %v1327 = vsel %vm823, %v1324, 0
        %1329 = vmatprep.subr.mxu0 0.0
        %1330 = vmatpush1.xpose.msra.mxu0 %v1327
        %1331 = vmatprep.subr.mxu0 0.0
        %1332 = vmatpush1.xpose.msra.mxu0 0.0
        %1333 = vmatprep.subr.mxu0 0.0
        %1334 = vmatpush1.xpose.msra.mxu0 0.0
        %1335 = vmatprep.subr.mxu0 0.0
        %1336 = vmatpush1.xpose.msra.mxu0 0.0
        %1337 = vmatprep.subr.mxu0 0.0
        %1338 = vmatpush1.xpose.msra.mxu0 0.0
        %1339 = vmatprep.subr.mxu0 0.0
        %1340 = vmatpush1.xpose.msra.mxu0 0.0
        %1341 = vmatprep.subr.mxu0 0.0
        %1342 = vmatpush1.xpose.msra.mxu0 0.0
        %1343 = vmatprep.subr.mxu0 0.0
        %1344 = vmatpush1.xpose.msra.mxu0 0.0
        %1345 = vmatprep.subr.mxu0 0.0
        %1346 = vmatpush1.xpose.msra.mxu0 0.0
        %1347 = vmatprep.subr.mxu0 0.0
        %1348 = vmatpush1.xpose.msra.mxu0 0.0
        %1349 = vmatprep.subr.mxu0 0.0
        %1350 = vmatpush1.xpose.msra.mxu0 0.0
        %1351 = vmatprep.subr.mxu0 0.0
        %1352 = vmatpush1.xpose.msra.mxu0 0.0
        %1353 = vmatprep.subr.mxu0 0.0
        %1354 = vmatpush1.xpose.msra.mxu0 0.0
        %1355 = vmatprep.subr.mxu0 0.0
        %1356 = vmatpush1.xpose.msra.mxu0 0.0
        %1357 = vmatprep.subr.mxu0 0.0
        %1358 = vmatpush1.xpose.msra.mxu0 0.0
        %1359 = vmatprep.subr.mxu0 0.0
        %1360 = vmatpush1.xpose.msra.mxu0 0.0
        %1361 = vmatprep.subr.mxu0 0.0
        %1362 = vmatpush1.xpose.msra.mxu0 0.0
        %1363 = vmatprep.subr.mxu0 0.0
        %1364 = vmatpush1.xpose.msra.mxu0 0.0
        %1365 = vmatprep.subr.mxu0 0.0
        %1366 = vmatpush1.xpose.msra.mxu0 0.0
        %1367 = vmatprep.subr.mxu0 0.0
        %1368 = vmatpush1.xpose.msra.mxu0 0.0
        %1369 = vmatprep.subr.mxu0 0.0
        %1370 = vmatpush1.xpose.msra.mxu0 0.0
        %1371 = vmatprep.subr.mxu0 0.0
        %1372 = vmatpush1.xpose.msra.mxu0 0.0
        %1373 = vmatprep.subr.mxu0 0.0
        %1374 = vmatpush1.xpose.msra.mxu0 0.0
        %1375 = vmatprep.subr.mxu0 0.0
        %1376 = vmatpush1.xpose.msra.mxu0 0.0
        %1377 = vmatprep.subr.mxu0 0.0
        %1378 = vmatpush1.xpose.msra.mxu0 0.0
        %1379 = vmatprep.subr.mxu0 0.0
        %1380 = vmatpush1.xpose.msra.mxu0 0.0
        %1381 = vmatprep.subr.mxu0 0.0
        %1382 = vmatpush1.xpose.msra.mxu0 0.0
        %1383 = vmatprep.subr.mxu0 0.0
        %1384 = vmatpush1.xpose.msra.mxu0 0.0
        %1385 = vmatprep.subr.mxu0 0.0
        %1386 = vmatpush1.xpose.msra.mxu0 0.0
        %1387 = vmatprep.subr.mxu0 0.0
        %1388 = vmatpush1.xpose.msra.mxu0 0.0
        %1389 = vmatprep.subr.mxu0 0.0
        %1390 = vmatpush1.xpose.msra.mxu0 0.0
        %1391 = vmatprep.subr.mxu0 0.0
        %1392 = vmatpush1.xpose.msra.mxu0 0.0
        %1393 = vmatprep.mubr.f32.mxu0 0.0
        %1394 = vmatmul.mubr.f32.gmra.mrb[0].mxu0 %v1325
        %v1395 = vpop.f32.mrb[0].mxu0
        %v1396 = vadd.f32 0.0, %v1395
        %v1397 = vpop.f32.mrb[0].mxu0
        %1398 = vdwg.mxu0
        %v1399 = vmul.f32 %v1396, 0.35355338
        %v1400 = vsel %vm721, %v1399, -1e+09
        %v1401 = vsel %vm823, %v1400, -inf
        %1402 = vmax.xlane.f32.xlu0 %v1401
        %v1403 = vpop.xlane.xlu0 %1402
        %v1404 = vsub.f32 %v1400, %v1403
        %v1405 = vmul.f32 %v1404, 1.442695
        %v1406 = vpow.pop %v1405
        %v1407 = vsel %vm823, %v1406, 0.0
        %1408 = vadd.xlane.f32.xlu0 %v1407
        %v1409 = vpop.xlane.xlu0 %1408
        %v1410 = vrcp.pop %v1409
        %v1411 = vmul.f32 %v1406, %v1410
        %1412 = vrot.lane.b32.xlu0 %v815, 40
        %v1413 = vpop.permute.xlu0 %1412
        %v1416 = vsel %vm823, %v1411, 0
        %1418 = vmatprep.subr.mxu0 0.0
        %1419 = vmatpush1.msra.mxu0 %v1413
        %1420 = vmatprep.subr.mxu0 0.0
        %1421 = vmatpush1.msra.mxu0 0.0
        %1422 = vmatprep.subr.mxu0 0.0
        %1423 = vmatpush1.msra.mxu0 0.0
        %1424 = vmatprep.subr.mxu0 0.0
        %1425 = vmatpush1.msra.mxu0 0.0
        %1426 = vmatprep.subr.mxu0 0.0
        %1427 = vmatpush1.msra.mxu0 0.0
        %1428 = vmatprep.subr.mxu0 0.0
        %1429 = vmatpush1.msra.mxu0 0.0
        %1430 = vmatprep.subr.mxu0 0.0
        %1431 = vmatpush1.msra.mxu0 0.0
        %1432 = vmatprep.subr.mxu0 0.0
        %1433 = vmatpush1.msra.mxu0 0.0
        %1434 = vmatprep.subr.mxu0 0.0
        %1435 = vmatpush1.msra.mxu0 0.0
        %1436 = vmatprep.subr.mxu0 0.0
        %1437 = vmatpush1.msra.mxu0 0.0
        %1438 = vmatprep.subr.mxu0 0.0
        %1439 = vmatpush1.msra.mxu0 0.0
        %1440 = vmatprep.subr.mxu0 0.0
        %1441 = vmatpush1.msra.mxu0 0.0
        %1442 = vmatprep.subr.mxu0 0.0
        %1443 = vmatpush1.msra.mxu0 0.0
        %1444 = vmatprep.subr.mxu0 0.0
        %1445 = vmatpush1.msra.mxu0 0.0
        %1446 = vmatprep.subr.mxu0 0.0
        %1447 = vmatpush1.msra.mxu0 0.0
        %1448 = vmatprep.subr.mxu0 0.0
        %1449 = vmatpush1.msra.mxu0 0.0
        %1450 = vmatprep.subr.mxu0 0.0
        %1451 = vmatpush1.msra.mxu0 0.0
        %1452 = vmatprep.subr.mxu0 0.0
        %1453 = vmatpush1.msra.mxu0 0.0
        %1454 = vmatprep.subr.mxu0 0.0
        %1455 = vmatpush1.msra.mxu0 0.0
        %1456 = vmatprep.subr.mxu0 0.0
        %1457 = vmatpush1.msra.mxu0 0.0
        %1458 = vmatprep.subr.mxu0 0.0
        %1459 = vmatpush1.msra.mxu0 0.0
        %1460 = vmatprep.subr.mxu0 0.0
        %1461 = vmatpush1.msra.mxu0 0.0
        %1462 = vmatprep.subr.mxu0 0.0
        %1463 = vmatpush1.msra.mxu0 0.0
        %1464 = vmatprep.subr.mxu0 0.0
        %1465 = vmatpush1.msra.mxu0 0.0
        %1466 = vmatprep.subr.mxu0 0.0
        %1467 = vmatpush1.msra.mxu0 0.0
        %1468 = vmatprep.subr.mxu0 0.0
        %1469 = vmatpush1.msra.mxu0 0.0
        %1470 = vmatprep.subr.mxu0 0.0
        %1471 = vmatpush1.msra.mxu0 0.0
        %1472 = vmatprep.subr.mxu0 0.0
        %1473 = vmatpush1.msra.mxu0 0.0
        %1474 = vmatprep.subr.mxu0 0.0
        %1475 = vmatpush1.msra.mxu0 0.0
        %1476 = vmatprep.subr.mxu0 0.0
        %1477 = vmatpush1.msra.mxu0 0.0
        %1478 = vmatprep.subr.mxu0 0.0
        %1479 = vmatpush1.msra.mxu0 0.0
        %1480 = vmatprep.subr.mxu0 0.0
        %1481 = vmatpush1.msra.mxu0 0.0
        %1482 = vmatprep.mubr.f32.mxu0 0.0
        %1483 = vmatmul.mubr.f32.gmra.mrb[0].mxu0 %v1416
        %v1484 = vpop.f32.mrb[0].mxu0
        %v1485 = vadd.f32 0.0, %v1484
        %v1486 = vpop.f32.mrb[0].mxu0
        %1487 = vdwg.mxu0
        %1489 = vrot.lane.b32.xlu0 %v1151, 8
        %v1490 = vpop.permute.xlu0 %1489
        %1493 = vrot.lane.b32.xlu0 %v1318, 16
        %v1494 = vpop.permute.xlu0 %1493
        %1497 = vrot.lane.b32.xlu0 %v1485, 24
        %v1498 = vpop.permute.xlu0 %1497
        %v1500 = vsel %vm823, %v984, %v1490
        %vm1501 = vcmask 130048
        %v1502 = vsel %vm1501, %v1500, %v1494
        %vm1503 = vcmask 195584
        %v1504 = vsel %vm1503, %v1502, %v1498
        %v1505 = vpack.c.bf16 %v1504, %v1504
        %v1506 = vld [vmem:[%s8] sm:$0xf]
        %v1507 = vld [vmem:[%s8 + $0x4] sm:$0xf]
        %v1508 = vld [vmem:[%s8 + $0x8] sm:$0xf]
        %v1509 = vld [vmem:[%s8 + $0xc] sm:$0xf]
        %v1514 = vunpack.c.l.b16 %v1506
        %v1515 = vunpack.c.l.b16 %v1507
        %v1516 = vunpack.c.l.b16 %v1508
        %v1517 = vunpack.c.l.b16 %v1509
        %v1518 = vpack.c.b16 %v1515, %v1514
        %v1519 = vpack.c.b16 %v1517, %v1516
        %v1523 = vsel %vm724, %v1505, 0
        %1525 = vmatprep.subr.bf16.mxu0 0
        %1526 = vmatpush1.bf16.msra.mxu0 %v1518
        %1527 = vmatprep.subr.bf16.mxu0 0
        %1528 = vmatpush1.bf16.msra.mxu0 %v1519
        %1529 = vmatprep.subr.bf16.mxu0 0
        %1530 = vmatpush1.bf16.msra.mxu0 0
        %1531 = vmatprep.subr.bf16.mxu0 0
        %1532 = vmatpush1.bf16.msra.mxu0 0
        %1533 = vmatprep.subr.bf16.mxu0 0
        %1534 = vmatpush1.bf16.msra.mxu0 0
        %1535 = vmatprep.subr.bf16.mxu0 0
        %1536 = vmatpush1.bf16.msra.mxu0 0
        %1537 = vmatprep.subr.bf16.mxu0 0
        %1538 = vmatpush1.bf16.msra.mxu0 0
        %1539 = vmatprep.subr.bf16.mxu0 0
        %1540 = vmatpush1.bf16.msra.mxu0 0
        %1541 = vmatprep.subr.bf16.mxu0 0
        %1542 = vmatpush1.bf16.msra.mxu0 0
        %1543 = vmatprep.subr.bf16.mxu0 0
        %1544 = vmatpush1.bf16.msra.mxu0 0
        %1545 = vmatprep.subr.bf16.mxu0 0
        %1546 = vmatpush1.bf16.msra.mxu0 0
        %1547 = vmatprep.subr.bf16.mxu0 0
        %1548 = vmatpush1.bf16.msra.mxu0 0
        %1549 = vmatprep.subr.bf16.mxu0 0
        %1550 = vmatpush1.bf16.msra.mxu0 0
        %1551 = vmatprep.subr.bf16.mxu0 0
        %1552 = vmatpush1.bf16.msra.mxu0 0
        %1553 = vmatprep.subr.bf16.mxu0 0
        %1554 = vmatpush1.bf16.msra.mxu0 0
        %1555 = vmatprep.subr.bf16.mxu0 0
        %1556 = vmatpush1.bf16.msra.mxu0 0
        %1557 = vmatprep.mubr.bf16.mxu0 0
        %1558 = vmatmul.mubr.bf16.gmra.mrb[0].mxu0 %v1523
        %v1559 = vpop.f32.mrb[0].mxu0
        %v1560 = vadd.f32 0.0, %v1559
        %v1561 = vpop.f32.mrb[0].mxu0
        %v1562 = vpop.f32.mrb[0].mxu0
        %v1563 = vpop.f32.mrb[0].mxu0
        %1564 = vdwg.mxu0
        %v1565 = vadd.f32 %v705, %v1560
        %v1566 = vld [vmem:[%s9] sm:$0x1]
        %v1568 = vlaneseq
        %v1569 = vshrl.u32 %v1568, 7
        %v1570 = vsub.s32 0, %v1569
        %v1571 = vrot.slane %v1566, %v1570
        %v1573 = vadd.f32 %v1565, %v1571
        %v1574 = vld [vmem:[%s10] sm:$0x1]
        %v1575 = vld [vmem:[%s11] sm:$0x1]
        %v1576 = vsel %vm724, %v1573, 0.0
        %1577 = vadd.xlane.f32.xlu0 %v1576
        %v1578 = vpop.xlane.xlu0 %1577
        %v1579 = vmul.f32 %v1578, %v728
        %v1580 = vsub.f32 %v1573, %v1579
        %v1581 = vmul.f32 %v1580, %v1580
        %v1582 = vsel %vm724, %v1581, 0.0
        %1583 = vadd.xlane.f32.xlu0 %v1582
        %v1584 = vpop.xlane.xlu0 %1583
        %v1585 = vmul.f32 %v1584, %v728
        %v1586 = vadd.f32 %v1585, 1e-05
        %v1587 = vrsqrt.pop %v1586
        %v1588 = vmul.f32 %v1580, %v1587
        %v1590 = vlaneseq
        %v1591 = vshrl.u32 %v1590, 7
        %v1592 = vsub.s32 0, %v1591
        %v1593 = vrot.slane %v1574, %v1592
        %v1595 = vmul.f32 %v1588, %v1593
        %v1597 = vlaneseq
        %v1598 = vshrl.u32 %v1597, 7
        %v1599 = vsub.s32 0, %v1598
        %v1600 = vrot.slane %v1575, %v1599
        %v1602 = vadd.f32 %v1595, %v1600
        %v1603 = vpack.c.bf16 %v1602, %v1602
        %v1604 = vld [vmem:[%s12] sm:$0xf]
        %v1605 = vld [vmem:[%s12 + $0x4] sm:$0xf]
        %v1606 = vld [vmem:[%s12 + $0x8] sm:$0xf]
        %v1607 = vld [vmem:[%s12 + $0xc] sm:$0xf]
        %v1608 = vld [vmem:[%s13] sm:$0x1]
        %v1610 = vlaneseq
        %v1611 = vshrl.u32 %v1610, 7
        %v1612 = vsub.s32 0, %v1611
        %v1613 = vrot.slane %v1608, %v1612
        %v1619 = vunpack.c.l.b16 %v1604
        %v1620 = vunpack.c.l.b16 %v1605
        %v1621 = vunpack.c.l.b16 %v1606
        %v1622 = vunpack.c.l.b16 %v1607
        %v1623 = vpack.c.b16 %v1620, %v1619
        %v1624 = vpack.c.b16 %v1622, %v1621
        %v1628 = vsel %vm724, %v1603, 0
        %1630 = vmatprep.subr.bf16.mxu0 0
        %1631 = vmatpush1.bf16.msra.mxu0 %v1623
        %1632 = vmatprep.subr.bf16.mxu0 0
        %1633 = vmatpush1.bf16.msra.mxu0 %v1624
        %1634 = vmatprep.subr.bf16.mxu0 0
        %1635 = vmatpush1.bf16.msra.mxu0 0
        %1636 = vmatprep.subr.bf16.mxu0 0
        %1637 = vmatpush1.bf16.msra.mxu0 0
        %1638 = vmatprep.subr.bf16.mxu0 0
        %1639 = vmatpush1.bf16.msra.mxu0 0
        %1640 = vmatprep.subr.bf16.mxu0 0
        %1641 = vmatpush1.bf16.msra.mxu0 0
        %1642 = vmatprep.subr.bf16.mxu0 0
        %1643 = vmatpush1.bf16.msra.mxu0 0
        %1644 = vmatprep.subr.bf16.mxu0 0
        %1645 = vmatpush1.bf16.msra.mxu0 0
        %1646 = vmatprep.subr.bf16.mxu0 0
        %1647 = vmatpush1.bf16.msra.mxu0 0
        %1648 = vmatprep.subr.bf16.mxu0 0
        %1649 = vmatpush1.bf16.msra.mxu0 0
        %1650 = vmatprep.subr.bf16.mxu0 0
        %1651 = vmatpush1.bf16.msra.mxu0 0
        %1652 = vmatprep.subr.bf16.mxu0 0
        %1653 = vmatpush1.bf16.msra.mxu0 0
        %1654 = vmatprep.subr.bf16.mxu0 0
        %1655 = vmatpush1.bf16.msra.mxu0 0
        %1656 = vmatprep.subr.bf16.mxu0 0
        %1657 = vmatpush1.bf16.msra.mxu0 0
        %1658 = vmatprep.subr.bf16.mxu0 0
        %1659 = vmatpush1.bf16.msra.mxu0 0
        %1660 = vmatprep.subr.bf16.mxu0 0
        %1661 = vmatpush1.bf16.msra.mxu0 0
        %1662 = vmatprep.mubr.bf16.mxu0 0
        %1663 = vmatmul.mubr.bf16.gmra.mrb[0].mxu0 %v1628
        %v1664 = vpop.f32.mrb[0].mxu0
        %v1665 = vadd.f32 %v1613, %v1664
        %v1666 = vpop.f32.mrb[0].mxu0
        %v1667 = vpop.f32.mrb[0].mxu0
        %v1668 = vpop.f32.mrb[0].mxu0
        %1669 = vdwg.mxu0
        %v1670 = vmul.f32 %v1665, %v1665
        %v1671 = vmul.f32 %v1665, %v1670
        %v1672 = vmul.f32 %v1671, 0.044715
        %v1673 = vadd.f32 %v1665, %v1672
        %v1674 = vmul.f32 %v1673, 0.7978846
        %v1675 = vtanh.pop %v1674
        %v1676 = vadd.f32 %v1675, 1.0
        %v1677 = vmul.f32 %v1676, 0.5
        %v1678 = vmul.f32 %v1665, %v1677
        %v1679 = vpack.c.bf16 %v1678, %v1678
        %v1680 = vld [vmem:[%s14] sm:$0xf]
        %v1681 = vld [vmem:[%s14 + $0x4] sm:$0xf]
        %v1682 = vld [vmem:[%s14 + $0x8] sm:$0xf]
        %v1683 = vld [vmem:[%s14 + $0xc] sm:$0xf]
        %v1684 = vld [vmem:[%s14 + $0x10] sm:$0xf]
        %v1685 = vld [vmem:[%s14 + $0x14] sm:$0xf]
        %v1686 = vld [vmem:[%s14 + $0x18] sm:$0xf]
        %v1687 = vld [vmem:[%s14 + $0x1c] sm:$0xf]
        %v1688 = vld [vmem:[%s14 + $0x20] sm:$0xf]
        %v1689 = vld [vmem:[%s14 + $0x24] sm:$0xf]
        %v1690 = vld [vmem:[%s14 + $0x28] sm:$0xf]
        %v1691 = vld [vmem:[%s14 + $0x2c] sm:$0xf]
        %v1692 = vld [vmem:[%s14 + $0x30] sm:$0xf]
        %v1693 = vld [vmem:[%s14 + $0x34] sm:$0xf]
        %v1694 = vld [vmem:[%s14 + $0x38] sm:$0xf]
        %v1695 = vld [vmem:[%s14 + $0x3c] sm:$0xf]
        %v1712 = vunpack.c.l.b16 %v1680
        %v1713 = vunpack.c.l.b16 %v1681
        %v1714 = vunpack.c.l.b16 %v1682
        %v1715 = vunpack.c.l.b16 %v1683
        %v1716 = vunpack.c.l.b16 %v1684
        %v1717 = vunpack.c.l.b16 %v1685
        %v1718 = vunpack.c.l.b16 %v1686
        %v1719 = vunpack.c.l.b16 %v1687
        %v1720 = vunpack.c.l.b16 %v1688
        %v1721 = vunpack.c.l.b16 %v1689
        %v1722 = vunpack.c.l.b16 %v1690
        %v1723 = vunpack.c.l.b16 %v1691
        %v1724 = vunpack.c.l.b16 %v1692
        %v1725 = vunpack.c.l.b16 %v1693
        %v1726 = vunpack.c.l.b16 %v1694
        %v1727 = vunpack.c.l.b16 %v1695
        %v1728 = vpack.c.b16 %v1713, %v1712
        %v1729 = vpack.c.b16 %v1715, %v1714
        %v1730 = vpack.c.b16 %v1717, %v1716
        %v1731 = vpack.c.b16 %v1719, %v1718
        %v1732 = vpack.c.b16 %v1721, %v1720
        %v1733 = vpack.c.b16 %v1723, %v1722
        %v1734 = vpack.c.b16 %v1725, %v1724
        %v1735 = vpack.c.b16 %v1727, %v1726
        %1744 = vmatprep.subr.bf16.mxu0 0
        %1745 = vmatpush1.bf16.msra.mxu0 %v1728
        %1746 = vmatprep.subr.bf16.mxu0 0
        %1747 = vmatpush1.bf16.msra.mxu0 %v1729
        %1748 = vmatprep.subr.bf16.mxu0 0
        %1749 = vmatpush1.bf16.msra.mxu0 %v1730
        %1750 = vmatprep.subr.bf16.mxu0 0
        %1751 = vmatpush1.bf16.msra.mxu0 %v1731
        %1752 = vmatprep.subr.bf16.mxu0 0
        %1753 = vmatpush1.bf16.msra.mxu0 %v1732
        %1754 = vmatprep.subr.bf16.mxu0 0
        %1755 = vmatpush1.bf16.msra.mxu0 %v1733
        %1756 = vmatprep.subr.bf16.mxu0 0
        %1757 = vmatpush1.bf16.msra.mxu0 %v1734
        %1758 = vmatprep.subr.bf16.mxu0 0
        %1759 = vmatpush1.bf16.msra.mxu0 %v1735
        %1760 = vmatprep.subr.bf16.mxu0 0
        %1761 = vmatpush1.bf16.msra.mxu0 0
        %1762 = vmatprep.subr.bf16.mxu0 0
        %1763 = vmatpush1.bf16.msra.mxu0 0
        %1764 = vmatprep.subr.bf16.mxu0 0
        %1765 = vmatpush1.bf16.msra.mxu0 0
        %1766 = vmatprep.subr.bf16.mxu0 0
        %1767 = vmatpush1.bf16.msra.mxu0 0
        %1768 = vmatprep.subr.bf16.mxu0 0
        %1769 = vmatpush1.bf16.msra.mxu0 0
        %1770 = vmatprep.subr.bf16.mxu0 0
        %1771 = vmatpush1.bf16.msra.mxu0 0
        %1772 = vmatprep.subr.bf16.mxu0 0
        %1773 = vmatpush1.bf16.msra.mxu0 0
        %1774 = vmatprep.subr.bf16.mxu0 0
        %1775 = vmatpush1.bf16.msra.mxu0 0
        %1776 = vmatprep.mubr.bf16.mxu0 0
        %1777 = vmatmul.mubr.bf16.gmra.mrb[0].mxu0 %v1679
        %v1778 = vpop.f32.mrb[0].mxu0
        %v1779 = vadd.f32 0.0, %v1778
        %v1780 = vpop.f32.mrb[0].mxu0
        %v1781 = vpop.f32.mrb[0].mxu0
        %v1782 = vpop.f32.mrb[0].mxu0
        %1783 = vdwg.mxu0
        %v1784 = vadd.f32 %v1573, %v1779
        %v1785 = vld [vmem:[%s15] sm:$0x1]
        %v1787 = vlaneseq
        %v1788 = vshrl.u32 %v1787, 7
        %v1789 = vsub.s32 0, %v1788
        %v1790 = vrot.slane %v1785, %v1789
        %v1792 = vadd.f32 %v1784, %v1790
        %s1793 = scalar_lea.vmem %s4, 1
        %v1794 = vld [vmem:[%s1793] sm:$0x1]
        %s1795 = scalar_lea.vmem %s5, 1
        %v1796 = vld [vmem:[%s1795] sm:$0x1]
        %v1797 = vsel %vm724, %v1792, 0.0
        %1798 = vadd.xlane.f32.xlu0 %v1797
        %v1799 = vpop.xlane.xlu0 %1798
        %v1800 = vmul.f32 %v1799, %v728
        %v1801 = vsub.f32 %v1792, %v1800
        %v1802 = vmul.f32 %v1801, %v1801
        %v1803 = vsel %vm724, %v1802, 0.0
        %1804 = vadd.xlane.f32.xlu0 %v1803
        %v1805 = vpop.xlane.xlu0 %1804
        %v1806 = vmul.f32 %v1805, %v728
        %v1807 = vadd.f32 %v1806, 1e-05
        %v1808 = vrsqrt.pop %v1807
        %v1809 = vmul.f32 %v1801, %v1808
        %v1811 = vlaneseq
        %v1812 = vshrl.u32 %v1811, 7
        %v1813 = vsub.s32 0, %v1812
        %v1814 = vrot.slane %v1794, %v1813
        %v1816 = vmul.f32 %v1809, %v1814
        %v1818 = vlaneseq
        %v1819 = vshrl.u32 %v1818, 7
        %v1820 = vsub.s32 0, %v1819
        %v1821 = vrot.slane %v1796, %v1820
        %v1823 = vadd.f32 %v1816, %v1821
        %v1824 = vpack.c.bf16 %v1823, %v1823
        %s1825 = scalar_lea.vmem %s6, 16
        %v1826 = vld [vmem:[%s1825] sm:$0xf]
        %v1827 = vld [vmem:[%s1825 + $0x4] sm:$0xf]
        %v1828 = vld [vmem:[%s1825 + $0x8] sm:$0xf]
        %v1829 = vld [vmem:[%s1825 + $0xc] sm:$0xf]
        %s1830 = scalar_lea.vmem %s7, 1
        %v1831 = vld [vmem:[%s1830] sm:$0x1]
        %v1833 = vlaneseq
        %v1834 = vshrl.u32 %v1833, 7
        %v1835 = vsub.s32 0, %v1834
        %v1836 = vrot.slane %v1831, %v1835
        %v1842 = vunpack.c.l.b16 %v1826
        %v1843 = vunpack.c.l.b16 %v1827
        %v1844 = vunpack.c.l.b16 %v1828
        %v1845 = vunpack.c.l.b16 %v1829
        %v1846 = vpack.c.b16 %v1843, %v1842
        %v1847 = vpack.c.b16 %v1845, %v1844
        %v1851 = vsel %vm724, %v1824, 0
        %1853 = vmatprep.subr.bf16.mxu0 0
        %1854 = vmatpush1.bf16.msra.mxu0 %v1846
        %1855 = vmatprep.subr.bf16.mxu0 0
        %1856 = vmatpush1.bf16.msra.mxu0 %v1847
        %1857 = vmatprep.subr.bf16.mxu0 0
        %1858 = vmatpush1.bf16.msra.mxu0 0
        %1859 = vmatprep.subr.bf16.mxu0 0
        %1860 = vmatpush1.bf16.msra.mxu0 0
        %1861 = vmatprep.subr.bf16.mxu0 0
        %1862 = vmatpush1.bf16.msra.mxu0 0
        %1863 = vmatprep.subr.bf16.mxu0 0
        %1864 = vmatpush1.bf16.msra.mxu0 0
        %1865 = vmatprep.subr.bf16.mxu0 0
        %1866 = vmatpush1.bf16.msra.mxu0 0
        %1867 = vmatprep.subr.bf16.mxu0 0
        %1868 = vmatpush1.bf16.msra.mxu0 0
        %1869 = vmatprep.subr.bf16.mxu0 0
        %1870 = vmatpush1.bf16.msra.mxu0 0
        %1871 = vmatprep.subr.bf16.mxu0 0
        %1872 = vmatpush1.bf16.msra.mxu0 0
        %1873 = vmatprep.subr.bf16.mxu0 0
        %1874 = vmatpush1.bf16.msra.mxu0 0
        %1875 = vmatprep.subr.bf16.mxu0 0
        %1876 = vmatpush1.bf16.msra.mxu0 0
        %1877 = vmatprep.subr.bf16.mxu0 0
        %1878 = vmatpush1.bf16.msra.mxu0 0
        %1879 = vmatprep.subr.bf16.mxu0 0
        %1880 = vmatpush1.bf16.msra.mxu0 0
        %1881 = vmatprep.subr.bf16.mxu0 0
        %1882 = vmatpush1.bf16.msra.mxu0 0
        %1883 = vmatprep.subr.bf16.mxu0 0
        %1884 = vmatpush1.bf16.msra.mxu0 0
        %1885 = vmatprep.mubr.bf16.mxu0 0
        %1886 = vmatmul.mubr.bf16.gmra.mrb[0].mxu0 %v1851
        %v1887 = vpop.f32.mrb[0].mxu0
        %v1888 = vadd.f32 %v1836, %v1887
        %v1889 = vpop.f32.mrb[0].mxu0
        %v1890 = vpop.f32.mrb[0].mxu0
        %v1891 = vpop.f32.mrb[0].mxu0
        %1892 = vdwg.mxu0
        %1894 = vrot.lane.b32.xlu0 %v1888, 96
        %v1895 = vpop.permute.xlu0 %1894
        %v1896 = vsel %vm823, %v1888, 0
        %v1898 = vsel %vm823, %v1895, 0
        %1900 = vmatprep.subr.mxu0 0.0
        %1901 = vmatpush1.xpose.msra.mxu0 %v1898
        %1902 = vmatprep.subr.mxu0 0.0
        %1903 = vmatpush1.xpose.msra.mxu0 0.0
        %1904 = vmatprep.subr.mxu0 0.0
        %1905 = vmatpush1.xpose.msra.mxu0 0.0
        %1906 = vmatprep.subr.mxu0 0.0
        %1907 = vmatpush1.xpose.msra.mxu0 0.0
        %1908 = vmatprep.subr.mxu0 0.0
        %1909 = vmatpush1.xpose.msra.mxu0 0.0
        %1910 = vmatprep.subr.mxu0 0.0
        %1911 = vmatpush1.xpose.msra.mxu0 0.0
        %1912 = vmatprep.subr.mxu0 0.0
        %1913 = vmatpush1.xpose.msra.mxu0 0.0
        %1914 = vmatprep.subr.mxu0 0.0
        %1915 = vmatpush1.xpose.msra.mxu0 0.0
        %1916 = vmatprep.subr.mxu0 0.0
        %1917 = vmatpush1.xpose.msra.mxu0 0.0
        %1918 = vmatprep.subr.mxu0 0.0
        %1919 = vmatpush1.xpose.msra.mxu0 0.0
        %1920 = vmatprep.subr.mxu0 0.0
        %1921 = vmatpush1.xpose.msra.mxu0 0.0
        %1922 = vmatprep.subr.mxu0 0.0
        %1923 = vmatpush1.xpose.msra.mxu0 0.0
        %1924 = vmatprep.subr.mxu0 0.0
        %1925 = vmatpush1.xpose.msra.mxu0 0.0
        %1926 = vmatprep.subr.mxu0 0.0
        %1927 = vmatpush1.xpose.msra.mxu0 0.0
        %1928 = vmatprep.subr.mxu0 0.0
        %1929 = vmatpush1.xpose.msra.mxu0 0.0
        %1930 = vmatprep.subr.mxu0 0.0
        %1931 = vmatpush1.xpose.msra.mxu0 0.0
        %1932 = vmatprep.subr.mxu0 0.0
        %1933 = vmatpush1.xpose.msra.mxu0 0.0
        %1934 = vmatprep.subr.mxu0 0.0
        %1935 = vmatpush1.xpose.msra.mxu0 0.0
        %1936 = vmatprep.subr.mxu0 0.0
        %1937 = vmatpush1.xpose.msra.mxu0 0.0
        %1938 = vmatprep.subr.mxu0 0.0
        %1939 = vmatpush1.xpose.msra.mxu0 0.0
        %1940 = vmatprep.subr.mxu0 0.0
        %1941 = vmatpush1.xpose.msra.mxu0 0.0
        %1942 = vmatprep.subr.mxu0 0.0
        %1943 = vmatpush1.xpose.msra.mxu0 0.0
        %1944 = vmatprep.subr.mxu0 0.0
        %1945 = vmatpush1.xpose.msra.mxu0 0.0
        %1946 = vmatprep.subr.mxu0 0.0
        %1947 = vmatpush1.xpose.msra.mxu0 0.0
        %1948 = vmatprep.subr.mxu0 0.0
        %1949 = vmatpush1.xpose.msra.mxu0 0.0
        %1950 = vmatprep.subr.mxu0 0.0
        %1951 = vmatpush1.xpose.msra.mxu0 0.0
        %1952 = vmatprep.subr.mxu0 0.0
        %1953 = vmatpush1.xpose.msra.mxu0 0.0
        %1954 = vmatprep.subr.mxu0 0.0
        %1955 = vmatpush1.xpose.msra.mxu0 0.0
        %1956 = vmatprep.subr.mxu0 0.0
        %1957 = vmatpush1.xpose.msra.mxu0 0.0
        %1958 = vmatprep.subr.mxu0 0.0
        %1959 = vmatpush1.xpose.msra.mxu0 0.0
        %1960 = vmatprep.subr.mxu0 0.0
        %1961 = vmatpush1.xpose.msra.mxu0 0.0
        %1962 = vmatprep.subr.mxu0 0.0
        %1963 = vmatpush1.xpose.msra.mxu0 0.0
        %1964 = vmatprep.mubr.f32.mxu0 0.0
        %1965 = vmatmul.mubr.f32.gmra.mrb[0].mxu0 %v1896
        %v1966 = vpop.f32.mrb[0].mxu0
        %v1967 = vadd.f32 0.0, %v1966
        %v1968 = vpop.f32.mrb[0].mxu0
        %1969 = vdwg.mxu0
        %v1970 = vmul.f32 %v1967, 0.35355338
        %v1971 = vsel %vm721, %v1970, -1e+09
        %v1972 = vsel %vm823, %v1971, -inf
        %1973 = vmax.xlane.f32.xlu0 %v1972
        %v1974 = vpop.xlane.xlu0 %1973
        %v1975 = vsub.f32 %v1971, %v1974
        %v1976 = vmul.f32 %v1975, 1.442695
        %v1977 = vpow.pop %v1976
        %v1978 = vsel %vm823, %v1977, 0.0
        %1979 = vadd.xlane.f32.xlu0 %v1978
        %v1980 = vpop.xlane.xlu0 %1979
        %v1981 = vrcp.pop %v1980
        %v1982 = vmul.f32 %v1977, %v1981
        %1983 = vrot.lane.b32.xlu0 %v1888, 64
        %v1984 = vpop.permute.xlu0 %1983
        %v1987 = vsel %vm823, %v1982, 0
        %1989 = vmatprep.subr.mxu0 0.0
        %1990 = vmatpush1.msra.mxu0 %v1984
        %1991 = vmatprep.subr.mxu0 0.0
        %1992 = vmatpush1.msra.mxu0 0.0
        %1993 = vmatprep.subr.mxu0 0.0
        %1994 = vmatpush1.msra.mxu0 0.0
        %1995 = vmatprep.subr.mxu0 0.0
        %1996 = vmatpush1.msra.mxu0 0.0
        %1997 = vmatprep.subr.mxu0 0.0
        %1998 = vmatpush1.msra.mxu0 0.0
        %1999 = vmatprep.subr.mxu0 0.0
        %2000 = vmatpush1.msra.mxu0 0.0
        %2001 = vmatprep.subr.mxu0 0.0
        %2002 = vmatpush1.msra.mxu0 0.0
        %2003 = vmatprep.subr.mxu0 0.0
        %2004 = vmatpush1.msra.mxu0 0.0
        %2005 = vmatprep.subr.mxu0 0.0
        %2006 = vmatpush1.msra.mxu0 0.0
        %2007 = vmatprep.subr.mxu0 0.0
        %2008 = vmatpush1.msra.mxu0 0.0
        %2009 = vmatprep.subr.mxu0 0.0
        %2010 = vmatpush1.msra.mxu0 0.0
        %2011 = vmatprep.subr.mxu0 0.0
        %2012 = vmatpush1.msra.mxu0 0.0
        %2013 = vmatprep.subr.mxu0 0.0
        %2014 = vmatpush1.msra.mxu0 0.0
        %2015 = vmatprep.subr.mxu0 0.0
        %2016 = vmatpush1.msra.mxu0 0.0
        %2017 = vmatprep.subr.mxu0 0.0
        %2018 = vmatpush1.msra.mxu0 0.0
        %2019 = vmatprep.subr.mxu0 0.0
        %2020 = vmatpush1.msra.mxu0 0.0
        %2021 = vmatprep.subr.mxu0 0.0
        %2022 = vmatpush1.msra.mxu0 0.0
        %2023 = vmatprep.subr.mxu0 0.0
        %2024 = vmatpush1.msra.mxu0 0.0
        %2025 = vmatprep.subr.mxu0 0.0
        %2026 = vmatpush1.msra.mxu0 0.0
        %2027 = vmatprep.subr.mxu0 0.0
        %2028 = vmatpush1.msra.mxu0 0.0
        %2029 = vmatprep.subr.mxu0 0.0
        %2030 = vmatpush1.msra.mxu0 0.0
        %2031 = vmatprep.subr.mxu0 0.0
        %2032 = vmatpush1.msra.mxu0 0.0
        %2033 = vmatprep.subr.mxu0 0.0
        %2034 = vmatpush1.msra.mxu0 0.0
        %2035 = vmatprep.subr.mxu0 0.0
        %2036 = vmatpush1.msra.mxu0 0.0
        %2037 = vmatprep.subr.mxu0 0.0
        %2038 = vmatpush1.msra.mxu0 0.0
        %2039 = vmatprep.subr.mxu0 0.0
        %2040 = vmatpush1.msra.mxu0 0.0
        %2041 = vmatprep.subr.mxu0 0.0
        %2042 = vmatpush1.msra.mxu0 0.0
        %2043 = vmatprep.subr.mxu0 0.0
        %2044 = vmatpush1.msra.mxu0 0.0
        %2045 = vmatprep.subr.mxu0 0.0
        %2046 = vmatpush1.msra.mxu0 0.0
        %2047 = vmatprep.subr.mxu0 0.0
        %2048 = vmatpush1.msra.mxu0 0.0
        %2049 = vmatprep.subr.mxu0 0.0
        %2050 = vmatpush1.msra.mxu0 0.0
        %2051 = vmatprep.subr.mxu0 0.0
        %2052 = vmatpush1.msra.mxu0 0.0
        %2053 = vmatprep.mubr.f32.mxu0 0.0
        %2054 = vmatmul.mubr.f32.gmra.mrb[0].mxu0 %v1987
        %v2055 = vpop.f32.mrb[0].mxu0
        %v2056 = vadd.f32 0.0, %v2055
        %v2057 = vpop.f32.mrb[0].mxu0
        %2058 = vdwg.mxu0
        %2059 = vrot.lane.b32.xlu0 %v1888, 120
        %v2060 = vpop.permute.xlu0 %2059
        %2061 = vrot.lane.b32.xlu0 %v1888, 88
        %v2062 = vpop.permute.xlu0 %2061
        %v2063 = vsel %vm823, %v2060, 0
        %v2065 = vsel %vm823, %v2062, 0
        %2067 = vmatprep.subr.mxu0 0.0
        %2068 = vmatpush1.xpose.msra.mxu0 %v2065
        %2069 = vmatprep.subr.mxu0 0.0
        %2070 = vmatpush1.xpose.msra.mxu0 0.0
        %2071 = vmatprep.subr.mxu0 0.0
        %2072 = vmatpush1.xpose.msra.mxu0 0.0
        %2073 = vmatprep.subr.mxu0 0.0
        %2074 = vmatpush1.xpose.msra.mxu0 0.0
        %2075 = vmatprep.subr.mxu0 0.0
        %2076 = vmatpush1.xpose.msra.mxu0 0.0
        %2077 = vmatprep.subr.mxu0 0.0
        %2078 = vmatpush1.xpose.msra.mxu0 0.0
        %2079 = vmatprep.subr.mxu0 0.0
        %2080 = vmatpush1.xpose.msra.mxu0 0.0
        %2081 = vmatprep.subr.mxu0 0.0
        %2082 = vmatpush1.xpose.msra.mxu0 0.0
        %2083 = vmatprep.subr.mxu0 0.0
        %2084 = vmatpush1.xpose.msra.mxu0 0.0
        %2085 = vmatprep.subr.mxu0 0.0
        %2086 = vmatpush1.xpose.msra.mxu0 0.0
        %2087 = vmatprep.subr.mxu0 0.0
        %2088 = vmatpush1.xpose.msra.mxu0 0.0
        %2089 = vmatprep.subr.mxu0 0.0
        %2090 = vmatpush1.xpose.msra.mxu0 0.0
        %2091 = vmatprep.subr.mxu0 0.0
        %2092 = vmatpush1.xpose.msra.mxu0 0.0
        %2093 = vmatprep.subr.mxu0 0.0
        %2094 = vmatpush1.xpose.msra.mxu0 0.0
        %2095 = vmatprep.subr.mxu0 0.0
        %2096 = vmatpush1.xpose.msra.mxu0 0.0
        %2097 = vmatprep.subr.mxu0 0.0
        %2098 = vmatpush1.xpose.msra.mxu0 0.0
        %2099 = vmatprep.subr.mxu0 0.0
        %2100 = vmatpush1.xpose.msra.mxu0 0.0
        %2101 = vmatprep.subr.mxu0 0.0
        %2102 = vmatpush1.xpose.msra.mxu0 0.0
        %2103 = vmatprep.subr.mxu0 0.0
        %2104 = vmatpush1.xpose.msra.mxu0 0.0
        %2105 = vmatprep.subr.mxu0 0.0
        %2106 = vmatpush1.xpose.msra.mxu0 0.0
        %2107 = vmatprep.subr.mxu0 0.0
        %2108 = vmatpush1.xpose.msra.mxu0 0.0
        %2109 = vmatprep.subr.mxu0 0.0
        %2110 = vmatpush1.xpose.msra.mxu0 0.0
        %2111 = vmatprep.subr.mxu0 0.0
        %2112 = vmatpush1.xpose.msra.mxu0 0.0
        %2113 = vmatprep.subr.mxu0 0.0
        %2114 = vmatpush1.xpose.msra.mxu0 0.0
        %2115 = vmatprep.subr.mxu0 0.0
        %2116 = vmatpush1.xpose.msra.mxu0 0.0
        %2117 = vmatprep.subr.mxu0 0.0
        %2118 = vmatpush1.xpose.msra.mxu0 0.0
        %2119 = vmatprep.subr.mxu0 0.0
        %2120 = vmatpush1.xpose.msra.mxu0 0.0
        %2121 = vmatprep.subr.mxu0 0.0
        %2122 = vmatpush1.xpose.msra.mxu0 0.0
        %2123 = vmatprep.subr.mxu0 0.0
        %2124 = vmatpush1.xpose.msra.mxu0 0.0
        %2125 = vmatprep.subr.mxu0 0.0
        %2126 = vmatpush1.xpose.msra.mxu0 0.0
        %2127 = vmatprep.subr.mxu0 0.0
        %2128 = vmatpush1.xpose.msra.mxu0 0.0
        %2129 = vmatprep.subr.mxu0 0.0
        %2130 = vmatpush1.xpose.msra.mxu0 0.0
        %2131 = vmatprep.mubr.f32.mxu0 0.0
        %2132 = vmatmul.mubr.f32.gmra.mrb[0].mxu0 %v2063
        %v2133 = vpop.f32.mrb[0].mxu0
        %v2134 = vadd.f32 0.0, %v2133
        %v2135 = vpop.f32.mrb[0].mxu0
        %2136 = vdwg.mxu0
        %v2137 = vmul.f32 %v2134, 0.35355338
        %v2138 = vsel %vm721, %v2137, -1e+09
        %v2139 = vsel %vm823, %v2138, -inf
        %2140 = vmax.xlane.f32.xlu0 %v2139
        %v2141 = vpop.xlane.xlu0 %2140
        %v2142 = vsub.f32 %v2138, %v2141
        %v2143 = vmul.f32 %v2142, 1.442695
        %v2144 = vpow.pop %v2143
        %v2145 = vsel %vm823, %v2144, 0.0
        %2146 = vadd.xlane.f32.xlu0 %v2145
        %v2147 = vpop.xlane.xlu0 %2146
        %v2148 = vrcp.pop %v2147
        %v2149 = vmul.f32 %v2144, %v2148
        %2150 = vrot.lane.b32.xlu0 %v1888, 56
        %v2151 = vpop.permute.xlu0 %2150
        %v2154 = vsel %vm823, %v2149, 0
        %2156 = vmatprep.subr.mxu0 0.0
        %2157 = vmatpush1.msra.mxu0 %v2151
        %2158 = vmatprep.subr.mxu0 0.0
        %2159 = vmatpush1.msra.mxu0 0.0
        %2160 = vmatprep.subr.mxu0 0.0
        %2161 = vmatpush1.msra.mxu0 0.0
        %2162 = vmatprep.subr.mxu0 0.0
        %2163 = vmatpush1.msra.mxu0 0.0
        %2164 = vmatprep.subr.mxu0 0.0
        %2165 = vmatpush1.msra.mxu0 0.0
        %2166 = vmatprep.subr.mxu0 0.0
        %2167 = vmatpush1.msra.mxu0 0.0
        %2168 = vmatprep.subr.mxu0 0.0
        %2169 = vmatpush1.msra.mxu0 0.0
        %2170 = vmatprep.subr.mxu0 0.0
        %2171 = vmatpush1.msra.mxu0 0.0
        %2172 = vmatprep.subr.mxu0 0.0
        %2173 = vmatpush1.msra.mxu0 0.0
        %2174 = vmatprep.subr.mxu0 0.0
        %2175 = vmatpush1.msra.mxu0 0.0
        %2176 = vmatprep.subr.mxu0 0.0
        %2177 = vmatpush1.msra.mxu0 0.0
        %2178 = vmatprep.subr.mxu0 0.0
        %2179 = vmatpush1.msra.mxu0 0.0
        %2180 = vmatprep.subr.mxu0 0.0
        %2181 = vmatpush1.msra.mxu0 0.0
        %2182 = vmatprep.subr.mxu0 0.0
        %2183 = vmatpush1.msra.mxu0 0.0
        %2184 = vmatprep.subr.mxu0 0.0
        %2185 = vmatpush1.msra.mxu0 0.0
        %2186 = vmatprep.subr.mxu0 0.0
        %2187 = vmatpush1.msra.mxu0 0.0
        %2188 = vmatprep.subr.mxu0 0.0
        %2189 = vmatpush1.msra.mxu0 0.0
        %2190 = vmatprep.subr.mxu0 0.0
        %2191 = vmatpush1.msra.mxu0 0.0
        %2192 = vmatprep.subr.mxu0 0.0
        %2193 = vmatpush1.msra.mxu0 0.0
        %2194 = vmatprep.subr.mxu0 0.0
        %2195 = vmatpush1.msra.mxu0 0.0
        %2196 = vmatprep.subr.mxu0 0.0
        %2197 = vmatpush1.msra.mxu0 0.0
        %2198 = vmatprep.subr.mxu0 0.0
        %2199 = vmatpush1.msra.mxu0 0.0
        %2200 = vmatprep.subr.mxu0 0.0
        %2201 = vmatpush1.msra.mxu0 0.0
        %2202 = vmatprep.subr.mxu0 0.0
        %2203 = vmatpush1.msra.mxu0 0.0
        %2204 = vmatprep.subr.mxu0 0.0
        %2205 = vmatpush1.msra.mxu0 0.0
        %2206 = vmatprep.subr.mxu0 0.0
        %2207 = vmatpush1.msra.mxu0 0.0
        %2208 = vmatprep.subr.mxu0 0.0
        %2209 = vmatpush1.msra.mxu0 0.0
        %2210 = vmatprep.subr.mxu0 0.0
        %2211 = vmatpush1.msra.mxu0 0.0
        %2212 = vmatprep.subr.mxu0 0.0
        %2213 = vmatpush1.msra.mxu0 0.0
        %2214 = vmatprep.subr.mxu0 0.0
        %2215 = vmatpush1.msra.mxu0 0.0
        %2216 = vmatprep.subr.mxu0 0.0
        %2217 = vmatpush1.msra.mxu0 0.0
        %2218 = vmatprep.subr.mxu0 0.0
        %2219 = vmatpush1.msra.mxu0 0.0
        %2220 = vmatprep.mubr.f32.mxu0 0.0
        %2221 = vmatmul.mubr.f32.gmra.mrb[0].mxu0 %v2154
        %v2222 = vpop.f32.mrb[0].mxu0
        %v2223 = vadd.f32 0.0, %v2222
        %v2224 = vpop.f32.mrb[0].mxu0
        %2225 = vdwg.mxu0
        %2226 = vrot.lane.b32.xlu0 %v1888, 112
        %v2227 = vpop.permute.xlu0 %2226
        %2228 = vrot.lane.b32.xlu0 %v1888, 80
        %v2229 = vpop.permute.xlu0 %2228
        %v2230 = vsel %vm823, %v2227, 0
        %v2232 = vsel %vm823, %v2229, 0
        %2234 = vmatprep.subr.mxu0 0.0
        %2235 = vmatpush1.xpose.msra.mxu0 %v2232
        %2236 = vmatprep.subr.mxu0 0.0
        %2237 = vmatpush1.xpose.msra.mxu0 0.0
        %2238 = vmatprep.subr.mxu0 0.0
        %2239 = vmatpush1.xpose.msra.mxu0 0.0
        %2240 = vmatprep.subr.mxu0 0.0
        %2241 = vmatpush1.xpose.msra.mxu0 0.0
        %2242 = vmatprep.subr.mxu0 0.0
        %2243 = vmatpush1.xpose.msra.mxu0 0.0
        %2244 = vmatprep.subr.mxu0 0.0
        %2245 = vmatpush1.xpose.msra.mxu0 0.0
        %2246 = vmatprep.subr.mxu0 0.0
        %2247 = vmatpush1.xpose.msra.mxu0 0.0
        %2248 = vmatprep.subr.mxu0 0.0
        %2249 = vmatpush1.xpose.msra.mxu0 0.0
        %2250 = vmatprep.subr.mxu0 0.0
        %2251 = vmatpush1.xpose.msra.mxu0 0.0
        %2252 = vmatprep.subr.mxu0 0.0
        %2253 = vmatpush1.xpose.msra.mxu0 0.0
        %2254 = vmatprep.subr.mxu0 0.0
        %2255 = vmatpush1.xpose.msra.mxu0 0.0
        %2256 = vmatprep.subr.mxu0 0.0
        %2257 = vmatpush1.xpose.msra.mxu0 0.0
        %2258 = vmatprep.subr.mxu0 0.0
        %2259 = vmatpush1.xpose.msra.mxu0 0.0
        %2260 = vmatprep.subr.mxu0 0.0
        %2261 = vmatpush1.xpose.msra.mxu0 0.0
        %2262 = vmatprep.subr.mxu0 0.0
        %2263 = vmatpush1.xpose.msra.mxu0 0.0
        %2264 = vmatprep.subr.mxu0 0.0
        %2265 = vmatpush1.xpose.msra.mxu0 0.0
        %2266 = vmatprep.subr.mxu0 0.0
        %2267 = vmatpush1.xpose.msra.mxu0 0.0
        %2268 = vmatprep.subr.mxu0 0.0
        %2269 = vmatpush1.xpose.msra.mxu0 0.0
        %2270 = vmatprep.subr.mxu0 0.0
        %2271 = vmatpush1.xpose.msra.mxu0 0.0
        %2272 = vmatprep.subr.mxu0 0.0
        %2273 = vmatpush1.xpose.msra.mxu0 0.0
        %2274 = vmatprep.subr.mxu0 0.0
        %2275 = vmatpush1.xpose.msra.mxu0 0.0
        %2276 = vmatprep.subr.mxu0 0.0
        %2277 = vmatpush1.xpose.msra.mxu0 0.0
        %2278 = vmatprep.subr.mxu0 0.0
        %2279 = vmatpush1.xpose.msra.mxu0 0.0
        %2280 = vmatprep.subr.mxu0 0.0
        %2281 = vmatpush1.xpose.msra.mxu0 0.0
        %2282 = vmatprep.subr.mxu0 0.0
        %2283 = vmatpush1.xpose.msra.mxu0 0.0
        %2284 = vmatprep.subr.mxu0 0.0
        %2285 = vmatpush1.xpose.msra.mxu0 0.0
        %2286 = vmatprep.subr.mxu0 0.0
        %2287 = vmatpush1.xpose.msra.mxu0 0.0
        %2288 = vmatprep.subr.mxu0 0.0
        %2289 = vmatpush1.xpose.msra.mxu0 0.0
        %2290 = vmatprep.subr.mxu0 0.0
        %2291 = vmatpush1.xpose.msra.mxu0 0.0
        %2292 = vmatprep.subr.mxu0 0.0
        %2293 = vmatpush1.xpose.msra.mxu0 0.0
        %2294 = vmatprep.subr.mxu0 0.0
        %2295 = vmatpush1.xpose.msra.mxu0 0.0
        %2296 = vmatprep.subr.mxu0 0.0
        %2297 = vmatpush1.xpose.msra.mxu0 0.0
        %2298 = vmatprep.mubr.f32.mxu0 0.0
        %2299 = vmatmul.mubr.f32.gmra.mrb[0].mxu0 %v2230
        %v2300 = vpop.f32.mrb[0].mxu0
        %v2301 = vadd.f32 0.0, %v2300
        %v2302 = vpop.f32.mrb[0].mxu0
        %2303 = vdwg.mxu0
        %v2304 = vmul.f32 %v2301, 0.35355338
        %v2305 = vsel %vm721, %v2304, -1e+09
        %v2306 = vsel %vm823, %v2305, -inf
        %2307 = vmax.xlane.f32.xlu0 %v2306
        %v2308 = vpop.xlane.xlu0 %2307
        %v2309 = vsub.f32 %v2305, %v2308
        %v2310 = vmul.f32 %v2309, 1.442695
        %v2311 = vpow.pop %v2310
        %v2312 = vsel %vm823, %v2311, 0.0
        %2313 = vadd.xlane.f32.xlu0 %v2312
        %v2314 = vpop.xlane.xlu0 %2313
        %v2315 = vrcp.pop %v2314
        %v2316 = vmul.f32 %v2311, %v2315
        %2317 = vrot.lane.b32.xlu0 %v1888, 48
        %v2318 = vpop.permute.xlu0 %2317
        %v2321 = vsel %vm823, %v2316, 0
        %2323 = vmatprep.subr.mxu0 0.0
        %2324 = vmatpush1.msra.mxu0 %v2318
        %2325 = vmatprep.subr.mxu0 0.0
        %2326 = vmatpush1.msra.mxu0 0.0
        %2327 = vmatprep.subr.mxu0 0.0
        %2328 = vmatpush1.msra.mxu0 0.0
        %2329 = vmatprep.subr.mxu0 0.0
        %2330 = vmatpush1.msra.mxu0 0.0
        %2331 = vmatprep.subr.mxu0 0.0
        %2332 = vmatpush1.msra.mxu0 0.0
        %2333 = vmatprep.subr.mxu0 0.0
        %2334 = vmatpush1.msra.mxu0 0.0
        %2335 = vmatprep.subr.mxu0 0.0
        %2336 = vmatpush1.msra.mxu0 0.0
        %2337 = vmatprep.subr.mxu0 0.0
        %2338 = vmatpush1.msra.mxu0 0.0
        %2339 = vmatprep.subr.mxu0 0.0
        %2340 = vmatpush1.msra.mxu0 0.0
        %2341 = vmatprep.subr.mxu0 0.0
        %2342 = vmatpush1.msra.mxu0 0.0
        %2343 = vmatprep.subr.mxu0 0.0
        %2344 = vmatpush1.msra.mxu0 0.0
        %2345 = vmatprep.subr.mxu0 0.0
        %2346 = vmatpush1.msra.mxu0 0.0
        %2347 = vmatprep.subr.mxu0 0.0
        %2348 = vmatpush1.msra.mxu0 0.0
        %2349 = vmatprep.subr.mxu0 0.0
        %2350 = vmatpush1.msra.mxu0 0.0
        %2351 = vmatprep.subr.mxu0 0.0
        %2352 = vmatpush1.msra.mxu0 0.0
        %2353 = vmatprep.subr.mxu0 0.0
        %2354 = vmatpush1.msra.mxu0 0.0
        %2355 = vmatprep.subr.mxu0 0.0
        %2356 = vmatpush1.msra.mxu0 0.0
        %2357 = vmatprep.subr.mxu0 0.0
        %2358 = vmatpush1.msra.mxu0 0.0
        %2359 = vmatprep.subr.mxu0 0.0
        %2360 = vmatpush1.msra.mxu0 0.0
        %2361 = vmatprep.subr.mxu0 0.0
        %2362 = vmatpush1.msra.mxu0 0.0
        %2363 = vmatprep.subr.mxu0 0.0
        %2364 = vmatpush1.msra.mxu0 0.0
        %2365 = vmatprep.subr.mxu0 0.0
        %2366 = vmatpush1.msra.mxu0 0.0
        %2367 = vmatprep.subr.mxu0 0.0
        %2368 = vmatpush1.msra.mxu0 0.0
        %2369 = vmatprep.subr.mxu0 0.0
        %2370 = vmatpush1.msra.mxu0 0.0
        %2371 = vmatprep.subr.mxu0 0.0
        %2372 = vmatpush1.msra.mxu0 0.0
        %2373 = vmatprep.subr.mxu0 0.0
        %2374 = vmatpush1.msra.mxu0 0.0
        %2375 = vmatprep.subr.mxu0 0.0
        %2376 = vmatpush1.msra.mxu0 0.0
        %2377 = vmatprep.subr.mxu0 0.0
        %2378 = vmatpush1.msra.mxu0 0.0
        %2379 = vmatprep.subr.mxu0 0.0
        %2380 = vmatpush1.msra.mxu0 0.0
        %2381 = vmatprep.subr.mxu0 0.0
        %2382 = vmatpush1.msra.mxu0 0.0
        %2383 = vmatprep.subr.mxu0 0.0
        %2384 = vmatpush1.msra.mxu0 0.0
        %2385 = vmatprep.subr.mxu0 0.0
        %2386 = vmatpush1.msra.mxu0 0.0
        %2387 = vmatprep.mubr.f32.mxu0 0.0
        %2388 = vmatmul.mubr.f32.gmra.mrb[0].mxu0 %v2321
        %v2389 = vpop.f32.mrb[0].mxu0
        %v2390 = vadd.f32 0.0, %v2389
        %v2391 = vpop.f32.mrb[0].mxu0
        %2392 = vdwg.mxu0
        %2393 = vrot.lane.b32.xlu0 %v1888, 104
        %v2394 = vpop.permute.xlu0 %2393
        %2395 = vrot.lane.b32.xlu0 %v1888, 72
        %v2396 = vpop.permute.xlu0 %2395
        %v2397 = vsel %vm823, %v2394, 0
        %v2399 = vsel %vm823, %v2396, 0
        %2401 = vmatprep.subr.mxu0 0.0
        %2402 = vmatpush1.xpose.msra.mxu0 %v2399
        %2403 = vmatprep.subr.mxu0 0.0
        %2404 = vmatpush1.xpose.msra.mxu0 0.0
        %2405 = vmatprep.subr.mxu0 0.0
        %2406 = vmatpush1.xpose.msra.mxu0 0.0
        %2407 = vmatprep.subr.mxu0 0.0
        %2408 = vmatpush1.xpose.msra.mxu0 0.0
        %2409 = vmatprep.subr.mxu0 0.0
        %2410 = vmatpush1.xpose.msra.mxu0 0.0
        %2411 = vmatprep.subr.mxu0 0.0
        %2412 = vmatpush1.xpose.msra.mxu0 0.0
        %2413 = vmatprep.subr.mxu0 0.0
        %2414 = vmatpush1.xpose.msra.mxu0 0.0
        %2415 = vmatprep.subr.mxu0 0.0
        %2416 = vmatpush1.xpose.msra.mxu0 0.0
        %2417 = vmatprep.subr.mxu0 0.0
        %2418 = vmatpush1.xpose.msra.mxu0 0.0
        %2419 = vmatprep.subr.mxu0 0.0
        %2420 = vmatpush1.xpose.msra.mxu0 0.0
        %2421 = vmatprep.subr.mxu0 0.0
        %2422 = vmatpush1.xpose.msra.mxu0 0.0
        %2423 = vmatprep.subr.mxu0 0.0
        %2424 = vmatpush1.xpose.msra.mxu0 0.0
        %2425 = vmatprep.subr.mxu0 0.0
        %2426 = vmatpush1.xpose.msra.mxu0 0.0
        %2427 = vmatprep.subr.mxu0 0.0
        %2428 = vmatpush1.xpose.msra.mxu0 0.0
        %2429 = vmatprep.subr.mxu0 0.0
        %2430 = vmatpush1.xpose.msra.mxu0 0.0
        %2431 = vmatprep.subr.mxu0 0.0
        %2432 = vmatpush1.xpose.msra.mxu0 0.0
        %2433 = vmatprep.subr.mxu0 0.0
        %2434 = vmatpush1.xpose.msra.mxu0 0.0
        %2435 = vmatprep.subr.mxu0 0.0
        %2436 = vmatpush1.xpose.msra.mxu0 0.0
        %2437 = vmatprep.subr.mxu0 0.0
        %2438 = vmatpush1.xpose.msra.mxu0 0.0
        %2439 = vmatprep.subr.mxu0 0.0
        %2440 = vmatpush1.xpose.msra.mxu0 0.0
        %2441 = vmatprep.subr.mxu0 0.0
        %2442 = vmatpush1.xpose.msra.mxu0 0.0
        %2443 = vmatprep.subr.mxu0 0.0
        %2444 = vmatpush1.xpose.msra.mxu0 0.0
        %2445 = vmatprep.subr.mxu0 0.0
        %2446 = vmatpush1.xpose.msra.mxu0 0.0
        %2447 = vmatprep.subr.mxu0 0.0
        %2448 = vmatpush1.xpose.msra.mxu0 0.0
        %2449 = vmatprep.subr.mxu0 0.0
        %2450 = vmatpush1.xpose.msra.mxu0 0.0
        %2451 = vmatprep.subr.mxu0 0.0
        %2452 = vmatpush1.xpose.msra.mxu0 0.0
        %2453 = vmatprep.subr.mxu0 0.0
        %2454 = vmatpush1.xpose.msra.mxu0 0.0
        %2455 = vmatprep.subr.mxu0 0.0
        %2456 = vmatpush1.xpose.msra.mxu0 0.0
        %2457 = vmatprep.subr.mxu0 0.0
        %2458 = vmatpush1.xpose.msra.mxu0 0.0
        %2459 = vmatprep.subr.mxu0 0.0
        %2460 = vmatpush1.xpose.msra.mxu0 0.0
        %2461 = vmatprep.subr.mxu0 0.0
        %2462 = vmatpush1.xpose.msra.mxu0 0.0
        %2463 = vmatprep.subr.mxu0 0.0
        %2464 = vmatpush1.xpose.msra.mxu0 0.0
        %2465 = vmatprep.mubr.f32.mxu0 0.0
        %2466 = vmatmul.mubr.f32.gmra.mrb[0].mxu0 %v2397
        %v2467 = vpop.f32.mrb[0].mxu0
        %v2468 = vadd.f32 0.0, %v2467
        %v2469 = vpop.f32.mrb[0].mxu0
        %2470 = vdwg.mxu0
        %v2471 = vmul.f32 %v2468, 0.35355338
        %v2472 = vsel %vm721, %v2471, -1e+09
        %v2473 = vsel %vm823, %v2472, -inf
        %2474 = vmax.xlane.f32.xlu0 %v2473
        %v2475 = vpop.xlane.xlu0 %2474
        %v2476 = vsub.f32 %v2472, %v2475
        %v2477 = vmul.f32 %v2476, 1.442695
        %v2478 = vpow.pop %v2477
        %v2479 = vsel %vm823, %v2478, 0.0
        %2480 = vadd.xlane.f32.xlu0 %v2479
        %v2481 = vpop.xlane.xlu0 %2480
        %v2482 = vrcp.pop %v2481
        %v2483 = vmul.f32 %v2478, %v2482
        %2484 = vrot.lane.b32.xlu0 %v1888, 40
        %v2485 = vpop.permute.xlu0 %2484
        %v2488 = vsel %vm823, %v2483, 0
        %2490 = vmatprep.subr.mxu0 0.0
        %2491 = vmatpush1.msra.mxu0 %v2485
        %2492 = vmatprep.subr.mxu0 0.0
        %2493 = vmatpush1.msra.mxu0 0.0
        %2494 = vmatprep.subr.mxu0 0.0
        %2495 = vmatpush1.msra.mxu0 0.0
        %2496 = vmatprep.subr.mxu0 0.0
        %2497 = vmatpush1.msra.mxu0 0.0
        %2498 = vmatprep.subr.mxu0 0.0
        %2499 = vmatpush1.msra.mxu0 0.0
        %2500 = vmatprep.subr.mxu0 0.0
        %2501 = vmatpush1.msra.mxu0 0.0
        %2502 = vmatprep.subr.mxu0 0.0
        %2503 = vmatpush1.msra.mxu0 0.0
        %2504 = vmatprep.subr.mxu0 0.0
        %2505 = vmatpush1.msra.mxu0 0.0
        %2506 = vmatprep.subr.mxu0 0.0
        %2507 = vmatpush1.msra.mxu0 0.0
        %2508 = vmatprep.subr.mxu0 0.0
        %2509 = vmatpush1.msra.mxu0 0.0
        %2510 = vmatprep.subr.mxu0 0.0
        %2511 = vmatpush1.msra.mxu0 0.0
        %2512 = vmatprep.subr.mxu0 0.0
        %2513 = vmatpush1.msra.mxu0 0.0
        %2514 = vmatprep.subr.mxu0 0.0
        %2515 = vmatpush1.msra.mxu0 0.0
        %2516 = vmatprep.subr.mxu0 0.0
        %2517 = vmatpush1.msra.mxu0 0.0
        %2518 = vmatprep.subr.mxu0 0.0
        %2519 = vmatpush1.msra.mxu0 0.0
        %2520 = vmatprep.subr.mxu0 0.0
        %2521 = vmatpush1.msra.mxu0 0.0
        %2522 = vmatprep.subr.mxu0 0.0
        %2523 = vmatpush1.msra.mxu0 0.0
        %2524 = vmatprep.subr.mxu0 0.0
        %2525 = vmatpush1.msra.mxu0 0.0
        %2526 = vmatprep.subr.mxu0 0.0
        %2527 = vmatpush1.msra.mxu0 0.0
        %2528 = vmatprep.subr.mxu0 0.0
        %2529 = vmatpush1.msra.mxu0 0.0
        %2530 = vmatprep.subr.mxu0 0.0
        %2531 = vmatpush1.msra.mxu0 0.0
        %2532 = vmatprep.subr.mxu0 0.0
        %2533 = vmatpush1.msra.mxu0 0.0
        %2534 = vmatprep.subr.mxu0 0.0
        %2535 = vmatpush1.msra.mxu0 0.0
        %2536 = vmatprep.subr.mxu0 0.0
        %2537 = vmatpush1.msra.mxu0 0.0
        %2538 = vmatprep.subr.mxu0 0.0
        %2539 = vmatpush1.msra.mxu0 0.0
        %2540 = vmatprep.subr.mxu0 0.0
        %2541 = vmatpush1.msra.mxu0 0.0
        %2542 = vmatprep.subr.mxu0 0.0
        %2543 = vmatpush1.msra.mxu0 0.0
        %2544 = vmatprep.subr.mxu0 0.0
        %2545 = vmatpush1.msra.mxu0 0.0
        %2546 = vmatprep.subr.mxu0 0.0
        %2547 = vmatpush1.msra.mxu0 0.0
        %2548 = vmatprep.subr.mxu0 0.0
        %2549 = vmatpush1.msra.mxu0 0.0
        %2550 = vmatprep.subr.mxu0 0.0
        %2551 = vmatpush1.msra.mxu0 0.0
        %2552 = vmatprep.subr.mxu0 0.0
        %2553 = vmatpush1.msra.mxu0 0.0
        %2554 = vmatprep.mubr.f32.mxu0 0.0
        %2555 = vmatmul.mubr.f32.gmra.mrb[0].mxu0 %v2488
        %v2556 = vpop.f32.mrb[0].mxu0
        %v2557 = vadd.f32 0.0, %v2556
        %v2558 = vpop.f32.mrb[0].mxu0
        %2559 = vdwg.mxu0
        %2561 = vrot.lane.b32.xlu0 %v2223, 8
        %v2562 = vpop.permute.xlu0 %2561
        %2565 = vrot.lane.b32.xlu0 %v2390, 16
        %v2566 = vpop.permute.xlu0 %2565
        %2569 = vrot.lane.b32.xlu0 %v2557, 24
        %v2570 = vpop.permute.xlu0 %2569
        %v2572 = vsel %vm823, %v2056, %v2562
        %v2573 = vsel %vm1501, %v2572, %v2566
        %v2574 = vsel %vm1503, %v2573, %v2570
        %v2575 = vpack.c.bf16 %v2574, %v2574
        %s2576 = scalar_lea.vmem %s8, 16
        %v2577 = vld [vmem:[%s2576] sm:$0xf]
        %v2578 = vld [vmem:[%s2576 + $0x4] sm:$0xf]
        %v2579 = vld [vmem:[%s2576 + $0x8] sm:$0xf]
        %v2580 = vld [vmem:[%s2576 + $0xc] sm:$0xf]
        %v2585 = vunpack.c.l.b16 %v2577
        %v2586 = vunpack.c.l.b16 %v2578
        %v2587 = vunpack.c.l.b16 %v2579
        %v2588 = vunpack.c.l.b16 %v2580
        %v2589 = vpack.c.b16 %v2586, %v2585
        %v2590 = vpack.c.b16 %v2588, %v2587
        %v2594 = vsel %vm724, %v2575, 0
        %2596 = vmatprep.subr.bf16.mxu0 0
        %2597 = vmatpush1.bf16.msra.mxu0 %v2589
        %2598 = vmatprep.subr.bf16.mxu0 0
        %2599 = vmatpush1.bf16.msra.mxu0 %v2590
        %2600 = vmatprep.subr.bf16.mxu0 0
        %2601 = vmatpush1.bf16.msra.mxu0 0
        %2602 = vmatprep.subr.bf16.mxu0 0
        %2603 = vmatpush1.bf16.msra.mxu0 0
        %2604 = vmatprep.subr.bf16.mxu0 0
        %2605 = vmatpush1.bf16.msra.mxu0 0
        %2606 = vmatprep.subr.bf16.mxu0 0
        %2607 = vmatpush1.bf16.msra.mxu0 0
        %2608 = vmatprep.subr.bf16.mxu0 0
        %2609 = vmatpush1.bf16.msra.mxu0 0
        %2610 = vmatprep.subr.bf16.mxu0 0
        %2611 = vmatpush1.bf16.msra.mxu0 0
        %2612 = vmatprep.subr.bf16.mxu0 0
        %2613 = vmatpush1.bf16.msra.mxu0 0
        %2614 = vmatprep.subr.bf16.mxu0 0
        %2615 = vmatpush1.bf16.msra.mxu0 0
        %2616 = vmatprep.subr.bf16.mxu0 0
        %2617 = vmatpush1.bf16.msra.mxu0 0
        %2618 = vmatprep.subr.bf16.mxu0 0
        %2619 = vmatpush1.bf16.msra.mxu0 0
        %2620 = vmatprep.subr.bf16.mxu0 0
        %2621 = vmatpush1.bf16.msra.mxu0 0
        %2622 = vmatprep.subr.bf16.mxu0 0
        %2623 = vmatpush1.bf16.msra.mxu0 0
        %2624 = vmatprep.subr.bf16.mxu0 0
        %2625 = vmatpush1.bf16.msra.mxu0 0
        %2626 = vmatprep.subr.bf16.mxu0 0
        %2627 = vmatpush1.bf16.msra.mxu0 0
        %2628 = vmatprep.mubr.bf16.mxu0 0
        %2629 = vmatmul.mubr.bf16.gmra.mrb[0].mxu0 %v2594
        %v2630 = vpop.f32.mrb[0].mxu0
        %v2631 = vadd.f32 0.0, %v2630
        %v2632 = vpop.f32.mrb[0].mxu0
        %v2633 = vpop.f32.mrb[0].mxu0
        %v2634 = vpop.f32.mrb[0].mxu0
        %2635 = vdwg.mxu0
        %v2636 = vadd.f32 %v1792, %v2631
        %s2637 = scalar_lea.vmem %s9, 1
        %v2638 = vld [vmem:[%s2637] sm:$0x1]
        %v2640 = vlaneseq
        %v2641 = vshrl.u32 %v2640, 7
        %v2642 = vsub.s32 0, %v2641
        %v2643 = vrot.slane %v2638, %v2642
        %v2645 = vadd.f32 %v2636, %v2643
        %s2646 = scalar_lea.vmem %s10, 1
        %v2647 = vld [vmem:[%s2646] sm:$0x1]
        %s2648 = scalar_lea.vmem %s11, 1
        %v2649 = vld [vmem:[%s2648] sm:$0x1]
        %v2650 = vsel %vm724, %v2645, 0.0
        %2651 = vadd.xlane.f32.xlu0 %v2650
        %v2652 = vpop.xlane.xlu0 %2651
        %v2653 = vmul.f32 %v2652, %v728
        %v2654 = vsub.f32 %v2645, %v2653
        %v2655 = vmul.f32 %v2654, %v2654
        %v2656 = vsel %vm724, %v2655, 0.0
        %2657 = vadd.xlane.f32.xlu0 %v2656
        %v2658 = vpop.xlane.xlu0 %2657
        %v2659 = vmul.f32 %v2658, %v728
        %v2660 = vadd.f32 %v2659, 1e-05
        %v2661 = vrsqrt.pop %v2660
        %v2662 = vmul.f32 %v2654, %v2661
        %v2664 = vlaneseq
        %v2665 = vshrl.u32 %v2664, 7
        %v2666 = vsub.s32 0, %v2665
        %v2667 = vrot.slane %v2647, %v2666
        %v2669 = vmul.f32 %v2662, %v2667
        %v2671 = vlaneseq
        %v2672 = vshrl.u32 %v2671, 7
        %v2673 = vsub.s32 0, %v2672
        %v2674 = vrot.slane %v2649, %v2673
        %v2676 = vadd.f32 %v2669, %v2674
        %v2677 = vpack.c.bf16 %v2676, %v2676
        %s2678 = scalar_lea.vmem %s12, 16
        %v2679 = vld [vmem:[%s2678] sm:$0xf]
        %v2680 = vld [vmem:[%s2678 + $0x4] sm:$0xf]
        %v2681 = vld [vmem:[%s2678 + $0x8] sm:$0xf]
        %v2682 = vld [vmem:[%s2678 + $0xc] sm:$0xf]
        %s2683 = scalar_lea.vmem %s13, 1
        %v2684 = vld [vmem:[%s2683] sm:$0x1]
        %v2686 = vlaneseq
        %v2687 = vshrl.u32 %v2686, 7
        %v2688 = vsub.s32 0, %v2687
        %v2689 = vrot.slane %v2684, %v2688
        %v2695 = vunpack.c.l.b16 %v2679
        %v2696 = vunpack.c.l.b16 %v2680
        %v2697 = vunpack.c.l.b16 %v2681
        %v2698 = vunpack.c.l.b16 %v2682
        %v2699 = vpack.c.b16 %v2696, %v2695
        %v2700 = vpack.c.b16 %v2698, %v2697
        %v2704 = vsel %vm724, %v2677, 0
        %2706 = vmatprep.subr.bf16.mxu0 0
        %2707 = vmatpush1.bf16.msra.mxu0 %v2699
        %2708 = vmatprep.subr.bf16.mxu0 0
        %2709 = vmatpush1.bf16.msra.mxu0 %v2700
        %2710 = vmatprep.subr.bf16.mxu0 0
        %2711 = vmatpush1.bf16.msra.mxu0 0
        %2712 = vmatprep.subr.bf16.mxu0 0
        %2713 = vmatpush1.bf16.msra.mxu0 0
        %2714 = vmatprep.subr.bf16.mxu0 0
        %2715 = vmatpush1.bf16.msra.mxu0 0
        %2716 = vmatprep.subr.bf16.mxu0 0
        %2717 = vmatpush1.bf16.msra.mxu0 0
        %2718 = vmatprep.subr.bf16.mxu0 0
        %2719 = vmatpush1.bf16.msra.mxu0 0
        %2720 = vmatprep.subr.bf16.mxu0 0
        %2721 = vmatpush1.bf16.msra.mxu0 0
        %2722 = vmatprep.subr.bf16.mxu0 0
        %2723 = vmatpush1.bf16.msra.mxu0 0
        %2724 = vmatprep.subr.bf16.mxu0 0
        %2725 = vmatpush1.bf16.msra.mxu0 0
        %2726 = vmatprep.subr.bf16.mxu0 0
        %2727 = vmatpush1.bf16.msra.mxu0 0
        %2728 = vmatprep.subr.bf16.mxu0 0
        %2729 = vmatpush1.bf16.msra.mxu0 0
        %2730 = vmatprep.subr.bf16.mxu0 0
        %2731 = vmatpush1.bf16.msra.mxu0 0
        %2732 = vmatprep.subr.bf16.mxu0 0
        %2733 = vmatpush1.bf16.msra.mxu0 0
        %2734 = vmatprep.subr.bf16.mxu0 0
        %2735 = vmatpush1.bf16.msra.mxu0 0
        %2736 = vmatprep.subr.bf16.mxu0 0
        %2737 = vmatpush1.bf16.msra.mxu0 0
        %2738 = vmatprep.mubr.bf16.mxu0 0
        %2739 = vmatmul.mubr.bf16.gmra.mrb[0].mxu0 %v2704
        %v2740 = vpop.f32.mrb[0].mxu0
        %v2741 = vadd.f32 %v2689, %v2740
        %v2742 = vpop.f32.mrb[0].mxu0
        %v2743 = vpop.f32.mrb[0].mxu0
        %v2744 = vpop.f32.mrb[0].mxu0
        %2745 = vdwg.mxu0
        %v2746 = vmul.f32 %v2741, %v2741
        %v2747 = vmul.f32 %v2741, %v2746
        %v2748 = vmul.f32 %v2747, 0.044715
        %v2749 = vadd.f32 %v2741, %v2748
        %v2750 = vmul.f32 %v2749, 0.7978846
        %v2751 = vtanh.pop %v2750
        %v2752 = vadd.f32 %v2751, 1.0
        %v2753 = vmul.f32 %v2752, 0.5
        %v2754 = vmul.f32 %v2741, %v2753
        %v2755 = vpack.c.bf16 %v2754, %v2754
        %s2756 = scalar_lea.vmem %s14, 64
        %v2757 = vld [vmem:[%s2756] sm:$0xf]
        %v2758 = vld [vmem:[%s2756 + $0x4] sm:$0xf]
        %v2759 = vld [vmem:[%s2756 + $0x8] sm:$0xf]
        %v2760 = vld [vmem:[%s2756 + $0xc] sm:$0xf]
        %v2761 = vld [vmem:[%s2756 + $0x10] sm:$0xf]
        %v2762 = vld [vmem:[%s2756 + $0x14] sm:$0xf]
        %v2763 = vld [vmem:[%s2756 + $0x18] sm:$0xf]
        %v2764 = vld [vmem:[%s2756 + $0x1c] sm:$0xf]
        %v2765 = vld [vmem:[%s2756 + $0x20] sm:$0xf]
        %v2766 = vld [vmem:[%s2756 + $0x24] sm:$0xf]
        %v2767 = vld [vmem:[%s2756 + $0x28] sm:$0xf]
        %v2768 = vld [vmem:[%s2756 + $0x2c] sm:$0xf]
        %v2769 = vld [vmem:[%s2756 + $0x30] sm:$0xf]
        %v2770 = vld [vmem:[%s2756 + $0x34] sm:$0xf]
        %v2771 = vld [vmem:[%s2756 + $0x38] sm:$0xf]
        %v2772 = vld [vmem:[%s2756 + $0x3c] sm:$0xf]
        %v2789 = vunpack.c.l.b16 %v2757
        %v2790 = vunpack.c.l.b16 %v2758
        %v2791 = vunpack.c.l.b16 %v2759
        %v2792 = vunpack.c.l.b16 %v2760
        %v2793 = vunpack.c.l.b16 %v2761
        %v2794 = vunpack.c.l.b16 %v2762
        %v2795 = vunpack.c.l.b16 %v2763
        %v2796 = vunpack.c.l.b16 %v2764
        %v2797 = vunpack.c.l.b16 %v2765
        %v2798 = vunpack.c.l.b16 %v2766
        %v2799 = vunpack.c.l.b16 %v2767
        %v2800 = vunpack.c.l.b16 %v2768
        %v2801 = vunpack.c.l.b16 %v2769
        %v2802 = vunpack.c.l.b16 %v2770
        %v2803 = vunpack.c.l.b16 %v2771
        %v2804 = vunpack.c.l.b16 %v2772
        %v2805 = vpack.c.b16 %v2790, %v2789
        %v2806 = vpack.c.b16 %v2792, %v2791
        %v2807 = vpack.c.b16 %v2794, %v2793
        %v2808 = vpack.c.b16 %v2796, %v2795
        %v2809 = vpack.c.b16 %v2798, %v2797
        %v2810 = vpack.c.b16 %v2800, %v2799
        %v2811 = vpack.c.b16 %v2802, %v2801
        %v2812 = vpack.c.b16 %v2804, %v2803
        %2821 = vmatprep.subr.bf16.mxu0 0
        %2822 = vmatpush1.bf16.msra.mxu0 %v2805
        %2823 = vmatprep.subr.bf16.mxu0 0
        %2824 = vmatpush1.bf16.msra.mxu0 %v2806
        %2825 = vmatprep.subr.bf16.mxu0 0
        %2826 = vmatpush1.bf16.msra.mxu0 %v2807
        %2827 = vmatprep.subr.bf16.mxu0 0
        %2828 = vmatpush1.bf16.msra.mxu0 %v2808
        %2829 = vmatprep.subr.bf16.mxu0 0
        %2830 = vmatpush1.bf16.msra.mxu0 %v2809
        %2831 = vmatprep.subr.bf16.mxu0 0
        %2832 = vmatpush1.bf16.msra.mxu0 %v2810
        %2833 = vmatprep.subr.bf16.mxu0 0
        %2834 = vmatpush1.bf16.msra.mxu0 %v2811
        %2835 = vmatprep.subr.bf16.mxu0 0
        %2836 = vmatpush1.bf16.msra.mxu0 %v2812
        %2837 = vmatprep.subr.bf16.mxu0 0
        %2838 = vmatpush1.bf16.msra.mxu0 0
        %2839 = vmatprep.subr.bf16.mxu0 0
        %2840 = vmatpush1.bf16.msra.mxu0 0
        %2841 = vmatprep.subr.bf16.mxu0 0
        %2842 = vmatpush1.bf16.msra.mxu0 0
        %2843 = vmatprep.subr.bf16.mxu0 0
        %2844 = vmatpush1.bf16.msra.mxu0 0
        %2845 = vmatprep.subr.bf16.mxu0 0
        %2846 = vmatpush1.bf16.msra.mxu0 0
        %2847 = vmatprep.subr.bf16.mxu0 0
        %2848 = vmatpush1.bf16.msra.mxu0 0
        %2849 = vmatprep.subr.bf16.mxu0 0
        %2850 = vmatpush1.bf16.msra.mxu0 0
        %2851 = vmatprep.subr.bf16.mxu0 0
        %2852 = vmatpush1.bf16.msra.mxu0 0
        %2853 = vmatprep.mubr.bf16.mxu0 0
        %2854 = vmatmul.mubr.bf16.gmra.mrb[0].mxu0 %v2755
        %v2855 = vpop.f32.mrb[0].mxu0
        %v2856 = vadd.f32 0.0, %v2855
        %v2857 = vpop.f32.mrb[0].mxu0
        %v2858 = vpop.f32.mrb[0].mxu0
        %v2859 = vpop.f32.mrb[0].mxu0
        %2860 = vdwg.mxu0
        %v2861 = vadd.f32 %v2645, %v2856
        %s2862 = scalar_lea.vmem %s15, 1
        %v2863 = vld [vmem:[%s2862] sm:$0x1]
        %v2865 = vlaneseq
        %v2866 = vshrl.u32 %v2865, 7
        %v2867 = vsub.s32 0, %v2866
        %v2868 = vrot.slane %v2863, %v2867
        %v2870 = vadd.f32 %v2861, %v2868
        %v2871 = vld [vmem:[%s16] sm:$0x1]
        %v2872 = vld [vmem:[%s17] sm:$0x1]
        %v2873 = vsel %vm724, %v2870, 0.0
        %2874 = vadd.xlane.f32.xlu0 %v2873
        %v2875 = vpop.xlane.xlu0 %2874
        %v2876 = vmul.f32 %v2875, %v728
        %v2877 = vsub.f32 %v2870, %v2876
        %v2878 = vmul.f32 %v2877, %v2877
        %v2879 = vsel %vm724, %v2878, 0.0
        %2880 = vadd.xlane.f32.xlu0 %v2879
        %v2881 = vpop.xlane.xlu0 %2880
        %v2882 = vmul.f32 %v2881, %v728
        %v2883 = vadd.f32 %v2882, 1e-05
        %v2884 = vrsqrt.pop %v2883
        %v2885 = vmul.f32 %v2877, %v2884
        %v2887 = vlaneseq
        %v2888 = vshrl.u32 %v2887, 7
        %v2889 = vsub.s32 0, %v2888
        %v2890 = vrot.slane %v2871, %v2889
        %v2892 = vmul.f32 %v2885, %v2890
        %v2894 = vlaneseq
        %v2895 = vshrl.u32 %v2894, 7
        %v2896 = vsub.s32 0, %v2895
        %v2897 = vrot.slane %v2872, %v2896
        %v2899 = vadd.f32 %v2892, %v2897
        %v2900 = vsel %vm724, %v2899, 0.0
        %v2901 = vrot.slane %v2900, 4
        %v2902 = vadd.f32 %v2900, %v2901
        %v2903 = vrot.slane %v2902, 2
        %v2904 = vadd.f32 %v2902, %v2903
        %v2905 = vrot.slane %v2904, 1
        %v2906 = vadd.f32 %v2904, %v2905
        %v2907 = vrcp.pop 8.0
        %v2908 = vmul.f32 %v2906, %v2907
        %vm2909 = vcmask 253952
        %2910 = vst.msk [vmem:[%s607] sm:$0x1] %vm2909, %v2908
        %v2911 = vpack.c.bf16 %v2899, %v2899
        %v2912 = vld [vmem:[%s2] sm:$0xf]
        %v2913 = vld [vmem:[%s2 + $0x4] sm:$0xf]
        %v2914 = vld [vmem:[%s2 + $0x8] sm:$0xf]
        %v2915 = vld [vmem:[%s2 + $0xc] sm:$0xf]
        %v2916 = vld [vmem:[%s2 + $0x10] sm:$0xf]
        %v2917 = vld [vmem:[%s2 + $0x14] sm:$0xf]
        %v2918 = vld [vmem:[%s2 + $0x18] sm:$0xf]
        %v2919 = vld [vmem:[%s2 + $0x1c] sm:$0xf]
        %v2928 = vunpack.c.l.b16 %v2912
        %v2929 = vunpack.c.l.b16 %v2913
        %v2930 = vunpack.c.l.b16 %v2914
        %v2931 = vunpack.c.l.b16 %v2915
        %v2932 = vunpack.c.l.b16 %v2916
        %v2933 = vunpack.c.l.b16 %v2917
        %v2934 = vunpack.c.l.b16 %v2918
        %v2935 = vunpack.c.l.b16 %v2919
        %v2936 = vpack.c.b16 %v2929, %v2928
        %v2937 = vpack.c.b16 %v2931, %v2930
        %v2938 = vpack.c.b16 %v2933, %v2932
        %v2939 = vpack.c.b16 %v2935, %v2934
        %v2941 = vsel %vm724, %v2911, 0
        %v2944 = vsel %vm724, %v2936, 0
        %v2947 = vsel %vm724, %v2937, 0
        %v2950 = vsel %vm724, %v2938, 0
        %v2953 = vsel %vm724, %v2939, 0
        %2955 = vmatprep.subr.bf16.mxu0 0
        %2956 = vmatpush1.bf16.xpose.msra.mxu0 %v2944
        %2957 = vmatprep.subr.bf16.mxu0 0
        %2958 = vmatpush1.bf16.xpose.msra.mxu0 %v2947
        %2959 = vmatprep.subr.bf16.mxu0 0
        %2960 = vmatpush1.bf16.xpose.msra.mxu0 %v2950
        %2961 = vmatprep.subr.bf16.mxu0 0
        %2962 = vmatpush1.bf16.xpose.msra.mxu0 %v2953
        %2963 = vmatprep.subr.bf16.mxu0 0
        %2964 = vmatpush1.bf16.xpose.msra.mxu0 0
        %2965 = vmatprep.subr.bf16.mxu0 0
        %2966 = vmatpush1.bf16.xpose.msra.mxu0 0
        %2967 = vmatprep.subr.bf16.mxu0 0
        %2968 = vmatpush1.bf16.xpose.msra.mxu0 0
        %2969 = vmatprep.subr.bf16.mxu0 0
        %2970 = vmatpush1.bf16.xpose.msra.mxu0 0
        %2971 = vmatprep.subr.bf16.mxu0 0
        %2972 = vmatpush1.bf16.xpose.msra.mxu0 0
        %2973 = vmatprep.subr.bf16.mxu0 0
        %2974 = vmatpush1.bf16.xpose.msra.mxu0 0
        %2975 = vmatprep.subr.bf16.mxu0 0
        %2976 = vmatpush1.bf16.xpose.msra.mxu0 0
        %2977 = vmatprep.subr.bf16.mxu0 0
        %2978 = vmatpush1.bf16.xpose.msra.mxu0 0
        %2979 = vmatprep.subr.bf16.mxu0 0
        %2980 = vmatpush1.bf16.xpose.msra.mxu0 0
        %2981 = vmatprep.subr.bf16.mxu0 0
        %2982 = vmatpush1.bf16.xpose.msra.mxu0 0
        %2983 = vmatprep.subr.bf16.mxu0 0
        %2984 = vmatpush1.bf16.xpose.msra.mxu0 0
        %2985 = vmatprep.subr.bf16.mxu0 0
        %2986 = vmatpush1.bf16.xpose.msra.mxu0 0
        %2987 = vmatprep.mubr.bf16.mxu0 0
        %2988 = vmatmul.mubr.bf16.gmra.mrb[0].mxu0 %v2941
        %v2989 = vpop.f32.mrb[0].mxu0
        %v2990 = vadd.f32 0.0, %v2989
        %v2991 = vpop.f32.mrb[0].mxu0
        %v2992 = vpop.f32.mrb[0].mxu0
        %v2993 = vpop.f32.mrb[0].mxu0
        %2994 = vdwg.mxu0
        %2995 = vst.msk [vmem:[%s614] sm:$0xff] %vm666, %v2990
        %s2996 = sand.u32 %s433, 1
        %s2997 = scalar_lea.sflag [#allocation3], %s2996
        %s2998 = sand.u32 %s433, 1
        %s2999 = scalar_lea.vmem [#allocation2], %s2998
        %s3000 = sand.u32 %s459, 1
        %s3001 = scalar_lea.sflag [#allocation5], %s3000
        %s3002 = sand.u32 %s459, 1
        %s3003 = smul.addr %s3002, 8
        %s3004 = scalar_lea.vmem [#allocation4], %s3003
        // Predicated region
        $region93: #{forward.1} parent=91 // pred_check
          %p3005 = pneg %p443
        $region94: #{forward.1} parent=91 // pred_check_branch
          %3007 = sbr.rel (%p3005) target = $region96
        $region95: #{forward.1} parent=91 // pred_region
          %s3009 = ssub.s32 16, 16
          %3010 = vsyncadd %s2997, %s3009
          %s3011 = smul.addr %s37, 16
          %s3012 = scalar_lea.hbm %s18, %s3011
          %s3014 = sshll.u32 %s2999, 4
          %s3015 = int_to_ptr.vmem [resolvable:$true] %s3014
          %3017 = dma.vmem_to_hbm [thread:$0]  %s3015, 16, %s3012, %s2997
        $region96: #{forward.1} parent=91 // pred_fallthru
          _
        // Predicated region
        $region97: #{forward.1} parent=91 // pred_check
          %p3018 = pneg %p469
        $region98: #{forward.1} parent=91 // pred_check_branch
          %3020 = sbr.rel (%p3018) target = $region100
        $region99: #{forward.1} parent=91 // pred_region
          %s3022 = ssub.s32 128, 128
          %3023 = vsyncadd %s3001, %s3022
          %s3024 = smul.addr %s37, 128
          %s3025 = scalar_lea.hbm %s19, %s3024
          %s3027 = sshll.u32 %s3004, 4
          %s3028 = int_to_ptr.vmem [resolvable:$true] %s3027
          %3030 = dma.vmem_to_hbm [thread:$0]  %s3028, 128, %s3025, %s3001
        $region100: #{forward.1} parent=91 // pred_fallthru
          _
      $region92: #{forward.1} parent=5 // pred_fallthru
        _
      %p3031 = scmp.le.s32.totalorder 2, %s32
      // Predicated region
      $region101: #{forward.1} parent=5 // pred_check
        %p3032 = pneg %p3031
      $region102: #{forward.1} parent=5 // pred_check_branch
        %3034 = sbr.rel (%p3032) target = $region104
      $region103: #{forward.1} parent=5 // pred_region
        %s3035 = ssub.s32 %s32, 2
        // Predicated region
        $region105: #{forward.1} parent=103 // pred_check
          %p3036 = pneg %p449
        $region106: #{forward.1} parent=103 // pred_check_branch
          %3038 = sbr.rel (%p3036) target = $region108
        $region107: #{forward.1} parent=103 // pred_region
          %s3039 = sand.u32 %s434, 1
          %s3040 = scalar_lea.sflag [#allocation3], %s3039
          %s3041 = sand.u32 %s434, 1
          %s3042 = scalar_lea.vmem [#allocation2], %s3041
          %3043 = dma.done %s3040, 16
        $region108: #{forward.1} parent=103 // pred_fallthru
          _
        // Predicated region
        $region109: #{forward.1} parent=103 // pred_check
          %p3044 = pneg %p475
        $region110: #{forward.1} parent=103 // pred_check_branch
          %3046 = sbr.rel (%p3044) target = $region112
        $region111: #{forward.1} parent=103 // pred_region
          %s3047 = sand.u32 %s460, 1
          %s3048 = scalar_lea.sflag [#allocation5], %s3047
          %s3049 = sand.u32 %s460, 1
          %s3050 = smul.addr %s3049, 8
          %s3051 = scalar_lea.vmem [#allocation4], %s3050
          %3052 = dma.done %s3048, 128
        $region112: #{forward.1} parent=103 // pred_fallthru
          _
      $region104: #{forward.1} parent=5 // pred_fallthru
        _
    $region6: #{forward.1} parent=1 // loop_footer
      %s36 = sadd.s32 1, %s32
    $region7: #{forward.1} parent=1 // loop_footer_branch
      %31 = sbr.rel target = $region3
    $region8: #{forward.1} parent=1 // loop_exit
      _
    %3053 = vsyncpa [#allocation3], 1
    %s3054 = scalar_lea.sflag [#allocation3], 1
    %3055 = vsyncpa %s3054, 1
    %3056 = vsyncpa [#allocation5], 1
    %s3057 = scalar_lea.sflag [#allocation5], 1
    %3058 = vsyncpa %s3057, 1

</llo_original>
